<compile_context>
chip_gen: v6e
topology: v6e:2x2x1
jax: 0.10.0
libtpu: 0.0.40
codegen_flags: <defaults>
</compile_context>

<pallas_src>
import functools

import jax
import jax.numpy as jnp
from jax import lax
from jax.experimental import pallas as pl
from jax.experimental.pallas import tpu as pltpu

EPS = 1e-5
LANE = 128
VMEM_LIMIT = 64 * 1024 * 1024      # <= physical VMEM on v5e/v6e (128 MiB) and v7x (64 MiB)


def _round_up(x, m):
    return (x + m - 1) // m * m


def _pick_tile(m):
    """Largest row tile (multiple of 8, <= 2048) dividing m; single-step calls are OK."""
    for t in (2048, 1024, 512, 256, 128, 64, 32, 16, 8):
        if m % t == 0:
            return t
    return m


def _pick_group(b, howo, target=256, max_rows=2048):
    """Images per conv grid step: aim for >= `target` matmul rows per tap dot while
    keeping the per-step block <= max_rows rows and bg | b."""
    bg = max(1, min(b, -(-target // howo)))
    bg = max(1, min(bg, max(1, max_rows // howo)))
    while b % bg:
        bg -= 1
    return bg


# ----------------------------- Pallas kernels -------------------------------

def _conv1_stats_kernel(xph_ref, w_ref, y_ref, psum_ref, pssq_ref, kbuf_ref,
                        *, stride, Ho, Wo, bg):
    # xph_ref: (bg*s*s, Hph, Wph, Ci)  stride-phases of the zero-padded input
    # w_ref:   (3, 3*Ci, Co)           3 W-taps of each kernel row concatenated along K
    # y_ref:   (bg, Ho*Wo, Co)         raw conv output (f32)
    # psum/pssq: (1, 1, Co)            per-grid-step BN partial sums (reduced outside)
    # kbuf_ref:(s*bg, Hph, Wo, 3*Ci)   W-shifted, K-concatenated staging planes
    s = stride
    ci = xph_ref.shape[-1]
    co = w_ref.shape[-1]
    cdt = kbuf_ref.dtype
    # Build the staging planes once per step: destination stores are lane-aligned
    # (offsets are multiples of Ci=128); only the shifted source reads (ow in {1,2})
    # are sublane-misaligned.
    for b in range(bg):
        for hp in range(s):
            for dj in range(3):
                ph = hp * s + (dj % s)          # stride phase holding this W tap
                ow = dj // s                    # unit-stride W offset inside the phase
                kbuf_ref[hp * bg + b, :, :, dj * ci:(dj + 1) * ci] = (
                    xph_ref[b * s * s + ph, :, ow:ow + Wo, :].astype(cdt))
    # 3 fat dots (K = 3*Ci) instead of 9 thin ones; per-row H offsets are free
    # major-dim slices of the staging buffer.
    acc = jnp.zeros((bg * Ho * Wo, co), jnp.float32)
    for di in range(3):
        hp, oh = di % s, di // s
        win = kbuf_ref[hp * bg:hp * bg + bg, oh:oh + Ho, :, :]     # (bg, Ho, Wo, 3*Ci)
        acc += jnp.dot(win.reshape(bg * Ho * Wo, 3 * ci), w_ref[di],
                       preferred_element_type=jnp.float32)
    y_ref[...] = acc.reshape(bg, Ho * Wo, co)
    psum_ref[0] = jnp.sum(acc, axis=0, keepdims=True)
    pssq_ref[0] = jnp.sum(acc * acc, axis=0, keepdims=True)


def _bnrelu_conv2_stats_kernel(y1_ref, sc_ref, sh_ref, w_ref,
                               y2_ref, psum_ref, pssq_ref, kbuf_ref,
                               *, Ho, Wo, bg, use_bf16):
    # bn1 affine + relu fused on the incoming tile (the normalized activation never
    # touches HBM), then a 3x3/pad1 conv via W-shifted, K-concatenated planes.
    co = w_ref.shape[-1]
    cdt = jnp.bfloat16 if use_bf16 else jnp.float32
    a = jnp.maximum(y1_ref[...] * sc_ref[...] + sh_ref[...], 0.0)       # (bg, Ho*Wo, Co)
    a3 = a.reshape(bg, Ho, Wo, co)
    z = kbuf_ref.dtype
    # Zero only the 1-px halo (top/bottom rows + the two never-written shift columns);
    # the interior is fully overwritten every step.
    kbuf_ref[:, 0:1, :, :] = jnp.zeros((bg, 1, Wo, 3 * co), z)
    kbuf_ref[:, Ho + 1:Ho + 2, :, :] = jnp.zeros((bg, 1, Wo, 3 * co), z)
    kbuf_ref[:, 1:Ho + 1, 0:1, 0:co] = jnp.zeros((bg, Ho, 1, co), z)
    kbuf_ref[:, 1:Ho + 1, Wo - 1:Wo, 2 * co:3 * co] = jnp.zeros((bg, Ho, 1, co), z)
    # Interiors: lane offsets are multiples of Co=128 (aligned stores).
    kbuf_ref[:, 1:Ho + 1, :, co:2 * co] = a3                            # dj = 1 (center)
    kbuf_ref[:, 1:Ho + 1, 1:Wo, 0:co] = a3[:, :, 0:Wo - 1, :]           # dj = 0 (shift +1)
    kbuf_ref[:, 1:Ho + 1, 0:Wo - 1, 2 * co:3 * co] = a3[:, :, 1:Wo, :]  # dj = 2 (shift -1)
    acc = jnp.zeros((bg * Ho * Wo, co), jnp.float32)
    for di in range(3):
        win = kbuf_ref[:, di:di + Ho, :, :]                             # (bg, Ho, Wo, 3*Co)
        acc += jnp.dot(win.reshape(bg * Ho * Wo, 3 * co).astype(cdt), w_ref[di],
                       preferred_element_type=jnp.float32)
    y2_ref[...] = acc.reshape(bg, Ho * Wo, co)
    psum_ref[0] = jnp.sum(acc, axis=0, keepdims=True)
    pssq_ref[0] = jnp.sum(acc * acc, axis=0, keepdims=True)


def _bn_shortcut_add_relu_kernel(y2_ref, sc_ref, sh_ref, xs_ref, w3_ref, b3_ref, o_ref):
    # bn2 affine + fused 1x1-conv shortcut + residual add + relu (M-tiled).
    y = y2_ref[...] * sc_ref[...] + sh_ref[...]
    sc = jnp.dot(xs_ref[...], w3_ref[...],
                 preferred_element_type=jnp.float32) + b3_ref[...]
    o_ref[...] = jnp.maximum(y + sc, 0.0)


def _bn_add_relu_kernel(y2_ref, sc_ref, sh_ref, x_ref, o_ref):
    # bn2 affine + identity shortcut + relu (M-tiled).
    o_ref[...] = jnp.maximum(y2_ref[...] * sc_ref[...] + sh_ref[...] + x_ref[...], 0.0)


# ------------------------------ Pallas wrappers ------------------------------

def _conv1_bnstats(xph, w_taps, B, Ho, Wo, stride, bg):
    s = stride
    G = B // bg
    P = bg * s * s
    _, Hph, Wph, Ci = xph.shape
    Co = w_taps.shape[-1]
    kern = functools.partial(_conv1_stats_kernel, stride=s, Ho=Ho, Wo=Wo, bg=bg)
    return pl.pallas_call(
        kern,
        out_shape=(jax.ShapeDtypeStruct((B, Ho * Wo, Co), jnp.float32),
                   jax.ShapeDtypeStruct((G, 1, Co), jnp.float32),
                   jax.ShapeDtypeStruct((G, 1, Co), jnp.float32)),
        grid=(G,),
        in_specs=[pl.BlockSpec((P, Hph, Wph, Ci), lambda g: (g, 0, 0, 0)),
                  pl.BlockSpec((3, 3 * Ci, Co), lambda g: (0, 0, 0))],
        out_specs=(pl.BlockSpec((bg, Ho * Wo, Co), lambda g: (g, 0, 0)),
                   pl.BlockSpec((1, 1, Co), lambda g: (g, 0, 0)),
                   pl.BlockSpec((1, 1, Co), lambda g: (g, 0, 0))),
        scratch_shapes=[pltpu.VMEM((s * bg, Hph, Wo, 3 * Ci), w_taps.dtype)],
        compiler_params=pltpu.CompilerParams(
            dimension_semantics=("parallel",), vmem_limit_bytes=VMEM_LIMIT),
    )(xph, w_taps)


def _bnrelu_conv2_bnstats(y1, scale1, shift1, w_taps, Ho, Wo, bg, use_bf16):
    B, HoWo, Co = y1.shape
    G = B // bg
    kern = functools.partial(_bnrelu_conv2_stats_kernel,
                             Ho=Ho, Wo=Wo, bg=bg, use_bf16=use_bf16)
    return pl.pallas_call(
        kern,
        out_shape=(jax.ShapeDtypeStruct((B, HoWo, Co), jnp.float32),
                   jax.ShapeDtypeStruct((G, 1, Co), jnp.float32),
                   jax.ShapeDtypeStruct((G, 1, Co), jnp.float32)),
        grid=(G,),
        in_specs=[pl.BlockSpec((bg, HoWo, Co), lambda g: (g, 0, 0)),
                  pl.BlockSpec((1, Co), lambda g: (0, 0)),
                  pl.BlockSpec((1, Co), lambda g: (0, 0)),
                  pl.BlockSpec((3, 3 * Co, Co), lambda g: (0, 0, 0))],
        out_specs=(pl.BlockSpec((bg, HoWo, Co), lambda g: (g, 0, 0)),
                   pl.BlockSpec((1, 1, Co), lambda g: (g, 0, 0)),
                   pl.BlockSpec((1, 1, Co), lambda g: (g, 0, 0))),
        # kept in f32 so the sublane-misaligned shift stores lower cleanly; windows are
        # cast to the compute dtype right at the MXU dot.
        scratch_shapes=[pltpu.VMEM((bg, Ho + 2, Wo, 3 * Co), jnp.float32)],
        compiler_params=pltpu.CompilerParams(
            dimension_semantics=("parallel",), vmem_limit_bytes=VMEM_LIMIT),
    )(y1, scale1, shift1, w_taps)


def _finalize_conv_shortcut(y2_flat, scale2, shift2, xs_flat, w3, b3):
    M, Co = y2_flat.shape
    Ci = xs_flat.shape[-1]
    TM = _pick_tile(M)
    return pl.pallas_call(
        _bn_shortcut_add_relu_kernel,
        out_shape=jax.ShapeDtypeStruct((M, Co), jnp.float32),
        grid=(M // TM,),
        in_specs=[pl.BlockSpec((TM, Co), lambda m: (m, 0)),
                  pl.BlockSpec((1, Co), lambda m: (0, 0)),
                  pl.BlockSpec((1, Co), lambda m: (0, 0)),
                  pl.BlockSpec((TM, Ci), lambda m: (m, 0)),
                  pl.BlockSpec((Ci, Co), lambda m: (0, 0)),
                  pl.BlockSpec((1, Co), lambda m: (0, 0))],
        out_specs=pl.BlockSpec((TM, Co), lambda m: (m, 0)),
        compiler_params=pltpu.CompilerParams(
            dimension_semantics=("parallel",), vmem_limit_bytes=VMEM_LIMIT),
    )(y2_flat, scale2, shift2, xs_flat, w3, b3)


def _finalize_identity(y2_flat, scale2, shift2, x_flat):
    M, Co = y2_flat.shape
    TM = _pick_tile(M)
    return pl.pallas_call(
        _bn_add_relu_kernel,
        out_shape=jax.ShapeDtypeStruct((M, Co), jnp.float32),
        grid=(M // TM,),
        in_specs=[pl.BlockSpec((TM, Co), lambda m: (m, 0)),
                  pl.BlockSpec((1, Co), lambda m: (0, 0)),
                  pl.BlockSpec((1, Co), lambda m: (0, 0)),
                  pl.BlockSpec((TM, Co), lambda m: (m, 0))],
        out_specs=pl.BlockSpec((TM, Co), lambda m: (m, 0)),
        compiler_params=pltpu.CompilerParams(
            dimension_semantics=("parallel",), vmem_limit_bytes=VMEM_LIMIT),
    )(y2_flat, scale2, shift2, x_flat)


def _bn_affine(psum, pssq, gamma, beta, n):
    # Tiny per-channel math; partial sums come fused from the conv kernels.
    s = jnp.sum(psum, axis=(0, 1))
    ssq = jnp.sum(pssq, axis=(0, 1))
    mean = s / n
    var = jnp.maximum(ssq / n - mean * mean, 0.0)      # biased var (training BN)
    scale = gamma * lax.rsqrt(var + EPS)
    shift = beta - mean * scale
    return scale.reshape(1, -1), shift.reshape(1, -1)


# ------------------------------- forward --------------------------------------

@functools.partial(jax.jit, static_argnames=("use_1x1conv", "stride", "use_bf16"))
def residual_forward(x_nchw, params, use_1x1conv=False, stride=1, use_bf16=True):
    s = stride
    cdt = jnp.bfloat16 if use_bf16 else jnp.float32    # MXU compute dtype (f32 accumulate)
    x = jnp.transpose(x_nchw, (0, 2, 3, 1)).astype(jnp.float32)       # NHWC
    B, H, W, Cin = x.shape
    Cout = params["w1"].shape[-1]
    if not use_1x1conv:
        assert s == 1 and Cin == Cout, "identity shortcut needs stride=1, Cin==Cout"

    # Lane-dense channel padding: zero channels are exact no-ops (gamma/beta padded with
    # 0 keep them finite) and are sliced off at the end.
    Ci, Co = _round_up(Cin, LANE), _round_up(Cout, LANE)
    Ho, Wo = (H - 1) // s + 1, (W - 1) // s + 1
    n = B * Ho * Wo
    bg = _pick_group(B, Ho * Wo)                        # images per conv grid step

    xc = jnp.pad(x, ((0, 0), (0, 0), (0, 0), (0, Ci - Cin)))
    # conv1/conv2 biases dropped: exactly cancelled by training-mode BN.
    # Weight taps for kernel row di concatenated over dj along K -> (3, 3*C, Co).
    w1 = jnp.pad(params["w1"], ((0, 0), (0, 0), (0, Ci - Cin), (0, Co - Cout))
                 ).reshape(3, 3 * Ci, Co).astype(cdt)
    w2 = jnp.pad(params["w2"], ((0, 0), (0, 0), (0, Co - Cout), (0, Co - Cout))
                 ).reshape(3, 3 * Co, Co).astype(cdt)
    g1 = jnp.pad(params["g1"], (0, Co - Cout))
    be1 = jnp.pad(params["beta1"], (0, Co - Cout))
    g2 = jnp.pad(params["g2"], (0, Co - Cout))
    be2 = jnp.pad(params["beta2"], (0, Co - Cout))

    # Stride-phase split of the zero-padded input (one cheap reorder instead of im2col):
    # every in-kernel tap slice becomes unit-stride.
    Hph, Wph = -(-(H + 2) // s), -(-(W + 2) // s)
    xp = jnp.pad(xc, ((0, 0), (1, s * Hph - H - 1), (1, s * Wph - W - 1), (0, 0)))
    xph5 = jnp.stack([xp[:, ph::s, pw::s, :] for ph in range(s) for pw in range(s)],
                     axis=1)                                  # (B, s*s, Hph, Wph, Ci)
    xph = xph5.reshape(B * s * s, Hph, Wph, Ci)

    # conv1 (3x3/stride) + fused bn1 stats
    y1, ps1, pq1 = _conv1_bnstats(xph, w1, B, Ho, Wo, s, bg)
    sc1, sh1 = _bn_affine(ps1, pq1, g1, be1, n)

    # bn1 affine + relu fused into conv2 (3x3/stride1) + fused bn2 stats
    y2, ps2, pq2 = _bnrelu_conv2_bnstats(y1, sc1, sh1, w2, Ho, Wo, bg, use_bf16)
    sc2, sh2 = _bn_affine(ps2, pq2, g2, be2, n)

    # bn2 affine + shortcut + add + relu, lane-dense, tiled over M = B*Ho*Wo
    y2f = y2.reshape(B * Ho * Wo, Co)
    if use_1x1conv:
        w3 = jnp.pad(params["w3"], ((0, Ci - Cin), (0, Co - Cout))).astype(cdt)
        b3 = jnp.pad(params["b3"], (0, Co - Cout)).reshape(1, Co)
        # shortcut input from the already-built phase tensor (contiguous slice, no second
        # strided HBM copy), cast to the compute dtype.
        p_idx = (1 % s) * s + (1 % s)
        off = 1 // s
        xs = xph5[:, p_idx, off:off + Ho, off:off + Wo, :].reshape(B * Ho * Wo, Ci
                                                                   ).astype(cdt)
        out = _finalize_conv_shortcut(y2f, sc2, sh2, xs, w3, b3)
    else:
        out = _finalize_identity(y2f, sc2, sh2, xc.reshape(B * H * W, Ci))

    out = out.reshape(B, Ho, Wo, Co)[..., :Cout]
    return jnp.transpose(out, (0, 3, 1, 2))                           # NCHW


# --------------------------- pure-JAX reference ------------------------------

def _reference(x_nchw, params, use_1x1conv, stride):
    def conv(x, w_hwio, b, s, pad):
        w = jnp.transpose(w_hwio, (3, 2, 0, 1))                       # OIHW
        y = lax.conv_general_dilated(
            x, w, window_strides=(s, s), padding=[(pad, pad), (pad, pad)],
            dimension_numbers=("NCHW", "OIHW", "NCHW"))
        return y + b.reshape(1, -1, 1, 1)

    def bn(x, g, b):
        m = jnp.mean(x, axis=(0, 2, 3), keepdims=True)
        v = jnp.mean((x - m) ** 2, axis=(0, 2, 3), keepdims=True)
        return (x - m) * lax.rsqrt(v + EPS) * g.reshape(1, -1, 1, 1) \
            + b.reshape(1, -1, 1, 1)

    y = jax.nn.relu(bn(conv(x_nchw, params["w1"], params["b1"], stride, 1),
                       params["g1"], params["beta1"]))
    y = bn(conv(y, params["w2"], params["b2"], 1, 1), params["g2"], params["beta2"])
    if use_1x1conv:
        cin, cout = params["w3"].shape
        xs = conv(x_nchw, params["w3"].reshape(1, 1, cin, cout), params["b3"], stride, 0)
    else:
        xs = x_nchw
    return jax.nn.relu(y + xs)


# ---------------------------------- main --------------------------------------

if __name__ == "__main__":
    def make_params(key, cin, cout, use_1x1conv):
        ks = jax.random.split(key, 10)
        p = {
            "w1": 0.1 * jax.random.normal(ks[0], (3, 3, cin, cout), jnp.float32),
            "b1": 0.1 * jax.random.normal(ks[1], (cout,), jnp.float32),
            "w2": 0.1 * jax.random.normal(ks[2], (3, 3, cout, cout), jnp.float32),
            "b2": 0.1 * jax.random.normal(ks[3], (cout,), jnp.float32),
            "g1": 1.0 + 0.1 * jax.random.normal(ks[4], (cout,), jnp.float32),
            "beta1": 0.1 * jax.random.normal(ks[5], (cout,), jnp.float32),
            "g2": 1.0 + 0.1 * jax.random.normal(ks[6], (cout,), jnp.float32),
            "beta2": 0.1 * jax.random.normal(ks[7], (cout,), jnp.float32),
        }
        if use_1x1conv:
            p["w3"] = 0.1 * jax.random.normal(ks[8], (cin, cout), jnp.float32)
            p["b3"] = 0.1 * jax.random.normal(ks[9], (cout,), jnp.float32)
        return p

    root = jax.random.PRNGKey(0)

    # config 1: downsampling residual block with 1x1 projection shortcut
    x1 = jax.random.normal(jax.random.fold_in(root, 1), (2, 4, 16, 16), jnp.float32)
    p1 = make_params(jax.random.fold_in(root, 2), 4, 8, True)
    ref1 = jax.block_until_ready(_reference(x1, p1, True, 2))

    # f32 MXU path: strict parity
    out1 = jax.block_until_ready(
        residual_forward(x1, p1, use_1x1conv=True, stride=2, use_bf16=False))
    assert out1.shape == ref1.shape == (2, 8, 8, 8), out1.shape
    err1 = float(jnp.max(jnp.abs(out1 - ref1)))
    assert jnp.allclose(out1, ref1, atol=1e-4, rtol=1e-4), err1

    # bf16 MXU path (default): relaxed tolerance
    out1b = jax.block_until_ready(
        residual_forward(x1, p1, use_1x1conv=True, stride=2, use_bf16=True))
    err1b = float(jnp.max(jnp.abs(out1b - ref1)))
    assert jnp.allclose(out1b, ref1, atol=1e-1, rtol=1e-1), err1b

    # config 2: identity-shortcut residual block
    x2 = jax.random.normal(jax.random.fold_in(root, 3), (2, 8, 16, 16), jnp.float32)
    p2 = make_params(jax.random.fold_in(root, 4), 8, 8, False)
    ref2 = jax.block_until_ready(_reference(x2, p2, False, 1))

    out2 = jax.block_until_ready(
        residual_forward(x2, p2, use_1x1conv=False, stride=1, use_bf16=False))
    assert out2.shape == ref2.shape == (2, 8, 16, 16), out2.shape
    err2 = float(jnp.max(jnp.abs(out2 - ref2)))
    assert jnp.allclose(out2, ref2, atol=1e-4, rtol=1e-4), err2

    out2b = jax.block_until_ready(
        residual_forward(x2, p2, use_1x1conv=False, stride=1, use_bf16=True))
    err2b = float(jnp.max(jnp.abs(out2b - ref2)))
    assert jnp.allclose(out2b, ref2, atol=1e-1, rtol=1e-1), err2b

    print("KERNEL_OK")
</pallas_src>

<mosaic_0001>
module attributes {stable_mosaic.version = 11 : i64} {
  func.func @_conv1_stats_kernel(%arg0: i32, %arg1: memref<8x9x9x128xf32, #tpu.memory_space<vmem>>, %arg2: memref<3x384x128xf32, #tpu.memory_space<vmem>>, %arg3: memref<2x64x128xf32, #tpu.memory_space<vmem>>, %arg4: memref<1x1x128xf32, #tpu.memory_space<vmem>>, %arg5: memref<1x1x128xf32, #tpu.memory_space<vmem>>, %arg6: memref<4x9x8x384xf32, #tpu.memory_space<vmem>>) attributes {dimension_semantics = [#tpu.dimension_semantics<parallel>], iteration_bounds = array<i64: 1>, scalar_prefetch = 0 : i64, scratch_operands = 1 : i64, tpu.core_type = #tpu.core_type<tc>, window_params = [{transform_indices = @transform_0, window_bounds = array<i64: 8, 9, 9, 128>}, {pipeline_mode = #tpu.pipeline_mode<synchronous>, transform_indices = @transform_1, window_bounds = array<i64: 3, 384, 128>}, {transform_indices = @transform_2, window_bounds = array<i64: 2, 64, 128>}, {transform_indices = @transform_3, window_bounds = array<i64: 1, 1, 128>}, {transform_indices = @transform_4, window_bounds = array<i64: 1, 1, 128>}]} {
    %c0 = arith.constant 0 : index
    %c0_0 = arith.constant 0 : index
    %c0_1 = arith.constant 0 : index
    %c0_2 = arith.constant 0 : index
    %0 = vector.load %arg1[%c0, %c0_0, %c0_1, %c0_2] : memref<8x9x9x128xf32, #tpu.memory_space<vmem>>, vector<1x9x8x128xf32>
    %1 = vector.shape_cast %0 : vector<1x9x8x128xf32> to vector<9x8x128xf32>
    %c0_3 = arith.constant 0 : index
    %c0_4 = arith.constant 0 : index
    %c0_5 = arith.constant 0 : index
    %c0_6 = arith.constant 0 : index
    %2 = vector.load %arg6[%c0_3, %c0_4, %c0_5, %c0_6] : memref<4x9x8x384xf32, #tpu.memory_space<vmem>>, vector<1x9x8x128xf32>
    %3 = vector.shape_cast %2 : vector<1x9x8x128xf32> to vector<9x8x128xf32>
    %4 = vector.shape_cast %1 : vector<9x8x128xf32> to vector<1x9x8x128xf32>
    tpu.vector_store %arg6[%c0_3, %c0_4, %c0_5, %c0_6], %4 {strides = array<i32>} : memref<4x9x8x384xf32, #tpu.memory_space<vmem>>, vector<1x9x8x128xf32>,
    %c1 = arith.constant 1 : index
    %c0_7 = arith.constant 0 : index
    %c0_8 = arith.constant 0 : index
    %c0_9 = arith.constant 0 : index
    %5 = vector.load %arg1[%c1, %c0_7, %c0_8, %c0_9] : memref<8x9x9x128xf32, #tpu.memory_space<vmem>>, vector<1x9x8x128xf32>
    %6 = vector.shape_cast %5 : vector<1x9x8x128xf32> to vector<9x8x128xf32>
    %c0_10 = arith.constant 0 : index
    %c0_11 = arith.constant 0 : index
    %c0_12 = arith.constant 0 : index
    %c128 = arith.constant 128 : index
    %7 = vector.load %arg6[%c0_10, %c0_11, %c0_12, %c128] : memref<4x9x8x384xf32, #tpu.memory_space<vmem>>, vector<1x9x8x128xf32>
    %8 = vector.shape_cast %7 : vector<1x9x8x128xf32> to vector<9x8x128xf32>
    %9 = vector.shape_cast %6 : vector<9x8x128xf32> to vector<1x9x8x128xf32>
    tpu.vector_store %arg6[%c0_10, %c0_11, %c0_12, %c128], %9 {strides = array<i32>} : memref<4x9x8x384xf32, #tpu.memory_space<vmem>>, vector<1x9x8x128xf32>,
    %c0_13 = arith.constant 0 : index
    %c0_14 = arith.constant 0 : index
    %c1_15 = arith.constant 1 : index
    %c0_16 = arith.constant 0 : index
    %10 = vector.load %arg1[%c0_13, %c0_14, %c1_15, %c0_16] : memref<8x9x9x128xf32, #tpu.memory_space<vmem>>, vector<1x9x8x128xf32>
    %11 = vector.shape_cast %10 : vector<1x9x8x128xf32> to vector<9x8x128xf32>
    %c0_17 = arith.constant 0 : index
    %c0_18 = arith.constant 0 : index
    %c0_19 = arith.constant 0 : index
    %c256 = arith.constant 256 : index
    %12 = vector.load %arg6[%c0_17, %c0_18, %c0_19, %c256] : memref<4x9x8x384xf32, #tpu.memory_space<vmem>>, vector<1x9x8x128xf32>
    %13 = vector.shape_cast %12 : vector<1x9x8x128xf32> to vector<9x8x128xf32>
    %14 = vector.shape_cast %11 : vector<9x8x128xf32> to vector<1x9x8x128xf32>
    tpu.vector_store %arg6[%c0_17, %c0_18, %c0_19, %c256], %14 {strides = array<i32>} : memref<4x9x8x384xf32, #tpu.memory_space<vmem>>, vector<1x9x8x128xf32>,
    %c2 = arith.constant 2 : index
    %c0_20 = arith.constant 0 : index
    %c0_21 = arith.constant 0 : index
    %c0_22 = arith.constant 0 : index
    %15 = vector.load %arg1[%c2, %c0_20, %c0_21, %c0_22] : memref<8x9x9x128xf32, #tpu.memory_space<vmem>>, vector<1x9x8x128xf32>
    %16 = vector.shape_cast %15 : vector<1x9x8x128xf32> to vector<9x8x128xf32>
    %c2_23 = arith.constant 2 : index
    %c0_24 = arith.constant 0 : index
    %c0_25 = arith.constant 0 : index
    %c0_26 = arith.constant 0 : index
    %17 = vector.load %arg6[%c2_23, %c0_24, %c0_25, %c0_26] : memref<4x9x8x384xf32, #tpu.memory_space<vmem>>, vector<1x9x8x128xf32>
    %18 = vector.shape_cast %17 : vector<1x9x8x128xf32> to vector<9x8x128xf32>
    %19 = vector.shape_cast %16 : vector<9x8x128xf32> to vector<1x9x8x128xf32>
    tpu.vector_store %arg6[%c2_23, %c0_24, %c0_25, %c0_26], %19 {strides = array<i32>} : memref<4x9x8x384xf32, #tpu.memory_space<vmem>>, vector<1x9x8x128xf32>,
    %c3 = arith.constant 3 : index
    %c0_27 = arith.constant 0 : index
    %c0_28 = arith.constant 0 : index
    %c0_29 = arith.constant 0 : index
    %20 = vector.load %arg1[%c3, %c0_27, %c0_28, %c0_29] : memref<8x9x9x128xf32, #tpu.memory_space<vmem>>, vector<1x9x8x128xf32>
    %21 = vector.shape_cast %20 : vector<1x9x8x128xf32> to vector<9x8x128xf32>
    %c2_30 = arith.constant 2 : index
    %c0_31 = arith.constant 0 : index
    %c0_32 = arith.constant 0 : index
    %c128_33 = arith.constant 128 : index
    %22 = vector.load %arg6[%c2_30, %c0_31, %c0_32, %c128_33] : memref<4x9x8x384xf32, #tpu.memory_space<vmem>>, vector<1x9x8x128xf32>
    %23 = vector.shape_cast %22 : vector<1x9x8x128xf32> to vector<9x8x128xf32>
    %24 = vector.shape_cast %21 : vector<9x8x128xf32> to vector<1x9x8x128xf32>
    tpu.vector_store %arg6[%c2_30, %c0_31, %c0_32, %c128_33], %24 {strides = array<i32>} : memref<4x9x8x384xf32, #tpu.memory_space<vmem>>, vector<1x9x8x128xf32>,
    %c2_34 = arith.constant 2 : index
    %c0_35 = arith.constant 0 : index
    %c1_36 = arith.constant 1 : index
    %c0_37 = arith.constant 0 : index
    %25 = vector.load %arg1[%c2_34, %c0_35, %c1_36, %c0_37] : memref<8x9x9x128xf32, #tpu.memory_space<vmem>>, vector<1x9x8x128xf32>
    %26 = vector.shape_cast %25 : vector<1x9x8x128xf32> to vector<9x8x128xf32>
    %c2_38 = arith.constant 2 : index
    %c0_39 = arith.constant 0 : index
    %c0_40 = arith.constant 0 : index
    %c256_41 = arith.constant 256 : index
    %27 = vector.load %arg6[%c2_38, %c0_39, %c0_40, %c256_41] : memref<4x9x8x384xf32, #tpu.memory_space<vmem>>, vector<1x9x8x128xf32>
    %28 = vector.shape_cast %27 : vector<1x9x8x128xf32> to vector<9x8x128xf32>
    %29 = vector.shape_cast %26 : vector<9x8x128xf32> to vector<1x9x8x128xf32>
    tpu.vector_store %arg6[%c2_38, %c0_39, %c0_40, %c256_41], %29 {strides = array<i32>} : memref<4x9x8x384xf32, #tpu.memory_space<vmem>>, vector<1x9x8x128xf32>,
    %c4 = arith.constant 4 : index
    %c0_42 = arith.constant 0 : index
    %c0_43 = arith.constant 0 : index
    %c0_44 = arith.constant 0 : index
    %30 = vector.load %arg1[%c4, %c0_42, %c0_43, %c0_44] : memref<8x9x9x128xf32, #tpu.memory_space<vmem>>, vector<1x9x8x128xf32>
    %31 = vector.shape_cast %30 : vector<1x9x8x128xf32> to vector<9x8x128xf32>
    %c1_45 = arith.constant 1 : index
    %c0_46 = arith.constant 0 : index
    %c0_47 = arith.constant 0 : index
    %c0_48 = arith.constant 0 : index
    %32 = vector.load %arg6[%c1_45, %c0_46, %c0_47, %c0_48] : memref<4x9x8x384xf32, #tpu.memory_space<vmem>>, vector<1x9x8x128xf32>
    %33 = vector.shape_cast %32 : vector<1x9x8x128xf32> to vector<9x8x128xf32>
    %34 = vector.shape_cast %31 : vector<9x8x128xf32> to vector<1x9x8x128xf32>
    tpu.vector_store %arg6[%c1_45, %c0_46, %c0_47, %c0_48], %34 {strides = array<i32>} : memref<4x9x8x384xf32, #tpu.memory_space<vmem>>, vector<1x9x8x128xf32>,
    %c5 = arith.constant 5 : index
    %c0_49 = arith.constant 0 : index
    %c0_50 = arith.constant 0 : index
    %c0_51 = arith.constant 0 : index
    %35 = vector.load %arg1[%c5, %c0_49, %c0_50, %c0_51] : memref<8x9x9x128xf32, #tpu.memory_space<vmem>>, vector<1x9x8x128xf32>
    %36 = vector.shape_cast %35 : vector<1x9x8x128xf32> to vector<9x8x128xf32>
    %c1_52 = arith.constant 1 : index
    %c0_53 = arith.constant 0 : index
    %c0_54 = arith.constant 0 : index
    %c128_55 = arith.constant 128 : index
    %37 = vector.load %arg6[%c1_52, %c0_53, %c0_54, %c128_55] : memref<4x9x8x384xf32, #tpu.memory_space<vmem>>, vector<1x9x8x128xf32>
    %38 = vector.shape_cast %37 : vector<1x9x8x128xf32> to vector<9x8x128xf32>
    %39 = vector.shape_cast %36 : vector<9x8x128xf32> to vector<1x9x8x128xf32>
    tpu.vector_store %arg6[%c1_52, %c0_53, %c0_54, %c128_55], %39 {strides = array<i32>} : memref<4x9x8x384xf32, #tpu.memory_space<vmem>>, vector<1x9x8x128xf32>,
    %c4_56 = arith.constant 4 : index
    %c0_57 = arith.constant 0 : index
    %c1_58 = arith.constant 1 : index
    %c0_59 = arith.constant 0 : index
    %40 = vector.load %arg1[%c4_56, %c0_57, %c1_58, %c0_59] : memref<8x9x9x128xf32, #tpu.memory_space<vmem>>, vector<1x9x8x128xf32>
    %41 = vector.shape_cast %40 : vector<1x9x8x128xf32> to vector<9x8x128xf32>
    %c1_60 = arith.constant 1 : index
    %c0_61 = arith.constant 0 : index
    %c0_62 = arith.constant 0 : index
    %c256_63 = arith.constant 256 : index
    %42 = vector.load %arg6[%c1_60, %c0_61, %c0_62, %c256_63] : memref<4x9x8x384xf32, #tpu.memory_space<vmem>>, vector<1x9x8x128xf32>
    %43 = vector.shape_cast %42 : vector<1x9x8x128xf32> to vector<9x8x128xf32>
    %44 = vector.shape_cast %41 : vector<9x8x128xf32> to vector<1x9x8x128xf32>
    tpu.vector_store %arg6[%c1_60, %c0_61, %c0_62, %c256_63], %44 {strides = array<i32>} : memref<4x9x8x384xf32, #tpu.memory_space<vmem>>, vector<1x9x8x128xf32>,
    %c6 = arith.constant 6 : index
    %c0_64 = arith.constant 0 : index
    %c0_65 = arith.constant 0 : index
    %c0_66 = arith.constant 0 : index
    %45 = vector.load %arg1[%c6, %c0_64, %c0_65, %c0_66] : memref<8x9x9x128xf32, #tpu.memory_space<vmem>>, vector<1x9x8x128xf32>
    %46 = vector.shape_cast %45 : vector<1x9x8x128xf32> to vector<9x8x128xf32>
    %c3_67 = arith.constant 3 : index
    %c0_68 = arith.constant 0 : index
    %c0_69 = arith.constant 0 : index
    %c0_70 = arith.constant 0 : index
    %47 = vector.load %arg6[%c3_67, %c0_68, %c0_69, %c0_70] : memref<4x9x8x384xf32, #tpu.memory_space<vmem>>, vector<1x9x8x128xf32>
    %48 = vector.shape_cast %47 : vector<1x9x8x128xf32> to vector<9x8x128xf32>
    %49 = vector.shape_cast %46 : vector<9x8x128xf32> to vector<1x9x8x128xf32>
    tpu.vector_store %arg6[%c3_67, %c0_68, %c0_69, %c0_70], %49 {strides = array<i32>} : memref<4x9x8x384xf32, #tpu.memory_space<vmem>>, vector<1x9x8x128xf32>,
    %c7 = arith.constant 7 : index
    %c0_71 = arith.constant 0 : index
    %c0_72 = arith.constant 0 : index
    %c0_73 = arith.constant 0 : index
    %50 = vector.load %arg1[%c7, %c0_71, %c0_72, %c0_73] : memref<8x9x9x128xf32, #tpu.memory_space<vmem>>, vector<1x9x8x128xf32>
    %51 = vector.shape_cast %50 : vector<1x9x8x128xf32> to vector<9x8x128xf32>
    %c3_74 = arith.constant 3 : index
    %c0_75 = arith.constant 0 : index
    %c0_76 = arith.constant 0 : index
    %c128_77 = arith.constant 128 : index
    %52 = vector.load %arg6[%c3_74, %c0_75, %c0_76, %c128_77] : memref<4x9x8x384xf32, #tpu.memory_space<vmem>>, vector<1x9x8x128xf32>
    %53 = vector.shape_cast %52 : vector<1x9x8x128xf32> to vector<9x8x128xf32>
    %54 = vector.shape_cast %51 : vector<9x8x128xf32> to vector<1x9x8x128xf32>
    tpu.vector_store %arg6[%c3_74, %c0_75, %c0_76, %c128_77], %54 {strides = array<i32>} : memref<4x9x8x384xf32, #tpu.memory_space<vmem>>, vector<1x9x8x128xf32>,
    %c6_78 = arith.constant 6 : index
    %c0_79 = arith.constant 0 : index
    %c1_80 = arith.constant 1 : index
    %c0_81 = arith.constant 0 : index
    %55 = vector.load %arg1[%c6_78, %c0_79, %c1_80, %c0_81] : memref<8x9x9x128xf32, #tpu.memory_space<vmem>>, vector<1x9x8x128xf32>
    %56 = vector.shape_cast %55 : vector<1x9x8x128xf32> to vector<9x8x128xf32>
    %c3_82 = arith.constant 3 : index
    %c0_83 = arith.constant 0 : index
    %c0_84 = arith.constant 0 : index
    %c256_85 = arith.constant 256 : index
    %57 = vector.load %arg6[%c3_82, %c0_83, %c0_84, %c256_85] : memref<4x9x8x384xf32, #tpu.memory_space<vmem>>, vector<1x9x8x128xf32>
    %58 = vector.shape_cast %57 : vector<1x9x8x128xf32> to vector<9x8x128xf32>
    %59 = vector.shape_cast %56 : vector<9x8x128xf32> to vector<1x9x8x128xf32>
    tpu.vector_store %arg6[%c3_82, %c0_83, %c0_84, %c256_85], %59 {strides = array<i32>} : memref<4x9x8x384xf32, #tpu.memory_space<vmem>>, vector<1x9x8x128xf32>,
    %cst = arith.constant 0.000000e+00 : f32
    %60 = vector.broadcast %cst : f32 to vector<128x128xf32>
    %c0_86 = arith.constant 0 : index
    %c0_87 = arith.constant 0 : index
    %c0_88 = arith.constant 0 : index
    %c0_89 = arith.constant 0 : index
    %61 = vector.load %arg6[%c0_86, %c0_87, %c0_88, %c0_89] : memref<4x9x8x384xf32, #tpu.memory_space<vmem>>, vector<2x8x8x384xf32>
    %62 = vector.shape_cast %61 : vector<2x8x8x384xf32> to vector<128x384xf32>
    %c0_90 = arith.constant 0 : index
    %c0_91 = arith.constant 0 : index
    %c0_92 = arith.constant 0 : index
    %63 = vector.load %arg2[%c0_90, %c0_91, %c0_92] : memref<3x384x128xf32, #tpu.memory_space<vmem>>, vector<1x384x128xf32>
    %64 = vector.shape_cast %63 : vector<1x384x128xf32> to vector<384x128xf32>
    %cst_93 = arith.constant dense<0.000000e+00> : vector<128x128xf32>
    %65 = tpu.matmul %62, %64, %cst_93 {dimension_numbers = #tpu.dot_dimension_numbers<[1], [0], [0], [1], [0, 0, 1, 1], [], []>} : vector<128x384xf32>, vector<384x128xf32>, vector<128x128xf32> -> vector<128x128xf32>
    %66 = arith.addf %60, %65 : vector<128x128xf32>
    %c2_94 = arith.constant 2 : index
    %c0_95 = arith.constant 0 : index
    %c0_96 = arith.constant 0 : index
    %c0_97 = arith.constant 0 : index
    %67 = vector.load %arg6[%c2_94, %c0_95, %c0_96, %c0_97] : memref<4x9x8x384xf32, #tpu.memory_space<vmem>>, vector<2x8x8x384xf32>
    %68 = vector.shape_cast %67 : vector<2x8x8x384xf32> to vector<128x384xf32>
    %c1_98 = arith.constant 1 : index
    %c0_99 = arith.constant 0 : index
    %c0_100 = arith.constant 0 : index
    %69 = vector.load %arg2[%c1_98, %c0_99, %c0_100] : memref<3x384x128xf32, #tpu.memory_space<vmem>>, vector<1x384x128xf32>
    %70 = vector.shape_cast %69 : vector<1x384x128xf32> to vector<384x128xf32>
    %cst_101 = arith.constant dense<0.000000e+00> : vector<128x128xf32>
    %71 = tpu.matmul %68, %70, %cst_101 {dimension_numbers = #tpu.dot_dimension_numbers<[1], [0], [0], [1], [0, 0, 1, 1], [], []>} : vector<128x384xf32>, vector<384x128xf32>, vector<128x128xf32> -> vector<128x128xf32>
    %72 = arith.addf %66, %71 : vector<128x128xf32>
    %c0_102 = arith.constant 0 : index
    %c1_103 = arith.constant 1 : index
    %c0_104 = arith.constant 0 : index
    %c0_105 = arith.constant 0 : index
    %73 = vector.load %arg6[%c0_102, %c1_103, %c0_104, %c0_105] : memref<4x9x8x384xf32, #tpu.memory_space<vmem>>, vector<2x8x8x384xf32>
    %74 = vector.shape_cast %73 : vector<2x8x8x384xf32> to vector<128x384xf32>
    %c2_106 = arith.constant 2 : index
    %c0_107 = arith.constant 0 : index
    %c0_108 = arith.constant 0 : index
    %75 = vector.load %arg2[%c2_106, %c0_107, %c0_108] : memref<3x384x128xf32, #tpu.memory_space<vmem>>, vector<1x384x128xf32>
    %76 = vector.shape_cast %75 : vector<1x384x128xf32> to vector<384x128xf32>
    %cst_109 = arith.constant dense<0.000000e+00> : vector<128x128xf32>
    %77 = tpu.matmul %74, %76, %cst_109 {dimension_numbers = #tpu.dot_dimension_numbers<[1], [0], [0], [1], [0, 0, 1, 1], [], []>} : vector<128x384xf32>, vector<384x128xf32>, vector<128x128xf32> -> vector<128x128xf32>
    %78 = arith.addf %72, %77 : vector<128x128xf32>
    %79 = vector.shape_cast %78 : vector<128x128xf32> to vector<2x64x128xf32>
    %c0_110 = arith.constant 0 : index
    %c0_111 = arith.constant 0 : index
    %c0_112 = arith.constant 0 : index
    %80 = vector.load %arg3[%c0_110, %c0_111, %c0_112] : memref<2x64x128xf32, #tpu.memory_space<vmem>>, vector<2x64x128xf32>
    tpu.vector_store %arg3[%c0_110, %c0_111, %c0_112], %79 {strides = array<i32>} : memref<2x64x128xf32, #tpu.memory_space<vmem>>, vector<2x64x128xf32>,
    %cst_113 = arith.constant dense<0.000000e+00> : vector<128xf32>
    %81 = vector.multi_reduction <add>, %78, %cst_113 [0] : vector<128x128xf32> to vector<128xf32>
    %82 = vector.shape_cast %81 : vector<128xf32> to vector<1x128xf32>
    %c0_114 = arith.constant 0 : index
    %c0_115 = arith.constant 0 : index
    %c0_116 = arith.constant 0 : index
    %83 = vector.load %arg4[%c0_114, %c0_115, %c0_116] : memref<1x1x128xf32, #tpu.memory_space<vmem>>, vector<1x1x128xf32>
    %84 = vector.shape_cast %83 : vector<1x1x128xf32> to vector<1x128xf32>
    %85 = vector.shape_cast %82 : vector<1x128xf32> to vector<1x1x128xf32>
    tpu.vector_store %arg4[%c0_114, %c0_115, %c0_116], %85 {strides = array<i32>} : memref<1x1x128xf32, #tpu.memory_space<vmem>>, vector<1x1x128xf32>,
    %86 = arith.mulf %78, %78 : vector<128x128xf32>
    %cst_117 = arith.constant dense<0.000000e+00> : vector<128xf32>
    %87 = vector.multi_reduction <add>, %86, %cst_117 [0] : vector<128x128xf32> to vector<128xf32>
    %88 = vector.shape_cast %87 : vector<128xf32> to vector<1x128xf32>
    %c0_118 = arith.constant 0 : index
    %c0_119 = arith.constant 0 : index
    %c0_120 = arith.constant 0 : index
    %89 = vector.load %arg5[%c0_118, %c0_119, %c0_120] : memref<1x1x128xf32, #tpu.memory_space<vmem>>, vector<1x1x128xf32>
    %90 = vector.shape_cast %89 : vector<1x1x128xf32> to vector<1x128xf32>
    %91 = vector.shape_cast %88 : vector<1x128xf32> to vector<1x1x128xf32>
    tpu.vector_store %arg5[%c0_118, %c0_119, %c0_120], %91 {strides = array<i32>} : memref<1x1x128xf32, #tpu.memory_space<vmem>>, vector<1x1x128xf32>,
    return
  }
  func.func @transform_0(%arg0: i32) -> (i32, i32, i32, i32) {
    %c0_i32 = arith.constant 0 : i32
    %c0_i32_0 = arith.constant 0 : i32
    %c0_i32_1 = arith.constant 0 : i32
    %c0_i32_2 = arith.constant 0 : i32
    return %arg0, %c0_i32, %c0_i32_0, %c0_i32_1 : i32, i32, i32, i32
  }
  func.func @transform_1(%arg0: i32) -> (i32, i32, i32) {
    %c0_i32 = arith.constant 0 : i32
    %c0_i32_0 = arith.constant 0 : i32
    %c0_i32_1 = arith.constant 0 : i32
    %c0_i32_2 = arith.constant 0 : i32
    return %c0_i32, %c0_i32_0, %c0_i32_1 : i32, i32, i32
  }
  func.func @transform_2(%arg0: i32) -> (i32, i32, i32) {
    %c0_i32 = arith.constant 0 : i32
    %c0_i32_0 = arith.constant 0 : i32
    %c0_i32_1 = arith.constant 0 : i32
    return %arg0, %c0_i32, %c0_i32_0 : i32, i32, i32
  }
  func.func @transform_3(%arg0: i32) -> (i32, i32, i32) {
    %c0_i32 = arith.constant 0 : i32
    %c0_i32_0 = arith.constant 0 : i32
    %c0_i32_1 = arith.constant 0 : i32
    return %arg0, %c0_i32, %c0_i32_0 : i32, i32, i32
  }
  func.func @transform_4(%arg0: i32) -> (i32, i32, i32) {
    %c0_i32 = arith.constant 0 : i32
    %c0_i32_0 = arith.constant 0 : i32
    %c0_i32_1 = arith.constant 0 : i32
    return %arg0, %c0_i32, %c0_i32_0 : i32, i32, i32
  }
}

module attributes {stable_mosaic.version = 11 : i64} {
  func.func @_bnrelu_conv2_stats_kernel(%arg0: i32, %arg1: memref<2x64x128xf32, #tpu.memory_space<vmem>>, %arg2: memref<1x128xf32, #tpu.memory_space<vmem>>, %arg3: memref<1x128xf32, #tpu.memory_space<vmem>>, %arg4: memref<3x384x128xf32, #tpu.memory_space<vmem>>, %arg5: memref<2x64x128xf32, #tpu.memory_space<vmem>>, %arg6: memref<1x1x128xf32, #tpu.memory_space<vmem>>, %arg7: memref<1x1x128xf32, #tpu.memory_space<vmem>>, %arg8: memref<2x10x8x384xf32, #tpu.memory_space<vmem>>) attributes {dimension_semantics = [#tpu.dimension_semantics<parallel>], iteration_bounds = array<i64: 1>, scalar_prefetch = 0 : i64, scratch_operands = 1 : i64, tpu.core_type = #tpu.core_type<tc>, window_params = [{transform_indices = @transform_0, window_bounds = array<i64: 2, 64, 128>}, {pipeline_mode = #tpu.pipeline_mode<synchronous>, transform_indices = @transform_1, window_bounds = array<i64: 1, 128>}, {pipeline_mode = #tpu.pipeline_mode<synchronous>, transform_indices = @transform_2, window_bounds = array<i64: 1, 128>}, {pipeline_mode = #tpu.pipeline_mode<synchronous>, transform_indices = @transform_3, window_bounds = array<i64: 3, 384, 128>}, {transform_indices = @transform_4, window_bounds = array<i64: 2, 64, 128>}, {transform_indices = @transform_5, window_bounds = array<i64: 1, 1, 128>}, {transform_indices = @transform_6, window_bounds = array<i64: 1, 1, 128>}]} {
    %c0 = arith.constant 0 : index
    %c0_0 = arith.constant 0 : index
    %c0_1 = arith.constant 0 : index
    %0 = vector.load %arg1[%c0, %c0_0, %c0_1] : memref<2x64x128xf32, #tpu.memory_space<vmem>>, vector<2x64x128xf32>
    %c0_2 = arith.constant 0 : index
    %c0_3 = arith.constant 0 : index
    %1 = vector.load %arg2[%c0_2, %c0_3] : memref<1x128xf32, #tpu.memory_space<vmem>>, vector<1x128xf32>
    %2 = vector.shape_cast %1 : vector<1x128xf32> to vector<1x1x128xf32>
    %3 = vector.broadcast %2 : vector<1x1x128xf32> to vector<2x64x128xf32>
    %4 = arith.mulf %0, %3 : vector<2x64x128xf32>
    %c0_4 = arith.constant 0 : index
    %c0_5 = arith.constant 0 : index
    %5 = vector.load %arg3[%c0_4, %c0_5] : memref<1x128xf32, #tpu.memory_space<vmem>>, vector<1x128xf32>
    %6 = vector.shape_cast %5 : vector<1x128xf32> to vector<1x1x128xf32>
    %7 = vector.broadcast %6 : vector<1x1x128xf32> to vector<2x64x128xf32>
    %8 = arith.addf %4, %7 : vector<2x64x128xf32>
    %cst = arith.constant 0.000000e+00 : f32
    %9 = vector.broadcast %cst : f32 to vector<2x64x128xf32>
    %10 = arith.maximumf %8, %9 : vector<2x64x128xf32>
    %11 = vector.shape_cast %10 : vector<2x64x128xf32> to vector<2x8x8x128xf32>
    %cst_6 = arith.constant 0.000000e+00 : f32
    %12 = vector.broadcast %cst_6 : f32 to vector<2x1x8x384xf32>
    %c0_7 = arith.constant 0 : index
    %c0_8 = arith.constant 0 : index
    %c0_9 = arith.constant 0 : index
    %c0_10 = arith.constant 0 : index
    %13 = vector.load %arg8[%c0_7, %c0_8, %c0_9, %c0_10] : memref<2x10x8x384xf32, #tpu.memory_space<vmem>>, vector<2x1x8x384xf32>
    tpu.vector_store %arg8[%c0_7, %c0_8, %c0_9, %c0_10], %12 {strides = array<i32>} : memref<2x10x8x384xf32, #tpu.memory_space<vmem>>, vector<2x1x8x384xf32>,
    %cst_11 = arith.constant 0.000000e+00 : f32
    %14 = vector.broadcast %cst_11 : f32 to vector<2x1x8x384xf32>
    %c0_12 = arith.constant 0 : index
    %c9 = arith.constant 9 : index
    %c0_13 = arith.constant 0 : index
    %c0_14 = arith.constant 0 : index
    %15 = vector.load %arg8[%c0_12, %c9, %c0_13, %c0_14] : memref<2x10x8x384xf32, #tpu.memory_space<vmem>>, vector<2x1x8x384xf32>
    tpu.vector_store %arg8[%c0_12, %c9, %c0_13, %c0_14], %14 {strides = array<i32>} : memref<2x10x8x384xf32, #tpu.memory_space<vmem>>, vector<2x1x8x384xf32>,
    %cst_15 = arith.constant 0.000000e+00 : f32
    %16 = vector.broadcast %cst_15 : f32 to vector<2x8x1x128xf32>
    %c0_16 = arith.constant 0 : index
    %c1 = arith.constant 1 : index
    %c0_17 = arith.constant 0 : index
    %c0_18 = arith.constant 0 : index
    %17 = vector.load %arg8[%c0_16, %c1, %c0_17, %c0_18] : memref<2x10x8x384xf32, #tpu.memory_space<vmem>>, vector<2x8x1x128xf32>
    tpu.vector_store %arg8[%c0_16, %c1, %c0_17, %c0_18], %16 {strides = array<i32>} : memref<2x10x8x384xf32, #tpu.memory_space<vmem>>, vector<2x8x1x128xf32>,
    %cst_19 = arith.constant 0.000000e+00 : f32
    %18 = vector.broadcast %cst_19 : f32 to vector<2x8x1x128xf32>
    %c0_20 = arith.constant 0 : index
    %c1_21 = arith.constant 1 : index
    %c7 = arith.constant 7 : index
    %c256 = arith.constant 256 : index
    %19 = vector.load %arg8[%c0_20, %c1_21, %c7, %c256] : memref<2x10x8x384xf32, #tpu.memory_space<vmem>>, vector<2x8x1x128xf32>
    tpu.vector_store %arg8[%c0_20, %c1_21, %c7, %c256], %18 {strides = array<i32>} : memref<2x10x8x384xf32, #tpu.memory_space<vmem>>, vector<2x8x1x128xf32>,
    %c0_22 = arith.constant 0 : index
    %c1_23 = arith.constant 1 : index
    %c0_24 = arith.constant 0 : index
    %c128 = arith.constant 128 : index
    %20 = vector.load %arg8[%c0_22, %c1_23, %c0_24, %c128] : memref<2x10x8x384xf32, #tpu.memory_space<vmem>>, vector<2x8x8x128xf32>
    tpu.vector_store %arg8[%c0_22, %c1_23, %c0_24, %c128], %11 {strides = array<i32>} : memref<2x10x8x384xf32, #tpu.memory_space<vmem>>, vector<2x8x8x128xf32>,
    %21 = vector.extract_strided_slice %11 {offsets = [0, 0, 0, 0], sizes = [2, 8, 7, 128], strides = [1, 1, 1, 1]} : vector<2x8x8x128xf32> to vector<2x8x7x128xf32>
    %c0_25 = arith.constant 0 : index
    %c1_26 = arith.constant 1 : index
    %c1_27 = arith.constant 1 : index
    %c0_28 = arith.constant 0 : index
    %22 = vector.load %arg8[%c0_25, %c1_26, %c1_27, %c0_28] : memref<2x10x8x384xf32, #tpu.memory_space<vmem>>, vector<2x8x7x128xf32>
    tpu.vector_store %arg8[%c0_25, %c1_26, %c1_27, %c0_28], %21 {strides = array<i32>} : memref<2x10x8x384xf32, #tpu.memory_space<vmem>>, vector<2x8x7x128xf32>,
    %23 = vector.extract_strided_slice %11 {offsets = [0, 0, 1, 0], sizes = [2, 8, 7, 128], strides = [1, 1, 1, 1]} : vector<2x8x8x128xf32> to vector<2x8x7x128xf32>
    %c0_29 = arith.constant 0 : index
    %c1_30 = arith.constant 1 : index
    %c0_31 = arith.constant 0 : index
    %c256_32 = arith.constant 256 : index
    %24 = vector.load %arg8[%c0_29, %c1_30, %c0_31, %c256_32] : memref<2x10x8x384xf32, #tpu.memory_space<vmem>>, vector<2x8x7x128xf32>
    tpu.vector_store %arg8[%c0_29, %c1_30, %c0_31, %c256_32], %23 {strides = array<i32>} : memref<2x10x8x384xf32, #tpu.memory_space<vmem>>, vector<2x8x7x128xf32>,
    %cst_33 = arith.constant 0.000000e+00 : f32
    %25 = vector.broadcast %cst_33 : f32 to vector<128x128xf32>
    %c0_34 = arith.constant 0 : index
    %c0_35 = arith.constant 0 : index
    %c0_36 = arith.constant 0 : index
    %c0_37 = arith.constant 0 : index
    %26 = vector.load %arg8[%c0_34, %c0_35, %c0_36, %c0_37] : memref<2x10x8x384xf32, #tpu.memory_space<vmem>>, vector<2x8x8x384xf32>
    %27 = vector.shape_cast %26 : vector<2x8x8x384xf32> to vector<128x384xf32>
    %c0_38 = arith.constant 0 : index
    %c0_39 = arith.constant 0 : index
    %c0_40 = arith.constant 0 : index
    %28 = vector.load %arg4[%c0_38, %c0_39, %c0_40] : memref<3x384x128xf32, #tpu.memory_space<vmem>>, vector<1x384x128xf32>
    %29 = vector.shape_cast %28 : vector<1x384x128xf32> to vector<384x128xf32>
    %cst_41 = arith.constant dense<0.000000e+00> : vector<128x128xf32>
    %30 = tpu.matmul %27, %29, %cst_41 {dimension_numbers = #tpu.dot_dimension_numbers<[1], [0], [0], [1], [0, 0, 1, 1], [], []>} : vector<128x384xf32>, vector<384x128xf32>, vector<128x128xf32> -> vector<128x128xf32>
    %31 = arith.addf %25, %30 : vector<128x128xf32>
    %c0_42 = arith.constant 0 : index
    %c1_43 = arith.constant 1 : index
    %c0_44 = arith.constant 0 : index
    %c0_45 = arith.constant 0 : index
    %32 = vector.load %arg8[%c0_42, %c1_43, %c0_44, %c0_45] : memref<2x10x8x384xf32, #tpu.memory_space<vmem>>, vector<2x8x8x384xf32>
    %33 = vector.shape_cast %32 : vector<2x8x8x384xf32> to vector<128x384xf32>
    %c1_46 = arith.constant 1 : index
    %c0_47 = arith.constant 0 : index
    %c0_48 = arith.constant 0 : index
    %34 = vector.load %arg4[%c1_46, %c0_47, %c0_48] : memref<3x384x128xf32, #tpu.memory_space<vmem>>, vector<1x384x128xf32>
    %35 = vector.shape_cast %34 : vector<1x384x128xf32> to vector<384x128xf32>
    %cst_49 = arith.constant dense<0.000000e+00> : vector<128x128xf32>
    %36 = tpu.matmul %33, %35, %cst_49 {dimension_numbers = #tpu.dot_dimension_numbers<[1], [0], [0], [1], [0, 0, 1, 1], [], []>} : vector<128x384xf32>, vector<384x128xf32>, vector<128x128xf32> -> vector<128x128xf32>
    %37 = arith.addf %31, %36 : vector<128x128xf32>
    %c0_50 = arith.constant 0 : index
    %c2 = arith.constant 2 : index
    %c0_51 = arith.constant 0 : index
    %c0_52 = arith.constant 0 : index
    %38 = vector.load %arg8[%c0_50, %c2, %c0_51, %c0_52] : memref<2x10x8x384xf32, #tpu.memory_space<vmem>>, vector<2x8x8x384xf32>
    %39 = vector.shape_cast %38 : vector<2x8x8x384xf32> to vector<128x384xf32>
    %c2_53 = arith.constant 2 : index
    %c0_54 = arith.constant 0 : index
    %c0_55 = arith.constant 0 : index
    %40 = vector.load %arg4[%c2_53, %c0_54, %c0_55] : memref<3x384x128xf32, #tpu.memory_space<vmem>>, vector<1x384x128xf32>
    %41 = vector.shape_cast %40 : vector<1x384x128xf32> to vector<384x128xf32>
    %cst_56 = arith.constant dense<0.000000e+00> : vector<128x128xf32>
    %42 = tpu.matmul %39, %41, %cst_56 {dimension_numbers = #tpu.dot_dimension_numbers<[1], [0], [0], [1], [0, 0, 1, 1], [], []>} : vector<128x384xf32>, vector<384x128xf32>, vector<128x128xf32> -> vector<128x128xf32>
    %43 = arith.addf %37, %42 : vector<128x128xf32>
    %44 = vector.shape_cast %43 : vector<128x128xf32> to vector<2x64x128xf32>
    %c0_57 = arith.constant 0 : index
    %c0_58 = arith.constant 0 : index
    %c0_59 = arith.constant 0 : index
    %45 = vector.load %arg5[%c0_57, %c0_58, %c0_59] : memref<2x64x128xf32, #tpu.memory_space<vmem>>, vector<2x64x128xf32>
    tpu.vector_store %arg5[%c0_57, %c0_58, %c0_59], %44 {strides = array<i32>} : memref<2x64x128xf32, #tpu.memory_space<vmem>>, vector<2x64x128xf32>,
    %cst_60 = arith.constant dense<0.000000e+00> : vector<128xf32>
    %46 = vector.multi_reduction <add>, %43, %cst_60 [0] : vector<128x128xf32> to vector<128xf32>
    %47 = vector.shape_cast %46 : vector<128xf32> to vector<1x128xf32>
    %c0_61 = arith.constant 0 : index
    %c0_62 = arith.constant 0 : index
    %c0_63 = arith.constant 0 : index
    %48 = vector.load %arg6[%c0_61, %c0_62, %c0_63] : memref<1x1x128xf32, #tpu.memory_space<vmem>>, vector<1x1x128xf32>
    %49 = vector.shape_cast %48 : vector<1x1x128xf32> to vector<1x128xf32>
    %50 = vector.shape_cast %47 : vector<1x128xf32> to vector<1x1x128xf32>
    tpu.vector_store %arg6[%c0_61, %c0_62, %c0_63], %50 {strides = array<i32>} : memref<1x1x128xf32, #tpu.memory_space<vmem>>, vector<1x1x128xf32>,
    %51 = arith.mulf %43, %43 : vector<128x128xf32>
    %cst_64 = arith.constant dense<0.000000e+00> : vector<128xf32>
    %52 = vector.multi_reduction <add>, %51, %cst_64 [0] : vector<128x128xf32> to vector<128xf32>
    %53 = vector.shape_cast %52 : vector<128xf32> to vector<1x128xf32>
    %c0_65 = arith.constant 0 : index
    %c0_66 = arith.constant 0 : index
    %c0_67 = arith.constant 0 : index
    %54 = vector.load %arg7[%c0_65, %c0_66, %c0_67] : memref<1x1x128xf32, #tpu.memory_space<vmem>>, vector<1x1x128xf32>
    %55 = vector.shape_cast %54 : vector<1x1x128xf32> to vector<1x128xf32>
    %56 = vector.shape_cast %53 : vector<1x128xf32> to vector<1x1x128xf32>
    tpu.vector_store %arg7[%c0_65, %c0_66, %c0_67], %56 {strides = array<i32>} : memref<1x1x128xf32, #tpu.memory_space<vmem>>, vector<1x1x128xf32>,
    return
  }
  func.func @transform_0(%arg0: i32) -> (i32, i32, i32) {
    %c0_i32 = arith.constant 0 : i32
    %c0_i32_0 = arith.constant 0 : i32
    %c0_i32_1 = arith.constant 0 : i32
    return %arg0, %c0_i32, %c0_i32_0 : i32, i32, i32
  }
  func.func @transform_1(%arg0: i32) -> (i32, i32) {
    %c0_i32 = arith.constant 0 : i32
    %c0_i32_0 = arith.constant 0 : i32
    %c0_i32_1 = arith.constant 0 : i32
    return %c0_i32, %c0_i32_0 : i32, i32
  }
  func.func @transform_2(%arg0: i32) -> (i32, i32) {
    %c0_i32 = arith.constant 0 : i32
    %c0_i32_0 = arith.constant 0 : i32
    %c0_i32_1 = arith.constant 0 : i32
    return %c0_i32, %c0_i32_0 : i32, i32
  }
  func.func @transform_3(%arg0: i32) -> (i32, i32, i32) {
    %c0_i32 = arith.constant 0 : i32
    %c0_i32_0 = arith.constant 0 : i32
    %c0_i32_1 = arith.constant 0 : i32
    %c0_i32_2 = arith.constant 0 : i32
    return %c0_i32, %c0_i32_0, %c0_i32_1 : i32, i32, i32
  }
  func.func @transform_4(%arg0: i32) -> (i32, i32, i32) {
    %c0_i32 = arith.constant 0 : i32
    %c0_i32_0 = arith.constant 0 : i32
    %c0_i32_1 = arith.constant 0 : i32
    return %arg0, %c0_i32, %c0_i32_0 : i32, i32, i32
  }
  func.func @transform_5(%arg0: i32) -> (i32, i32, i32) {
    %c0_i32 = arith.constant 0 : i32
    %c0_i32_0 = arith.constant 0 : i32
    %c0_i32_1 = arith.constant 0 : i32
    return %arg0, %c0_i32, %c0_i32_0 : i32, i32, i32
  }
  func.func @transform_6(%arg0: i32) -> (i32, i32, i32) {
    %c0_i32 = arith.constant 0 : i32
    %c0_i32_0 = arith.constant 0 : i32
    %c0_i32_1 = arith.constant 0 : i32
    return %arg0, %c0_i32, %c0_i32_0 : i32, i32, i32
  }
}

module attributes {stable_mosaic.version = 11 : i64} {
  func.func @_bn_shortcut_add_relu_kernel(%arg0: i32, %arg1: memref<128x128xf32, #tpu.memory_space<vmem>>, %arg2: memref<1x128xf32, #tpu.memory_space<vmem>>, %arg3: memref<1x128xf32, #tpu.memory_space<vmem>>, %arg4: memref<128x128xf32, #tpu.memory_space<vmem>>, %arg5: memref<128x128xf32, #tpu.memory_space<vmem>>, %arg6: memref<1x128xf32, #tpu.memory_space<vmem>>, %arg7: memref<128x128xf32, #tpu.memory_space<vmem>>) attributes {dimension_semantics = [#tpu.dimension_semantics<parallel>], iteration_bounds = array<i64: 1>, scalar_prefetch = 0 : i64, scratch_operands = 0 : i64, tpu.core_type = #tpu.core_type<tc>, window_params = [{transform_indices = @transform_0, window_bounds = array<i64: 128, 128>}, {pipeline_mode = #tpu.pipeline_mode<synchronous>, transform_indices = @transform_1, window_bounds = array<i64: 1, 128>}, {pipeline_mode = #tpu.pipeline_mode<synchronous>, transform_indices = @transform_2, window_bounds = array<i64: 1, 128>}, {transform_indices = @transform_3, window_bounds = array<i64: 128, 128>}, {pipeline_mode = #tpu.pipeline_mode<synchronous>, transform_indices = @transform_4, window_bounds = array<i64: 128, 128>}, {pipeline_mode = #tpu.pipeline_mode<synchronous>, transform_indices = @transform_5, window_bounds = array<i64: 1, 128>}, {transform_indices = @transform_6, window_bounds = array<i64: 128, 128>}]} {
    %c0 = arith.constant 0 : index
    %c0_0 = arith.constant 0 : index
    %0 = vector.load %arg1[%c0, %c0_0] : memref<128x128xf32, #tpu.memory_space<vmem>>, vector<128x128xf32>
    %c0_1 = arith.constant 0 : index
    %c0_2 = arith.constant 0 : index
    %1 = vector.load %arg2[%c0_1, %c0_2] : memref<1x128xf32, #tpu.memory_space<vmem>>, vector<1x128xf32>
    %2 = vector.broadcast %1 : vector<1x128xf32> to vector<128x128xf32>
    %3 = arith.mulf %0, %2 : vector<128x128xf32>
    %c0_3 = arith.constant 0 : index
    %c0_4 = arith.constant 0 : index
    %4 = vector.load %arg3[%c0_3, %c0_4] : memref<1x128xf32, #tpu.memory_space<vmem>>, vector<1x128xf32>
    %5 = vector.broadcast %4 : vector<1x128xf32> to vector<128x128xf32>
    %6 = arith.addf %3, %5 : vector<128x128xf32>
    %c0_5 = arith.constant 0 : index
    %c0_6 = arith.constant 0 : index
    %7 = vector.load %arg4[%c0_5, %c0_6] : memref<128x128xf32, #tpu.memory_space<vmem>>, vector<128x128xf32>
    %c0_7 = arith.constant 0 : index
    %c0_8 = arith.constant 0 : index
    %8 = vector.load %arg5[%c0_7, %c0_8] : memref<128x128xf32, #tpu.memory_space<vmem>>, vector<128x128xf32>
    %cst = arith.constant dense<0.000000e+00> : vector<128x128xf32>
    %9 = tpu.matmul %7, %8, %cst {dimension_numbers = #tpu.dot_dimension_numbers<[1], [0], [0], [1], [0, 0, 1, 1], [], []>} : vector<128x128xf32>, vector<128x128xf32>, vector<128x128xf32> -> vector<128x128xf32>
    %c0_9 = arith.constant 0 : index
    %c0_10 = arith.constant 0 : index
    %10 = vector.load %arg6[%c0_9, %c0_10] : memref<1x128xf32, #tpu.memory_space<vmem>>, vector<1x128xf32>
    %11 = vector.broadcast %10 : vector<1x128xf32> to vector<128x128xf32>
    %12 = arith.addf %9, %11 : vector<128x128xf32>
    %13 = arith.addf %6, %12 : vector<128x128xf32>
    %cst_11 = arith.constant 0.000000e+00 : f32
    %14 = vector.broadcast %cst_11 : f32 to vector<128x128xf32>
    %15 = arith.maximumf %13, %14 : vector<128x128xf32>
    %c0_12 = arith.constant 0 : index
    %c0_13 = arith.constant 0 : index
    %16 = vector.load %arg7[%c0_12, %c0_13] : memref<128x128xf32, #tpu.memory_space<vmem>>, vector<128x128xf32>
    tpu.vector_store %arg7[%c0_12, %c0_13], %15 {strides = array<i32>} : memref<128x128xf32, #tpu.memory_space<vmem>>, vector<128x128xf32>,
    return
  }
  func.func @transform_0(%arg0: i32) -> (i32, i32) {
    %c0_i32 = arith.constant 0 : i32
    %c0_i32_0 = arith.constant 0 : i32
    return %arg0, %c0_i32 : i32, i32
  }
  func.func @transform_1(%arg0: i32) -> (i32, i32) {
    %c0_i32 = arith.constant 0 : i32
    %c0_i32_0 = arith.constant 0 : i32
    %c0_i32_1 = arith.constant 0 : i32
    return %c0_i32, %c0_i32_0 : i32, i32
  }
  func.func @transform_2(%arg0: i32) -> (i32, i32) {
    %c0_i32 = arith.constant 0 : i32
    %c0_i32_0 = arith.constant 0 : i32
    %c0_i32_1 = arith.constant 0 : i32
    return %c0_i32, %c0_i32_0 : i32, i32
  }
  func.func @transform_3(%arg0: i32) -> (i32, i32) {
    %c0_i32 = arith.constant 0 : i32
    %c0_i32_0 = arith.constant 0 : i32
    return %arg0, %c0_i32 : i32, i32
  }
  func.func @transform_4(%arg0: i32) -> (i32, i32) {
    %c0_i32 = arith.constant 0 : i32
    %c0_i32_0 = arith.constant 0 : i32
    %c0_i32_1 = arith.constant 0 : i32
    return %c0_i32, %c0_i32_0 : i32, i32
  }
  func.func @transform_5(%arg0: i32) -> (i32, i32) {
    %c0_i32 = arith.constant 0 : i32
    %c0_i32_0 = arith.constant 0 : i32
    %c0_i32_1 = arith.constant 0 : i32
    return %c0_i32, %c0_i32_0 : i32, i32
  }
  func.func @transform_6(%arg0: i32) -> (i32, i32) {
    %c0_i32 = arith.constant 0 : i32
    %c0_i32_0 = arith.constant 0 : i32
    return %arg0, %c0_i32 : i32, i32
  }
}

</mosaic_0001>

<llo_original>
// kernel: residual_forward.5
$region0: #{residual_forward.5}
  #allocation0 [shape = 'u32[]', space=smem, size = 0x4, offset = 0x4, fixed_abs, tag = 'smem constant byte address 0x4 - core index']
  #allocation1 [shape = 'u32[144,128]{1,0:T(1,128)}', space=vmem, size = 0x12000, scoped, tag = 'internal scratch']
  %s0 = inlined_call_operand.vmem [shape: f32[128,128], index: 0, kind: input, shape index: {}]
  %s1 = inlined_call_operand.vmem [shape: f32[1,128], index: 1, kind: input, shape index: {}]
  %s2 = inlined_call_operand.vmem [shape: f32[1,128], index: 2, kind: input, shape index: {}]
  %s3 = inlined_call_operand.vmem [shape: f32[128,128], index: 3, kind: input, shape index: {}]
  %s4 = inlined_call_operand.vmem [shape: f32[128,128], index: 4, kind: input, shape index: {}]
  %s5 = inlined_call_operand.vmem [shape: f32[1,128], index: 5, kind: input, shape index: {}]
  %s6 = inlined_call_operand.vmem [shape: f32[128,128], index: 6, kind: output, shape index: {}]
  %s7 = sld [smem:[#allocation0]]
  $region34: #{residual_forward.5} parent=0
    _
  %s9 = ssub.s32 1, %s7
  %s10 = scalar_select 0, %s9, %s7
  // Predicated region
  $region2: #{residual_forward.5} parent=0 // pred_check
    _
  $region3: #{residual_forward.5} parent=0 // pred_check_branch
    %12 = sbr.rel (0) target = $region5
  $region4: #{residual_forward.5} parent=0 // pred_region
    _
  $region5: #{residual_forward.5} parent=0 // pred_fallthru
    _
  // Predicated region
  $region6: #{residual_forward.5} parent=0 // pred_check
    _
  $region7: #{residual_forward.5} parent=0 // pred_check_branch
    %14 = sbr.rel (0) target = $region9
  $region8: #{residual_forward.5} parent=0 // pred_region
    _
  $region9: #{residual_forward.5} parent=0 // pred_fallthru
    _
  // Predicated region
  $region10: #{residual_forward.5} parent=0 // pred_check
    _
  $region11: #{residual_forward.5} parent=0 // pred_check_branch
    %16 = sbr.rel (0) target = $region13
  $region12: #{residual_forward.5} parent=0 // pred_region
    _
  $region13: #{residual_forward.5} parent=0 // pred_fallthru
    _
  // Predicated region
  $region14: #{residual_forward.5} parent=0 // pred_check
    _
  $region15: #{residual_forward.5} parent=0 // pred_check_branch
    %18 = sbr.rel (0) target = $region17
  $region16: #{residual_forward.5} parent=0 // pred_region
    _
  $region17: #{residual_forward.5} parent=0 // pred_fallthru
    _
  // Predicated region
  $region18: #{residual_forward.5} parent=0 // pred_check
    _
  $region19: #{residual_forward.5} parent=0 // pred_check_branch
    %20 = sbr.rel (0) target = $region21
  $region20: #{residual_forward.5} parent=0 // pred_region
    _
  $region21: #{residual_forward.5} parent=0 // pred_fallthru
    _
  // Predicated region
  $region22: #{residual_forward.5} parent=0 // pred_check
    _
  $region23: #{residual_forward.5} parent=0 // pred_check_branch
    %22 = sbr.rel (0) target = $region25
  $region24: #{residual_forward.5} parent=0 // pred_region
    _
  $region25: #{residual_forward.5} parent=0 // pred_fallthru
    _
  %v23 = vld [vmem:[%s0] sm:$0xff]
  %v24 = vld [vmem:[%s0 + $0x8] sm:$0xff]
  %v25 = vld [vmem:[%s0 + $0x10] sm:$0xff]
  %v26 = vld [vmem:[%s0 + $0x18] sm:$0xff]
  %v27 = vld [vmem:[%s0 + $0x20] sm:$0xff]
  %v28 = vld [vmem:[%s0 + $0x28] sm:$0xff]
  %v29 = vld [vmem:[%s0 + $0x30] sm:$0xff]
  %v30 = vld [vmem:[%s0 + $0x38] sm:$0xff]
  %v31 = vld [vmem:[%s0 + $0x40] sm:$0xff]
  %v32 = vld [vmem:[%s0 + $0x48] sm:$0xff]
  %v33 = vld [vmem:[%s0 + $0x50] sm:$0xff]
  %v34 = vld [vmem:[%s0 + $0x58] sm:$0xff]
  %v35 = vld [vmem:[%s0 + $0x60] sm:$0xff]
  %v36 = vld [vmem:[%s0 + $0x68] sm:$0xff]
  %v37 = vld [vmem:[%s0 + $0x70] sm:$0xff]
  %v38 = vld [vmem:[%s0 + $0x78] sm:$0xff]
  %v39 = vld [vmem:[%s1] sm:$0x1]
  %v41 = vlaneseq
  %v42 = vshrl.u32 %v41, 7
  %v43 = vsub.s32 0, %v42
  %v44 = vrot.slane %v39, %v43
  %v46 = vmul.f32 %v23, %v44
  %v47 = vmul.f32 %v24, %v44
  %v48 = vmul.f32 %v25, %v44
  %v49 = vmul.f32 %v26, %v44
  %v50 = vmul.f32 %v27, %v44
  %v51 = vmul.f32 %v28, %v44
  %v52 = vmul.f32 %v29, %v44
  %v53 = vmul.f32 %v30, %v44
  %v54 = vmul.f32 %v31, %v44
  %v55 = vmul.f32 %v32, %v44
  %v56 = vmul.f32 %v33, %v44
  %v57 = vmul.f32 %v34, %v44
  %v58 = vmul.f32 %v35, %v44
  %v59 = vmul.f32 %v36, %v44
  %v60 = vmul.f32 %v37, %v44
  %v61 = vmul.f32 %v38, %v44
  %v62 = vld [vmem:[%s2] sm:$0x1]
  %v64 = vlaneseq
  %v65 = vshrl.u32 %v64, 7
  %v66 = vsub.s32 0, %v65
  %v67 = vrot.slane %v62, %v66
  %v69 = vadd.f32 %v46, %v67
  %v70 = vadd.f32 %v47, %v67
  %v71 = vadd.f32 %v48, %v67
  %v72 = vadd.f32 %v49, %v67
  %v73 = vadd.f32 %v50, %v67
  %v74 = vadd.f32 %v51, %v67
  %v75 = vadd.f32 %v52, %v67
  %v76 = vadd.f32 %v53, %v67
  %v77 = vadd.f32 %v54, %v67
  %v78 = vadd.f32 %v55, %v67
  %v79 = vadd.f32 %v56, %v67
  %v80 = vadd.f32 %v57, %v67
  %v81 = vadd.f32 %v58, %v67
  %v82 = vadd.f32 %v59, %v67
  %v83 = vadd.f32 %v60, %v67
  %v84 = vadd.f32 %v61, %v67
  %v85 = vld [vmem:[%s3] sm:$0xff]
  %v86 = vld [vmem:[%s3 + $0x8] sm:$0xff]
  %v87 = vld [vmem:[%s3 + $0x10] sm:$0xff]
  %v88 = vld [vmem:[%s3 + $0x18] sm:$0xff]
  %v89 = vld [vmem:[%s3 + $0x20] sm:$0xff]
  %v90 = vld [vmem:[%s3 + $0x28] sm:$0xff]
  %v91 = vld [vmem:[%s3 + $0x30] sm:$0xff]
  %v92 = vld [vmem:[%s3 + $0x38] sm:$0xff]
  %v93 = vld [vmem:[%s3 + $0x40] sm:$0xff]
  %v94 = vld [vmem:[%s3 + $0x48] sm:$0xff]
  %v95 = vld [vmem:[%s3 + $0x50] sm:$0xff]
  %v96 = vld [vmem:[%s3 + $0x58] sm:$0xff]
  %v97 = vld [vmem:[%s3 + $0x60] sm:$0xff]
  %v98 = vld [vmem:[%s3 + $0x68] sm:$0xff]
  %v99 = vld [vmem:[%s3 + $0x70] sm:$0xff]
  %v100 = vld [vmem:[%s3 + $0x78] sm:$0xff]
  %v101 = vld [vmem:[%s4] sm:$0xff]
  %v102 = vld [vmem:[%s4 + $0x8] sm:$0xff]
  %v103 = vld [vmem:[%s4 + $0x10] sm:$0xff]
  %v104 = vld [vmem:[%s4 + $0x18] sm:$0xff]
  %v105 = vld [vmem:[%s4 + $0x20] sm:$0xff]
  %v106 = vld [vmem:[%s4 + $0x28] sm:$0xff]
  %v107 = vld [vmem:[%s4 + $0x30] sm:$0xff]
  %v108 = vld [vmem:[%s4 + $0x38] sm:$0xff]
  %v109 = vld [vmem:[%s4 + $0x40] sm:$0xff]
  %v110 = vld [vmem:[%s4 + $0x48] sm:$0xff]
  %v111 = vld [vmem:[%s4 + $0x50] sm:$0xff]
  %v112 = vld [vmem:[%s4 + $0x58] sm:$0xff]
  %v113 = vld [vmem:[%s4 + $0x60] sm:$0xff]
  %v114 = vld [vmem:[%s4 + $0x68] sm:$0xff]
  %v115 = vld [vmem:[%s4 + $0x70] sm:$0xff]
  %v116 = vld [vmem:[%s4 + $0x78] sm:$0xff]
  %v117 = vld [vmem:[%s5] sm:$0x1]
  %v119 = vlaneseq
  %v120 = vshrl.u32 %v119, 7
  %v121 = vsub.s32 0, %v120
  %v122 = vrot.slane %v117, %v121
  %124 = vmatprep.subr.mxu0 0.0
  %125 = vmatpush1.msra.mxu0 %v116
  %126 = vmatprep.subr.mxu0 0.0
  %127 = vmatpush1.msra.mxu0 %v115
  %128 = vmatprep.subr.mxu0 0.0
  %129 = vmatpush1.msra.mxu0 %v114
  %130 = vmatprep.subr.mxu0 0.0
  %131 = vmatpush1.msra.mxu0 %v113
  %132 = vmatprep.subr.mxu0 0.0
  %133 = vmatpush1.msra.mxu0 %v112
  %134 = vmatprep.subr.mxu0 0.0
  %135 = vmatpush1.msra.mxu0 %v111
  %136 = vmatprep.subr.mxu0 0.0
  %137 = vmatpush1.msra.mxu0 %v110
  %138 = vmatprep.subr.mxu0 0.0
  %139 = vmatpush1.msra.mxu0 %v109
  %140 = vmatprep.subr.mxu0 0.0
  %141 = vmatpush1.msra.mxu0 %v108
  %142 = vmatprep.subr.mxu0 0.0
  %143 = vmatpush1.msra.mxu0 %v107
  %144 = vmatprep.subr.mxu0 0.0
  %145 = vmatpush1.msra.mxu0 %v106
  %146 = vmatprep.subr.mxu0 0.0
  %147 = vmatpush1.msra.mxu0 %v105
  %148 = vmatprep.subr.mxu0 0.0
  %149 = vmatpush1.msra.mxu0 %v104
  %150 = vmatprep.subr.mxu0 0.0
  %151 = vmatpush1.msra.mxu0 %v103
  %152 = vmatprep.subr.mxu0 0.0
  %153 = vmatpush1.msra.mxu0 %v102
  %154 = vmatprep.subr.mxu0 0.0
  %155 = vmatpush1.msra.mxu0 %v101
  %156 = vmatprep.subr.mxu0 0.0
  %157 = vmatpush2.msra.mxu0 0.0
  %158 = vmatprep.subr.mxu0 0.0
  %159 = vmatpush2.msra.mxu0 0.0
  %160 = vmatprep.subr.mxu0 0.0
  %161 = vmatpush2.msra.mxu0 0.0
  %162 = vmatprep.subr.mxu0 0.0
  %163 = vmatpush2.msra.mxu0 0.0
  %164 = vmatprep.subr.mxu0 0.0
  %165 = vmatpush2.msra.mxu0 0.0
  %166 = vmatprep.subr.mxu0 0.0
  %167 = vmatpush2.msra.mxu0 0.0
  %168 = vmatprep.subr.mxu0 0.0
  %169 = vmatpush2.msra.mxu0 0.0
  %170 = vmatprep.subr.mxu0 0.0
  %171 = vmatpush2.msra.mxu0 0.0
  %172 = vmatprep.subr.mxu0 0.0
  %173 = vmatpush2.msra.mxu0 0.0
  %174 = vmatprep.subr.mxu0 0.0
  %175 = vmatpush2.msra.mxu0 0.0
  %176 = vmatprep.subr.mxu0 0.0
  %177 = vmatpush2.msra.mxu0 0.0
  %178 = vmatprep.subr.mxu0 0.0
  %179 = vmatpush2.msra.mxu0 0.0
  %180 = vmatprep.subr.mxu0 0.0
  %181 = vmatpush2.msra.mxu0 0.0
  %182 = vmatprep.subr.mxu0 0.0
  %183 = vmatpush2.msra.mxu0 0.0
  %184 = vmatprep.subr.mxu0 0.0
  %185 = vmatpush2.msra.mxu0 0.0
  %186 = vmatprep.subr.mxu0 0.0
  %187 = vmatpush2.msra.mxu0 0.0
  %188 = vmatprep.mubr.f32.mxu0 0.0
  %189 = vmatmul.mubr.f32.gmra.mxu0 %v85
  %v190 = vpop.f32.mrf.mxu0
  %v191 = vadd.f32 %v122, %v190
  %v192 = vpop.f32.mrf.mxu0
  %193 = vmatprep.mubr.f32.mxu0 0.0
  %194 = vmatmul.mubr.f32.gmra.mxu0 %v86
  %v195 = vpop.f32.mrf.mxu0
  %v196 = vadd.f32 %v122, %v195
  %v197 = vpop.f32.mrf.mxu0
  %198 = vmatprep.mubr.f32.mxu0 0.0
  %199 = vmatmul.mubr.f32.gmra.mxu0 %v87
  %v200 = vpop.f32.mrf.mxu0
  %v201 = vadd.f32 %v122, %v200
  %v202 = vpop.f32.mrf.mxu0
  %203 = vmatprep.mubr.f32.mxu0 0.0
  %204 = vmatmul.mubr.f32.gmra.mxu0 %v88
  %v205 = vpop.f32.mrf.mxu0
  %v206 = vadd.f32 %v122, %v205
  %v207 = vpop.f32.mrf.mxu0
  %208 = vmatprep.mubr.f32.mxu0 0.0
  %209 = vmatmul.mubr.f32.gmra.mxu0 %v89
  %v210 = vpop.f32.mrf.mxu0
  %v211 = vadd.f32 %v122, %v210
  %v212 = vpop.f32.mrf.mxu0
  %213 = vmatprep.mubr.f32.mxu0 0.0
  %214 = vmatmul.mubr.f32.gmra.mxu0 %v90
  %v215 = vpop.f32.mrf.mxu0
  %v216 = vadd.f32 %v122, %v215
  %v217 = vpop.f32.mrf.mxu0
  %218 = vmatprep.mubr.f32.mxu0 0.0
  %219 = vmatmul.mubr.f32.gmra.mxu0 %v91
  %v220 = vpop.f32.mrf.mxu0
  %v221 = vadd.f32 %v122, %v220
  %v222 = vpop.f32.mrf.mxu0
  %223 = vmatprep.mubr.f32.mxu0 0.0
  %224 = vmatmul.mubr.f32.gmra.mxu0 %v92
  %v225 = vpop.f32.mrf.mxu0
  %v226 = vadd.f32 %v122, %v225
  %v227 = vpop.f32.mrf.mxu0
  %228 = vmatprep.mubr.f32.mxu0 0.0
  %229 = vmatmul.mubr.f32.gmra.mxu0 %v93
  %v230 = vpop.f32.mrf.mxu0
  %v231 = vadd.f32 %v122, %v230
  %v232 = vpop.f32.mrf.mxu0
  %233 = vmatprep.mubr.f32.mxu0 0.0
  %234 = vmatmul.mubr.f32.gmra.mxu0 %v94
  %v235 = vpop.f32.mrf.mxu0
  %v236 = vadd.f32 %v122, %v235
  %v237 = vpop.f32.mrf.mxu0
  %238 = vmatprep.mubr.f32.mxu0 0.0
  %239 = vmatmul.mubr.f32.gmra.mxu0 %v95
  %v240 = vpop.f32.mrf.mxu0
  %v241 = vadd.f32 %v122, %v240
  %v242 = vpop.f32.mrf.mxu0
  %243 = vmatprep.mubr.f32.mxu0 0.0
  %244 = vmatmul.mubr.f32.gmra.mxu0 %v96
  %v245 = vpop.f32.mrf.mxu0
  %v246 = vadd.f32 %v122, %v245
  %v247 = vpop.f32.mrf.mxu0
  %248 = vmatprep.mubr.f32.mxu0 0.0
  %249 = vmatmul.mubr.f32.gmra.mxu0 %v97
  %v250 = vpop.f32.mrf.mxu0
  %v251 = vadd.f32 %v122, %v250
  %v252 = vpop.f32.mrf.mxu0
  %253 = vmatprep.mubr.f32.mxu0 0.0
  %254 = vmatmul.mubr.f32.gmra.mxu0 %v98
  %v255 = vpop.f32.mrf.mxu0
  %v256 = vadd.f32 %v122, %v255
  %v257 = vpop.f32.mrf.mxu0
  %258 = vmatprep.mubr.f32.mxu0 0.0
  %259 = vmatmul.mubr.f32.gmra.mxu0 %v99
  %v260 = vpop.f32.mrf.mxu0
  %v261 = vadd.f32 %v122, %v260
  %v262 = vpop.f32.mrf.mxu0
  %263 = vmatprep.mubr.f32.mxu0 0.0
  %264 = vmatmul.mubr.f32.gmra.mxu0 %v100
  %v265 = vpop.f32.mrf.mxu0
  %v266 = vadd.f32 %v122, %v265
  %v267 = vpop.f32.mrf.mxu0
  %268 = vdwg.mxu0
  %v269 = vadd.f32 %v69, %v191
  %v270 = vadd.f32 %v70, %v196
  %v271 = vadd.f32 %v71, %v201
  %v272 = vadd.f32 %v72, %v206
  %v273 = vadd.f32 %v73, %v211
  %v274 = vadd.f32 %v74, %v216
  %v275 = vadd.f32 %v75, %v221
  %v276 = vadd.f32 %v76, %v226
  %v277 = vadd.f32 %v77, %v231
  %v278 = vadd.f32 %v78, %v236
  %v279 = vadd.f32 %v79, %v241
  %v280 = vadd.f32 %v80, %v246
  %v281 = vadd.f32 %v81, %v251
  %v282 = vadd.f32 %v82, %v256
  %v283 = vadd.f32 %v83, %v261
  %v284 = vadd.f32 %v84, %v266
  %v285 = vmax.f32 %v269, 0.0
  %v286 = vmax.f32 %v270, 0.0
  %v287 = vmax.f32 %v271, 0.0
  %v288 = vmax.f32 %v272, 0.0
  %v289 = vmax.f32 %v273, 0.0
  %v290 = vmax.f32 %v274, 0.0
  %v291 = vmax.f32 %v275, 0.0
  %v292 = vmax.f32 %v276, 0.0
  %v293 = vmax.f32 %v277, 0.0
  %v294 = vmax.f32 %v278, 0.0
  %v295 = vmax.f32 %v279, 0.0
  %v296 = vmax.f32 %v280, 0.0
  %v297 = vmax.f32 %v281, 0.0
  %v298 = vmax.f32 %v282, 0.0
  %v299 = vmax.f32 %v283, 0.0
  %v300 = vmax.f32 %v284, 0.0
  %301 = vst [vmem:[%s6] sm:$0xff] %v285
  %302 = vst [vmem:[%s6 + $0x8] sm:$0xff] %v286
  %303 = vst [vmem:[%s6 + $0x10] sm:$0xff] %v287
  %304 = vst [vmem:[%s6 + $0x18] sm:$0xff] %v288
  %305 = vst [vmem:[%s6 + $0x20] sm:$0xff] %v289
  %306 = vst [vmem:[%s6 + $0x28] sm:$0xff] %v290
  %307 = vst [vmem:[%s6 + $0x30] sm:$0xff] %v291
  %308 = vst [vmem:[%s6 + $0x38] sm:$0xff] %v292
  %309 = vst [vmem:[%s6 + $0x40] sm:$0xff] %v293
  %310 = vst [vmem:[%s6 + $0x48] sm:$0xff] %v294
  %311 = vst [vmem:[%s6 + $0x50] sm:$0xff] %v295
  %312 = vst [vmem:[%s6 + $0x58] sm:$0xff] %v296
  %313 = vst [vmem:[%s6 + $0x60] sm:$0xff] %v297
  %314 = vst [vmem:[%s6 + $0x68] sm:$0xff] %v298
  %315 = vst [vmem:[%s6 + $0x70] sm:$0xff] %v299
  %316 = vst [vmem:[%s6 + $0x78] sm:$0xff] %v300
  // Predicated region
  $region26: #{residual_forward.5} parent=0 // pred_check
    _
  $region27: #{residual_forward.5} parent=0 // pred_check_branch
    %318 = sbr.rel (0) target = $region29
  $region28: #{residual_forward.5} parent=0 // pred_region
    _
  $region29: #{residual_forward.5} parent=0 // pred_fallthru
    _
  // Predicated region
  $region30: #{residual_forward.5} parent=0 // pred_check
    _
  $region31: #{residual_forward.5} parent=0 // pred_check_branch
    %320 = sbr.rel (0) target = $region33
  $region32: #{residual_forward.5} parent=0 // pred_region
    _
  $region33: #{residual_forward.5} parent=0 // pred_fallthru
    _

// kernel: residual_forward.3
$region0: #{residual_forward.3}
  #allocation0 [shape = 'u32[]', space=smem, size = 0x4, offset = 0x4, fixed_abs, tag = 'smem constant byte address 0x4 - core index']
  #allocation1 [shape = 'u32[144,128]{1,0:T(1,128)}', space=vmem, size = 0x12000, scoped, tag = 'internal scratch']
  #allocation2 [shape = 'f32[4,9,8,384]{3,2,1,0:T(8,128)}', space=vmem, size = 0x6c000, scoped, tag = 'scratch operand']
  %s0 = inlined_call_operand.vmem [shape: f32[8,9,9,128], index: 0, kind: input, shape index: {}]
  %s1 = inlined_call_operand.vmem [shape: f32[3,384,128], index: 1, kind: input, shape index: {}]
  %s2 = inlined_call_operand.vmem [shape: f32[2,64,128], index: 2, kind: output, shape index: {0}]
  %s3 = inlined_call_operand.vmem [shape: f32[1,1,128], index: 3, kind: output, shape index: {1}]
  %s4 = inlined_call_operand.vmem [shape: f32[1,1,128], index: 4, kind: output, shape index: {2}]
  %5 = xla_tuple %s2, %s3, %s4
  %s6 = sld [smem:[#allocation0]]
  $region34: #{residual_forward.3} parent=0
    _
  %s8 = ssub.s32 1, %s6
  %s9 = scalar_select 0, %s8, %s6
  // Predicated region
  $region2: #{residual_forward.3} parent=0 // pred_check
    _
  $region3: #{residual_forward.3} parent=0 // pred_check_branch
    %11 = sbr.rel (0) target = $region5
  $region4: #{residual_forward.3} parent=0 // pred_region
    _
  $region5: #{residual_forward.3} parent=0 // pred_fallthru
    _
  // Predicated region
  $region6: #{residual_forward.3} parent=0 // pred_check
    _
  $region7: #{residual_forward.3} parent=0 // pred_check_branch
    %13 = sbr.rel (0) target = $region9
  $region8: #{residual_forward.3} parent=0 // pred_region
    _
  $region9: #{residual_forward.3} parent=0 // pred_fallthru
    _
  %v14 = vld [vmem:[%s0] sm:$0xff]
  %v15 = vld [vmem:[%s0 + $0x10] sm:$0xff]
  %v16 = vld [vmem:[%s0 + $0x20] sm:$0xff]
  %v17 = vld [vmem:[%s0 + $0x30] sm:$0xff]
  %v18 = vld [vmem:[%s0 + $0x40] sm:$0xff]
  %v19 = vld [vmem:[%s0 + $0x50] sm:$0xff]
  %v20 = vld [vmem:[%s0 + $0x60] sm:$0xff]
  %v21 = vld [vmem:[%s0 + $0x70] sm:$0xff]
  %v22 = vld [vmem:[%s0 + $0x80] sm:$0xff]
  %23 = vst [vmem:[#allocation2] sm:$0xff] %v14
  %24 = vst [vmem:[#allocation2 + $0x18] sm:$0xff] %v15
  %25 = vst [vmem:[#allocation2 + $0x30] sm:$0xff] %v16
  %26 = vst [vmem:[#allocation2 + $0x48] sm:$0xff] %v17
  %27 = vst [vmem:[#allocation2 + $0x60] sm:$0xff] %v18
  %28 = vst [vmem:[#allocation2 + $0x78] sm:$0xff] %v19
  %29 = vst [vmem:[#allocation2 + $0x90] sm:$0xff] %v20
  %30 = vst [vmem:[#allocation2 + $0xa8] sm:$0xff] %v21
  %31 = vst [vmem:[#allocation2 + $0xc0] sm:$0xff] %v22
  %s32 = scalar_lea.vmem %s0, 144
  %v33 = vld [vmem:[%s32] sm:$0xff]
  %v34 = vld [vmem:[%s32 + $0x10] sm:$0xff]
  %v35 = vld [vmem:[%s32 + $0x20] sm:$0xff]
  %v36 = vld [vmem:[%s32 + $0x30] sm:$0xff]
  %v37 = vld [vmem:[%s32 + $0x40] sm:$0xff]
  %v38 = vld [vmem:[%s32 + $0x50] sm:$0xff]
  %v39 = vld [vmem:[%s32 + $0x60] sm:$0xff]
  %v40 = vld [vmem:[%s32 + $0x70] sm:$0xff]
  %v41 = vld [vmem:[%s32 + $0x80] sm:$0xff]
  %42 = vst [vmem:[#allocation2 + $0x8] sm:$0xff] %v33
  %43 = vst [vmem:[#allocation2 + $0x20] sm:$0xff] %v34
  %44 = vst [vmem:[#allocation2 + $0x38] sm:$0xff] %v35
  %45 = vst [vmem:[#allocation2 + $0x50] sm:$0xff] %v36
  %46 = vst [vmem:[#allocation2 + $0x68] sm:$0xff] %v37
  %47 = vst [vmem:[#allocation2 + $0x80] sm:$0xff] %v38
  %48 = vst [vmem:[#allocation2 + $0x98] sm:$0xff] %v39
  %49 = vst [vmem:[#allocation2 + $0xb0] sm:$0xff] %v40
  %50 = vst [vmem:[#allocation2 + $0xc8] sm:$0xff] %v41
  %v51 = vld [vmem:[%s0 + $0x1] sm:$0xff]
  %v52 = vld [vmem:[%s0 + $0x11] sm:$0xff]
  %v53 = vld [vmem:[%s0 + $0x21] sm:$0xff]
  %v54 = vld [vmem:[%s0 + $0x31] sm:$0xff]
  %v55 = vld [vmem:[%s0 + $0x41] sm:$0xff]
  %v56 = vld [vmem:[%s0 + $0x51] sm:$0xff]
  %v57 = vld [vmem:[%s0 + $0x61] sm:$0xff]
  %v58 = vld [vmem:[%s0 + $0x71] sm:$0xff]
  %v59 = vld [vmem:[%s0 + $0x81] sm:$0xff]
  %60 = vst [vmem:[#allocation2 + $0x10] sm:$0xff] %v51
  %61 = vst [vmem:[#allocation2 + $0x28] sm:$0xff] %v52
  %62 = vst [vmem:[#allocation2 + $0x40] sm:$0xff] %v53
  %63 = vst [vmem:[#allocation2 + $0x58] sm:$0xff] %v54
  %64 = vst [vmem:[#allocation2 + $0x70] sm:$0xff] %v55
  %65 = vst [vmem:[#allocation2 + $0x88] sm:$0xff] %v56
  %66 = vst [vmem:[#allocation2 + $0xa0] sm:$0xff] %v57
  %67 = vst [vmem:[#allocation2 + $0xb8] sm:$0xff] %v58
  %68 = vst [vmem:[#allocation2 + $0xd0] sm:$0xff] %v59
  %s69 = scalar_lea.vmem %s0, 288
  %v70 = vld [vmem:[%s69] sm:$0xff]
  %v71 = vld [vmem:[%s69 + $0x10] sm:$0xff]
  %v72 = vld [vmem:[%s69 + $0x20] sm:$0xff]
  %v73 = vld [vmem:[%s69 + $0x30] sm:$0xff]
  %v74 = vld [vmem:[%s69 + $0x40] sm:$0xff]
  %v75 = vld [vmem:[%s69 + $0x50] sm:$0xff]
  %v76 = vld [vmem:[%s69 + $0x60] sm:$0xff]
  %v77 = vld [vmem:[%s69 + $0x70] sm:$0xff]
  %v78 = vld [vmem:[%s69 + $0x80] sm:$0xff]
  %s79 = scalar_lea.vmem [#allocation2], 432
  %80 = vst [vmem:[%s79] sm:$0xff] %v70
  %81 = vst [vmem:[%s79 + $0x18] sm:$0xff] %v71
  %82 = vst [vmem:[%s79 + $0x30] sm:$0xff] %v72
  %83 = vst [vmem:[%s79 + $0x48] sm:$0xff] %v73
  %84 = vst [vmem:[%s79 + $0x60] sm:$0xff] %v74
  %85 = vst [vmem:[%s79 + $0x78] sm:$0xff] %v75
  %86 = vst [vmem:[%s79 + $0x90] sm:$0xff] %v76
  %87 = vst [vmem:[%s79 + $0xa8] sm:$0xff] %v77
  %88 = vst [vmem:[%s79 + $0xc0] sm:$0xff] %v78
  %s89 = scalar_lea.vmem %s0, 432
  %v90 = vld [vmem:[%s89] sm:$0xff]
  %v91 = vld [vmem:[%s89 + $0x10] sm:$0xff]
  %v92 = vld [vmem:[%s89 + $0x20] sm:$0xff]
  %v93 = vld [vmem:[%s89 + $0x30] sm:$0xff]
  %v94 = vld [vmem:[%s89 + $0x40] sm:$0xff]
  %v95 = vld [vmem:[%s89 + $0x50] sm:$0xff]
  %v96 = vld [vmem:[%s89 + $0x60] sm:$0xff]
  %v97 = vld [vmem:[%s89 + $0x70] sm:$0xff]
  %v98 = vld [vmem:[%s89 + $0x80] sm:$0xff]
  %99 = vst [vmem:[%s79 + $0x8] sm:$0xff] %v90
  %100 = vst [vmem:[%s79 + $0x20] sm:$0xff] %v91
  %101 = vst [vmem:[%s79 + $0x38] sm:$0xff] %v92
  %102 = vst [vmem:[%s79 + $0x50] sm:$0xff] %v93
  %103 = vst [vmem:[%s79 + $0x68] sm:$0xff] %v94
  %104 = vst [vmem:[%s79 + $0x80] sm:$0xff] %v95
  %105 = vst [vmem:[%s79 + $0x98] sm:$0xff] %v96
  %106 = vst [vmem:[%s79 + $0xb0] sm:$0xff] %v97
  %107 = vst [vmem:[%s79 + $0xc8] sm:$0xff] %v98
  %v108 = vld [vmem:[%s69 + $0x1] sm:$0xff]
  %v109 = vld [vmem:[%s69 + $0x11] sm:$0xff]
  %v110 = vld [vmem:[%s69 + $0x21] sm:$0xff]
  %v111 = vld [vmem:[%s69 + $0x31] sm:$0xff]
  %v112 = vld [vmem:[%s69 + $0x41] sm:$0xff]
  %v113 = vld [vmem:[%s69 + $0x51] sm:$0xff]
  %v114 = vld [vmem:[%s69 + $0x61] sm:$0xff]
  %v115 = vld [vmem:[%s69 + $0x71] sm:$0xff]
  %v116 = vld [vmem:[%s69 + $0x81] sm:$0xff]
  %117 = vst [vmem:[%s79 + $0x10] sm:$0xff] %v108
  %118 = vst [vmem:[%s79 + $0x28] sm:$0xff] %v109
  %119 = vst [vmem:[%s79 + $0x40] sm:$0xff] %v110
  %120 = vst [vmem:[%s79 + $0x58] sm:$0xff] %v111
  %121 = vst [vmem:[%s79 + $0x70] sm:$0xff] %v112
  %122 = vst [vmem:[%s79 + $0x88] sm:$0xff] %v113
  %123 = vst [vmem:[%s79 + $0xa0] sm:$0xff] %v114
  %124 = vst [vmem:[%s79 + $0xb8] sm:$0xff] %v115
  %125 = vst [vmem:[%s79 + $0xd0] sm:$0xff] %v116
  %s126 = scalar_lea.vmem %s0, 576
  %v127 = vld [vmem:[%s126] sm:$0xff]
  %v128 = vld [vmem:[%s126 + $0x10] sm:$0xff]
  %v129 = vld [vmem:[%s126 + $0x20] sm:$0xff]
  %v130 = vld [vmem:[%s126 + $0x30] sm:$0xff]
  %v131 = vld [vmem:[%s126 + $0x40] sm:$0xff]
  %v132 = vld [vmem:[%s126 + $0x50] sm:$0xff]
  %v133 = vld [vmem:[%s126 + $0x60] sm:$0xff]
  %v134 = vld [vmem:[%s126 + $0x70] sm:$0xff]
  %v135 = vld [vmem:[%s126 + $0x80] sm:$0xff]
  %s136 = scalar_lea.vmem [#allocation2], 216
  %137 = vst [vmem:[%s136] sm:$0xff] %v127
  %138 = vst [vmem:[%s136 + $0x18] sm:$0xff] %v128
  %139 = vst [vmem:[%s136 + $0x30] sm:$0xff] %v129
  %140 = vst [vmem:[%s136 + $0x48] sm:$0xff] %v130
  %141 = vst [vmem:[%s136 + $0x60] sm:$0xff] %v131
  %142 = vst [vmem:[%s136 + $0x78] sm:$0xff] %v132
  %143 = vst [vmem:[%s136 + $0x90] sm:$0xff] %v133
  %144 = vst [vmem:[%s136 + $0xa8] sm:$0xff] %v134
  %145 = vst [vmem:[%s136 + $0xc0] sm:$0xff] %v135
  %s146 = scalar_lea.vmem %s0, 720
  %v147 = vld [vmem:[%s146] sm:$0xff]
  %v148 = vld [vmem:[%s146 + $0x10] sm:$0xff]
  %v149 = vld [vmem:[%s146 + $0x20] sm:$0xff]
  %v150 = vld [vmem:[%s146 + $0x30] sm:$0xff]
  %v151 = vld [vmem:[%s146 + $0x40] sm:$0xff]
  %v152 = vld [vmem:[%s146 + $0x50] sm:$0xff]
  %v153 = vld [vmem:[%s146 + $0x60] sm:$0xff]
  %v154 = vld [vmem:[%s146 + $0x70] sm:$0xff]
  %v155 = vld [vmem:[%s146 + $0x80] sm:$0xff]
  %156 = vst [vmem:[%s136 + $0x8] sm:$0xff] %v147
  %157 = vst [vmem:[%s136 + $0x20] sm:$0xff] %v148
  %158 = vst [vmem:[%s136 + $0x38] sm:$0xff] %v149
  %159 = vst [vmem:[%s136 + $0x50] sm:$0xff] %v150
  %160 = vst [vmem:[%s136 + $0x68] sm:$0xff] %v151
  %161 = vst [vmem:[%s136 + $0x80] sm:$0xff] %v152
  %162 = vst [vmem:[%s136 + $0x98] sm:$0xff] %v153
  %163 = vst [vmem:[%s136 + $0xb0] sm:$0xff] %v154
  %164 = vst [vmem:[%s136 + $0xc8] sm:$0xff] %v155
  %v165 = vld [vmem:[%s126 + $0x1] sm:$0xff]
  %v166 = vld [vmem:[%s126 + $0x11] sm:$0xff]
  %v167 = vld [vmem:[%s126 + $0x21] sm:$0xff]
  %v168 = vld [vmem:[%s126 + $0x31] sm:$0xff]
  %v169 = vld [vmem:[%s126 + $0x41] sm:$0xff]
  %v170 = vld [vmem:[%s126 + $0x51] sm:$0xff]
  %v171 = vld [vmem:[%s126 + $0x61] sm:$0xff]
  %v172 = vld [vmem:[%s126 + $0x71] sm:$0xff]
  %v173 = vld [vmem:[%s126 + $0x81] sm:$0xff]
  %174 = vst [vmem:[%s136 + $0x10] sm:$0xff] %v165
  %175 = vst [vmem:[%s136 + $0x28] sm:$0xff] %v166
  %176 = vst [vmem:[%s136 + $0x40] sm:$0xff] %v167
  %177 = vst [vmem:[%s136 + $0x58] sm:$0xff] %v168
  %178 = vst [vmem:[%s136 + $0x70] sm:$0xff] %v169
  %179 = vst [vmem:[%s136 + $0x88] sm:$0xff] %v170
  %180 = vst [vmem:[%s136 + $0xa0] sm:$0xff] %v171
  %181 = vst [vmem:[%s136 + $0xb8] sm:$0xff] %v172
  %182 = vst [vmem:[%s136 + $0xd0] sm:$0xff] %v173
  %s183 = scalar_lea.vmem %s0, 864
  %v184 = vld [vmem:[%s183] sm:$0xff]
  %v185 = vld [vmem:[%s183 + $0x10] sm:$0xff]
  %v186 = vld [vmem:[%s183 + $0x20] sm:$0xff]
  %v187 = vld [vmem:[%s183 + $0x30] sm:$0xff]
  %v188 = vld [vmem:[%s183 + $0x40] sm:$0xff]
  %v189 = vld [vmem:[%s183 + $0x50] sm:$0xff]
  %v190 = vld [vmem:[%s183 + $0x60] sm:$0xff]
  %v191 = vld [vmem:[%s183 + $0x70] sm:$0xff]
  %v192 = vld [vmem:[%s183 + $0x80] sm:$0xff]
  %s193 = scalar_lea.vmem [#allocation2], 648
  %194 = vst [vmem:[%s193] sm:$0xff] %v184
  %195 = vst [vmem:[%s193 + $0x18] sm:$0xff] %v185
  %196 = vst [vmem:[%s193 + $0x30] sm:$0xff] %v186
  %197 = vst [vmem:[%s193 + $0x48] sm:$0xff] %v187
  %198 = vst [vmem:[%s193 + $0x60] sm:$0xff] %v188
  %199 = vst [vmem:[%s193 + $0x78] sm:$0xff] %v189
  %200 = vst [vmem:[%s193 + $0x90] sm:$0xff] %v190
  %201 = vst [vmem:[%s193 + $0xa8] sm:$0xff] %v191
  %202 = vst [vmem:[%s193 + $0xc0] sm:$0xff] %v192
  %s203 = scalar_lea.vmem %s0, 1008
  %v204 = vld [vmem:[%s203] sm:$0xff]
  %v205 = vld [vmem:[%s203 + $0x10] sm:$0xff]
  %v206 = vld [vmem:[%s203 + $0x20] sm:$0xff]
  %v207 = vld [vmem:[%s203 + $0x30] sm:$0xff]
  %v208 = vld [vmem:[%s203 + $0x40] sm:$0xff]
  %v209 = vld [vmem:[%s203 + $0x50] sm:$0xff]
  %v210 = vld [vmem:[%s203 + $0x60] sm:$0xff]
  %v211 = vld [vmem:[%s203 + $0x70] sm:$0xff]
  %v212 = vld [vmem:[%s203 + $0x80] sm:$0xff]
  %213 = vst [vmem:[%s193 + $0x8] sm:$0xff] %v204
  %214 = vst [vmem:[%s193 + $0x20] sm:$0xff] %v205
  %215 = vst [vmem:[%s193 + $0x38] sm:$0xff] %v206
  %216 = vst [vmem:[%s193 + $0x50] sm:$0xff] %v207
  %217 = vst [vmem:[%s193 + $0x68] sm:$0xff] %v208
  %218 = vst [vmem:[%s193 + $0x80] sm:$0xff] %v209
  %219 = vst [vmem:[%s193 + $0x98] sm:$0xff] %v210
  %220 = vst [vmem:[%s193 + $0xb0] sm:$0xff] %v211
  %221 = vst [vmem:[%s193 + $0xc8] sm:$0xff] %v212
  %v222 = vld [vmem:[%s183 + $0x1] sm:$0xff]
  %v223 = vld [vmem:[%s183 + $0x11] sm:$0xff]
  %v224 = vld [vmem:[%s183 + $0x21] sm:$0xff]
  %v225 = vld [vmem:[%s183 + $0x31] sm:$0xff]
  %v226 = vld [vmem:[%s183 + $0x41] sm:$0xff]
  %v227 = vld [vmem:[%s183 + $0x51] sm:$0xff]
  %v228 = vld [vmem:[%s183 + $0x61] sm:$0xff]
  %v229 = vld [vmem:[%s183 + $0x71] sm:$0xff]
  %v230 = vld [vmem:[%s183 + $0x81] sm:$0xff]
  %231 = vst [vmem:[%s193 + $0x10] sm:$0xff] %v222
  %232 = vst [vmem:[%s193 + $0x28] sm:$0xff] %v223
  %233 = vst [vmem:[%s193 + $0x40] sm:$0xff] %v224
  %234 = vst [vmem:[%s193 + $0x58] sm:$0xff] %v225
  %235 = vst [vmem:[%s193 + $0x70] sm:$0xff] %v226
  %236 = vst [vmem:[%s193 + $0x88] sm:$0xff] %v227
  %237 = vst [vmem:[%s193 + $0xa0] sm:$0xff] %v228
  %238 = vst [vmem:[%s193 + $0xb8] sm:$0xff] %v229
  %239 = vst [vmem:[%s193 + $0xd0] sm:$0xff] %v230
  %v240 = vld [vmem:[#allocation2] sm:$0xff]
  %v241 = vld [vmem:[#allocation2 + $0x8] sm:$0xff]
  %v242 = vld [vmem:[#allocation2 + $0x10] sm:$0xff]
  %v243 = vld [vmem:[#allocation2 + $0x18] sm:$0xff]
  %v244 = vld [vmem:[#allocation2 + $0x20] sm:$0xff]
  %v245 = vld [vmem:[#allocation2 + $0x28] sm:$0xff]
  %v246 = vld [vmem:[#allocation2 + $0x30] sm:$0xff]
  %v247 = vld [vmem:[#allocation2 + $0x38] sm:$0xff]
  %v248 = vld [vmem:[#allocation2 + $0x40] sm:$0xff]
  %v249 = vld [vmem:[#allocation2 + $0x48] sm:$0xff]
  %v250 = vld [vmem:[#allocation2 + $0x50] sm:$0xff]
  %v251 = vld [vmem:[#allocation2 + $0x58] sm:$0xff]
  %v252 = vld [vmem:[#allocation2 + $0x60] sm:$0xff]
  %v253 = vld [vmem:[#allocation2 + $0x68] sm:$0xff]
  %v254 = vld [vmem:[#allocation2 + $0x70] sm:$0xff]
  %v255 = vld [vmem:[#allocation2 + $0x78] sm:$0xff]
  %v256 = vld [vmem:[#allocation2 + $0x80] sm:$0xff]
  %v257 = vld [vmem:[#allocation2 + $0x88] sm:$0xff]
  %v258 = vld [vmem:[#allocation2 + $0x90] sm:$0xff]
  %v259 = vld [vmem:[#allocation2 + $0x98] sm:$0xff]
  %v260 = vld [vmem:[#allocation2 + $0xa0] sm:$0xff]
  %v261 = vld [vmem:[#allocation2 + $0xa8] sm:$0xff]
  %v262 = vld [vmem:[#allocation2 + $0xb0] sm:$0xff]
  %v263 = vld [vmem:[#allocation2 + $0xb8] sm:$0xff]
  %v264 = vld [vmem:[#allocation2 + $0xd8] sm:$0xff]
  %v265 = vld [vmem:[#allocation2 + $0xe0] sm:$0xff]
  %v266 = vld [vmem:[#allocation2 + $0xe8] sm:$0xff]
  %v267 = vld [vmem:[#allocation2 + $0xf0] sm:$0xff]
  %v268 = vld [vmem:[#allocation2 + $0xf8] sm:$0xff]
  %v269 = vld [vmem:[#allocation2 + $0x100] sm:$0xff]
  %v270 = vld [vmem:[#allocation2 + $0x108] sm:$0xff]
  %v271 = vld [vmem:[#allocation2 + $0x110] sm:$0xff]
  %v272 = vld [vmem:[#allocation2 + $0x118] sm:$0xff]
  %v273 = vld [vmem:[#allocation2 + $0x120] sm:$0xff]
  %v274 = vld [vmem:[#allocation2 + $0x128] sm:$0xff]
  %v275 = vld [vmem:[#allocation2 + $0x130] sm:$0xff]
  %v276 = vld [vmem:[#allocation2 + $0x138] sm:$0xff]
  %v277 = vld [vmem:[#allocation2 + $0x140] sm:$0xff]
  %v278 = vld [vmem:[#allocation2 + $0x148] sm:$0xff]
  %v279 = vld [vmem:[#allocation2 + $0x150] sm:$0xff]
  %v280 = vld [vmem:[#allocation2 + $0x158] sm:$0xff]
  %v281 = vld [vmem:[#allocation2 + $0x160] sm:$0xff]
  %v282 = vld [vmem:[#allocation2 + $0x168] sm:$0xff]
  %v283 = vld [vmem:[#allocation2 + $0x170] sm:$0xff]
  %v284 = vld [vmem:[#allocation2 + $0x178] sm:$0xff]
  %v285 = vld [vmem:[#allocation2 + $0x180] sm:$0xff]
  %v286 = vld [vmem:[#allocation2 + $0x188] sm:$0xff]
  %v287 = vld [vmem:[#allocation2 + $0x190] sm:$0xff]
  %v288 = vld [vmem:[%s1] sm:$0xff]
  %v289 = vld [vmem:[%s1 + $0x8] sm:$0xff]
  %v290 = vld [vmem:[%s1 + $0x10] sm:$0xff]
  %v291 = vld [vmem:[%s1 + $0x18] sm:$0xff]
  %v292 = vld [vmem:[%s1 + $0x20] sm:$0xff]
  %v293 = vld [vmem:[%s1 + $0x28] sm:$0xff]
  %v294 = vld [vmem:[%s1 + $0x30] sm:$0xff]
  %v295 = vld [vmem:[%s1 + $0x38] sm:$0xff]
  %v296 = vld [vmem:[%s1 + $0x40] sm:$0xff]
  %v297 = vld [vmem:[%s1 + $0x48] sm:$0xff]
  %v298 = vld [vmem:[%s1 + $0x50] sm:$0xff]
  %v299 = vld [vmem:[%s1 + $0x58] sm:$0xff]
  %v300 = vld [vmem:[%s1 + $0x60] sm:$0xff]
  %v301 = vld [vmem:[%s1 + $0x68] sm:$0xff]
  %v302 = vld [vmem:[%s1 + $0x70] sm:$0xff]
  %v303 = vld [vmem:[%s1 + $0x78] sm:$0xff]
  %v304 = vld [vmem:[%s1 + $0x80] sm:$0xff]
  %v305 = vld [vmem:[%s1 + $0x88] sm:$0xff]
  %v306 = vld [vmem:[%s1 + $0x90] sm:$0xff]
  %v307 = vld [vmem:[%s1 + $0x98] sm:$0xff]
  %v308 = vld [vmem:[%s1 + $0xa0] sm:$0xff]
  %v309 = vld [vmem:[%s1 + $0xa8] sm:$0xff]
  %v310 = vld [vmem:[%s1 + $0xb0] sm:$0xff]
  %v311 = vld [vmem:[%s1 + $0xb8] sm:$0xff]
  %v312 = vld [vmem:[%s1 + $0xc0] sm:$0xff]
  %v313 = vld [vmem:[%s1 + $0xc8] sm:$0xff]
  %v314 = vld [vmem:[%s1 + $0xd0] sm:$0xff]
  %v315 = vld [vmem:[%s1 + $0xd8] sm:$0xff]
  %v316 = vld [vmem:[%s1 + $0xe0] sm:$0xff]
  %v317 = vld [vmem:[%s1 + $0xe8] sm:$0xff]
  %v318 = vld [vmem:[%s1 + $0xf0] sm:$0xff]
  %v319 = vld [vmem:[%s1 + $0xf8] sm:$0xff]
  %v320 = vld [vmem:[%s1 + $0x100] sm:$0xff]
  %v321 = vld [vmem:[%s1 + $0x108] sm:$0xff]
  %v322 = vld [vmem:[%s1 + $0x110] sm:$0xff]
  %v323 = vld [vmem:[%s1 + $0x118] sm:$0xff]
  %v324 = vld [vmem:[%s1 + $0x120] sm:$0xff]
  %v325 = vld [vmem:[%s1 + $0x128] sm:$0xff]
  %v326 = vld [vmem:[%s1 + $0x130] sm:$0xff]
  %v327 = vld [vmem:[%s1 + $0x138] sm:$0xff]
  %v328 = vld [vmem:[%s1 + $0x140] sm:$0xff]
  %v329 = vld [vmem:[%s1 + $0x148] sm:$0xff]
  %v330 = vld [vmem:[%s1 + $0x150] sm:$0xff]
  %v331 = vld [vmem:[%s1 + $0x158] sm:$0xff]
  %v332 = vld [vmem:[%s1 + $0x160] sm:$0xff]
  %v333 = vld [vmem:[%s1 + $0x168] sm:$0xff]
  %v334 = vld [vmem:[%s1 + $0x170] sm:$0xff]
  %v335 = vld [vmem:[%s1 + $0x178] sm:$0xff]
  %v336 = vld [vmem:[%s79] sm:$0xff]
  %v337 = vld [vmem:[%s79 + $0x8] sm:$0xff]
  %v338 = vld [vmem:[%s79 + $0x10] sm:$0xff]
  %v339 = vld [vmem:[%s79 + $0x18] sm:$0xff]
  %v340 = vld [vmem:[%s79 + $0x20] sm:$0xff]
  %v341 = vld [vmem:[%s79 + $0x28] sm:$0xff]
  %v342 = vld [vmem:[%s79 + $0x30] sm:$0xff]
  %v343 = vld [vmem:[%s79 + $0x38] sm:$0xff]
  %v344 = vld [vmem:[%s79 + $0x40] sm:$0xff]
  %v345 = vld [vmem:[%s79 + $0x48] sm:$0xff]
  %v346 = vld [vmem:[%s79 + $0x50] sm:$0xff]
  %v347 = vld [vmem:[%s79 + $0x58] sm:$0xff]
  %v348 = vld [vmem:[%s79 + $0x60] sm:$0xff]
  %v349 = vld [vmem:[%s79 + $0x68] sm:$0xff]
  %v350 = vld [vmem:[%s79 + $0x70] sm:$0xff]
  %v351 = vld [vmem:[%s79 + $0x78] sm:$0xff]
  %v352 = vld [vmem:[%s79 + $0x80] sm:$0xff]
  %v353 = vld [vmem:[%s79 + $0x88] sm:$0xff]
  %v354 = vld [vmem:[%s79 + $0x90] sm:$0xff]
  %v355 = vld [vmem:[%s79 + $0x98] sm:$0xff]
  %v356 = vld [vmem:[%s79 + $0xa0] sm:$0xff]
  %v357 = vld [vmem:[%s79 + $0xa8] sm:$0xff]
  %v358 = vld [vmem:[%s79 + $0xb0] sm:$0xff]
  %v359 = vld [vmem:[%s79 + $0xb8] sm:$0xff]
  %v360 = vld [vmem:[%s79 + $0xd8] sm:$0xff]
  %v361 = vld [vmem:[%s79 + $0xe0] sm:$0xff]
  %v362 = vld [vmem:[%s79 + $0xe8] sm:$0xff]
  %v363 = vld [vmem:[%s79 + $0xf0] sm:$0xff]
  %v364 = vld [vmem:[%s79 + $0xf8] sm:$0xff]
  %v365 = vld [vmem:[%s79 + $0x100] sm:$0xff]
  %v366 = vld [vmem:[%s79 + $0x108] sm:$0xff]
  %v367 = vld [vmem:[%s79 + $0x110] sm:$0xff]
  %v368 = vld [vmem:[%s79 + $0x118] sm:$0xff]
  %v369 = vld [vmem:[%s79 + $0x120] sm:$0xff]
  %v370 = vld [vmem:[%s79 + $0x128] sm:$0xff]
  %v371 = vld [vmem:[%s79 + $0x130] sm:$0xff]
  %v372 = vld [vmem:[%s79 + $0x138] sm:$0xff]
  %v373 = vld [vmem:[%s79 + $0x140] sm:$0xff]
  %v374 = vld [vmem:[%s79 + $0x148] sm:$0xff]
  %v375 = vld [vmem:[%s79 + $0x150] sm:$0xff]
  %v376 = vld [vmem:[%s79 + $0x158] sm:$0xff]
  %v377 = vld [vmem:[%s79 + $0x160] sm:$0xff]
  %v378 = vld [vmem:[%s79 + $0x168] sm:$0xff]
  %v379 = vld [vmem:[%s79 + $0x170] sm:$0xff]
  %v380 = vld [vmem:[%s79 + $0x178] sm:$0xff]
  %v381 = vld [vmem:[%s79 + $0x180] sm:$0xff]
  %v382 = vld [vmem:[%s79 + $0x188] sm:$0xff]
  %v383 = vld [vmem:[%s79 + $0x190] sm:$0xff]
  %s384 = scalar_lea.vmem %s1, 384
  %v385 = vld [vmem:[%s384] sm:$0xff]
  %v386 = vld [vmem:[%s384 + $0x8] sm:$0xff]
  %v387 = vld [vmem:[%s384 + $0x10] sm:$0xff]
  %v388 = vld [vmem:[%s384 + $0x18] sm:$0xff]
  %v389 = vld [vmem:[%s384 + $0x20] sm:$0xff]
  %v390 = vld [vmem:[%s384 + $0x28] sm:$0xff]
  %v391 = vld [vmem:[%s384 + $0x30] sm:$0xff]
  %v392 = vld [vmem:[%s384 + $0x38] sm:$0xff]
  %v393 = vld [vmem:[%s384 + $0x40] sm:$0xff]
  %v394 = vld [vmem:[%s384 + $0x48] sm:$0xff]
  %v395 = vld [vmem:[%s384 + $0x50] sm:$0xff]
  %v396 = vld [vmem:[%s384 + $0x58] sm:$0xff]
  %v397 = vld [vmem:[%s384 + $0x60] sm:$0xff]
  %v398 = vld [vmem:[%s384 + $0x68] sm:$0xff]
  %v399 = vld [vmem:[%s384 + $0x70] sm:$0xff]
  %v400 = vld [vmem:[%s384 + $0x78] sm:$0xff]
  %v401 = vld [vmem:[%s384 + $0x80] sm:$0xff]
  %v402 = vld [vmem:[%s384 + $0x88] sm:$0xff]
  %v403 = vld [vmem:[%s384 + $0x90] sm:$0xff]
  %v404 = vld [vmem:[%s384 + $0x98] sm:$0xff]
  %v405 = vld [vmem:[%s384 + $0xa0] sm:$0xff]
  %v406 = vld [vmem:[%s384 + $0xa8] sm:$0xff]
  %v407 = vld [vmem:[%s384 + $0xb0] sm:$0xff]
  %v408 = vld [vmem:[%s384 + $0xb8] sm:$0xff]
  %v409 = vld [vmem:[%s384 + $0xc0] sm:$0xff]
  %v410 = vld [vmem:[%s384 + $0xc8] sm:$0xff]
  %v411 = vld [vmem:[%s384 + $0xd0] sm:$0xff]
  %v412 = vld [vmem:[%s384 + $0xd8] sm:$0xff]
  %v413 = vld [vmem:[%s384 + $0xe0] sm:$0xff]
  %v414 = vld [vmem:[%s384 + $0xe8] sm:$0xff]
  %v415 = vld [vmem:[%s384 + $0xf0] sm:$0xff]
  %v416 = vld [vmem:[%s384 + $0xf8] sm:$0xff]
  %v417 = vld [vmem:[%s384 + $0x100] sm:$0xff]
  %v418 = vld [vmem:[%s384 + $0x108] sm:$0xff]
  %v419 = vld [vmem:[%s384 + $0x110] sm:$0xff]
  %v420 = vld [vmem:[%s384 + $0x118] sm:$0xff]
  %v421 = vld [vmem:[%s384 + $0x120] sm:$0xff]
  %v422 = vld [vmem:[%s384 + $0x128] sm:$0xff]
  %v423 = vld [vmem:[%s384 + $0x130] sm:$0xff]
  %v424 = vld [vmem:[%s384 + $0x138] sm:$0xff]
  %v425 = vld [vmem:[%s384 + $0x140] sm:$0xff]
  %v426 = vld [vmem:[%s384 + $0x148] sm:$0xff]
  %v427 = vld [vmem:[%s384 + $0x150] sm:$0xff]
  %v428 = vld [vmem:[%s384 + $0x158] sm:$0xff]
  %v429 = vld [vmem:[%s384 + $0x160] sm:$0xff]
  %v430 = vld [vmem:[%s384 + $0x168] sm:$0xff]
  %v431 = vld [vmem:[%s384 + $0x170] sm:$0xff]
  %v432 = vld [vmem:[%s384 + $0x178] sm:$0xff]
  %433 = vmatprep.subr.mxu0 0.0
  %434 = vmatpush1.msra.mxu0 %v400
  %435 = vmatprep.subr.mxu0 0.0
  %436 = vmatpush1.msra.mxu0 %v399
  %437 = vmatprep.subr.mxu0 0.0
  %438 = vmatpush1.msra.mxu0 %v398
  %439 = vmatprep.subr.mxu0 0.0
  %440 = vmatpush1.msra.mxu0 %v397
  %441 = vmatprep.subr.mxu0 0.0
  %442 = vmatpush1.msra.mxu0 %v396
  %443 = vmatprep.subr.mxu0 0.0
  %444 = vmatpush1.msra.mxu0 %v395
  %445 = vmatprep.subr.mxu0 0.0
  %446 = vmatpush1.msra.mxu0 %v394
  %447 = vmatprep.subr.mxu0 0.0
  %448 = vmatpush1.msra.mxu0 %v393
  %449 = vmatprep.subr.mxu0 0.0
  %450 = vmatpush1.msra.mxu0 %v392
  %451 = vmatprep.subr.mxu0 0.0
  %452 = vmatpush1.msra.mxu0 %v391
  %453 = vmatprep.subr.mxu0 0.0
  %454 = vmatpush1.msra.mxu0 %v390
  %455 = vmatprep.subr.mxu0 0.0
  %456 = vmatpush1.msra.mxu0 %v389
  %457 = vmatprep.subr.mxu0 0.0
  %458 = vmatpush1.msra.mxu0 %v388
  %459 = vmatprep.subr.mxu0 0.0
  %460 = vmatpush1.msra.mxu0 %v387
  %461 = vmatprep.subr.mxu0 0.0
  %462 = vmatpush1.msra.mxu0 %v386
  %463 = vmatprep.subr.mxu0 0.0
  %464 = vmatpush1.msra.mxu0 %v385
  %465 = vmatprep.subr.mxu0 0.0
  %466 = vmatpush2.msra.mxu0 %v416
  %467 = vmatprep.subr.mxu0 0.0
  %468 = vmatpush2.msra.mxu0 %v415
  %469 = vmatprep.subr.mxu0 0.0
  %470 = vmatpush2.msra.mxu0 %v414
  %471 = vmatprep.subr.mxu0 0.0
  %472 = vmatpush2.msra.mxu0 %v413
  %473 = vmatprep.subr.mxu0 0.0
  %474 = vmatpush2.msra.mxu0 %v412
  %475 = vmatprep.subr.mxu0 0.0
  %476 = vmatpush2.msra.mxu0 %v411
  %477 = vmatprep.subr.mxu0 0.0
  %478 = vmatpush2.msra.mxu0 %v410
  %479 = vmatprep.subr.mxu0 0.0
  %480 = vmatpush2.msra.mxu0 %v409
  %481 = vmatprep.subr.mxu0 0.0
  %482 = vmatpush2.msra.mxu0 %v408
  %483 = vmatprep.subr.mxu0 0.0
  %484 = vmatpush2.msra.mxu0 %v407
  %485 = vmatprep.subr.mxu0 0.0
  %486 = vmatpush2.msra.mxu0 %v406
  %487 = vmatprep.subr.mxu0 0.0
  %488 = vmatpush2.msra.mxu0 %v405
  %489 = vmatprep.subr.mxu0 0.0
  %490 = vmatpush2.msra.mxu0 %v404
  %491 = vmatprep.subr.mxu0 0.0
  %492 = vmatpush2.msra.mxu0 %v403
  %493 = vmatprep.subr.mxu0 0.0
  %494 = vmatpush2.msra.mxu0 %v402
  %495 = vmatprep.subr.mxu0 0.0
  %496 = vmatpush2.msra.mxu0 %v401
  %497 = vmatprep.mubr.f32.mxu0 %v337
  %498 = vmatmul.mubr.f32.gmra.mxu0 %v336
  %v499 = vpop.f32.mrf.mxu0
  %v500 = vadd.f32 0.0, %v499
  %v501 = vpop.f32.mrf.mxu0
  %502 = vmatprep.mubr.f32.mxu0 %v340
  %503 = vmatmul.mubr.f32.gmra.mxu0 %v339
  %v504 = vpop.f32.mrf.mxu0
  %v505 = vadd.f32 0.0, %v504
  %v506 = vpop.f32.mrf.mxu0
  %507 = vmatprep.mubr.f32.mxu0 %v343
  %508 = vmatmul.mubr.f32.gmra.mxu0 %v342
  %v509 = vpop.f32.mrf.mxu0
  %v510 = vadd.f32 0.0, %v509
  %v511 = vpop.f32.mrf.mxu0
  %512 = vmatprep.mubr.f32.mxu0 %v346
  %513 = vmatmul.mubr.f32.gmra.mxu0 %v345
  %v514 = vpop.f32.mrf.mxu0
  %v515 = vadd.f32 0.0, %v514
  %v516 = vpop.f32.mrf.mxu0
  %517 = vmatprep.mubr.f32.mxu0 %v349
  %518 = vmatmul.mubr.f32.gmra.mxu0 %v348
  %v519 = vpop.f32.mrf.mxu0
  %v520 = vadd.f32 0.0, %v519
  %v521 = vpop.f32.mrf.mxu0
  %522 = vmatprep.mubr.f32.mxu0 %v352
  %523 = vmatmul.mubr.f32.gmra.mxu0 %v351
  %v524 = vpop.f32.mrf.mxu0
  %v525 = vadd.f32 0.0, %v524
  %v526 = vpop.f32.mrf.mxu0
  %527 = vmatprep.mubr.f32.mxu0 %v355
  %528 = vmatmul.mubr.f32.gmra.mxu0 %v354
  %v529 = vpop.f32.mrf.mxu0
  %v530 = vadd.f32 0.0, %v529
  %v531 = vpop.f32.mrf.mxu0
  %532 = vmatprep.mubr.f32.mxu0 %v358
  %533 = vmatmul.mubr.f32.gmra.mxu0 %v357
  %v534 = vpop.f32.mrf.mxu0
  %v535 = vadd.f32 0.0, %v534
  %v536 = vpop.f32.mrf.mxu0
  %537 = vmatprep.mubr.f32.mxu0 %v361
  %538 = vmatmul.mubr.f32.gmra.mxu0 %v360
  %v539 = vpop.f32.mrf.mxu0
  %v540 = vadd.f32 0.0, %v539
  %v541 = vpop.f32.mrf.mxu0
  %542 = vmatprep.mubr.f32.mxu0 %v364
  %543 = vmatmul.mubr.f32.gmra.mxu0 %v363
  %v544 = vpop.f32.mrf.mxu0
  %v545 = vadd.f32 0.0, %v544
  %v546 = vpop.f32.mrf.mxu0
  %547 = vmatprep.mubr.f32.mxu0 %v367
  %548 = vmatmul.mubr.f32.gmra.mxu0 %v366
  %v549 = vpop.f32.mrf.mxu0
  %v550 = vadd.f32 0.0, %v549
  %v551 = vpop.f32.mrf.mxu0
  %552 = vmatprep.mubr.f32.mxu0 %v370
  %553 = vmatmul.mubr.f32.gmra.mxu0 %v369
  %v554 = vpop.f32.mrf.mxu0
  %v555 = vadd.f32 0.0, %v554
  %v556 = vpop.f32.mrf.mxu0
  %557 = vmatprep.mubr.f32.mxu0 %v373
  %558 = vmatmul.mubr.f32.gmra.mxu0 %v372
  %v559 = vpop.f32.mrf.mxu0
  %v560 = vadd.f32 0.0, %v559
  %v561 = vpop.f32.mrf.mxu0
  %562 = vmatprep.mubr.f32.mxu0 %v376
  %563 = vmatmul.mubr.f32.gmra.mxu0 %v375
  %v564 = vpop.f32.mrf.mxu0
  %v565 = vadd.f32 0.0, %v564
  %v566 = vpop.f32.mrf.mxu0
  %567 = vmatprep.mubr.f32.mxu0 %v379
  %568 = vmatmul.mubr.f32.gmra.mxu0 %v378
  %v569 = vpop.f32.mrf.mxu0
  %v570 = vadd.f32 0.0, %v569
  %v571 = vpop.f32.mrf.mxu0
  %572 = vmatprep.mubr.f32.mxu0 %v382
  %573 = vmatmul.mubr.f32.gmra.mxu0 %v381
  %v574 = vpop.f32.mrf.mxu0
  %v575 = vadd.f32 0.0, %v574
  %v576 = vpop.f32.mrf.mxu0
  %577 = vdwg.mxu0
  %578 = vmatprep.subr.mxu0 0.0
  %579 = vmatpush1.msra.mxu0 %v432
  %580 = vmatprep.subr.mxu0 0.0
  %581 = vmatpush1.msra.mxu0 %v431
  %582 = vmatprep.subr.mxu0 0.0
  %583 = vmatpush1.msra.mxu0 %v430
  %584 = vmatprep.subr.mxu0 0.0
  %585 = vmatpush1.msra.mxu0 %v429
  %586 = vmatprep.subr.mxu0 0.0
  %587 = vmatpush1.msra.mxu0 %v428
  %588 = vmatprep.subr.mxu0 0.0
  %589 = vmatpush1.msra.mxu0 %v427
  %590 = vmatprep.subr.mxu0 0.0
  %591 = vmatpush1.msra.mxu0 %v426
  %592 = vmatprep.subr.mxu0 0.0
  %593 = vmatpush1.msra.mxu0 %v425
  %594 = vmatprep.subr.mxu0 0.0
  %595 = vmatpush1.msra.mxu0 %v424
  %596 = vmatprep.subr.mxu0 0.0
  %597 = vmatpush1.msra.mxu0 %v423
  %598 = vmatprep.subr.mxu0 0.0
  %599 = vmatpush1.msra.mxu0 %v422
  %600 = vmatprep.subr.mxu0 0.0
  %601 = vmatpush1.msra.mxu0 %v421
  %602 = vmatprep.subr.mxu0 0.0
  %603 = vmatpush1.msra.mxu0 %v420
  %604 = vmatprep.subr.mxu0 0.0
  %605 = vmatpush1.msra.mxu0 %v419
  %606 = vmatprep.subr.mxu0 0.0
  %607 = vmatpush1.msra.mxu0 %v418
  %608 = vmatprep.subr.mxu0 0.0
  %609 = vmatpush1.msra.mxu0 %v417
  %610 = vmatprep.subr.mxu0 0.0
  %611 = vmatpush2.msra.mxu0 0.0
  %612 = vmatprep.subr.mxu0 0.0
  %613 = vmatpush2.msra.mxu0 0.0
  %614 = vmatprep.subr.mxu0 0.0
  %615 = vmatpush2.msra.mxu0 0.0
  %616 = vmatprep.subr.mxu0 0.0
  %617 = vmatpush2.msra.mxu0 0.0
  %618 = vmatprep.subr.mxu0 0.0
  %619 = vmatpush2.msra.mxu0 0.0
  %620 = vmatprep.subr.mxu0 0.0
  %621 = vmatpush2.msra.mxu0 0.0
  %622 = vmatprep.subr.mxu0 0.0
  %623 = vmatpush2.msra.mxu0 0.0
  %624 = vmatprep.subr.mxu0 0.0
  %625 = vmatpush2.msra.mxu0 0.0
  %626 = vmatprep.subr.mxu0 0.0
  %627 = vmatpush2.msra.mxu0 0.0
  %628 = vmatprep.subr.mxu0 0.0
  %629 = vmatpush2.msra.mxu0 0.0
  %630 = vmatprep.subr.mxu0 0.0
  %631 = vmatpush2.msra.mxu0 0.0
  %632 = vmatprep.subr.mxu0 0.0
  %633 = vmatpush2.msra.mxu0 0.0
  %634 = vmatprep.subr.mxu0 0.0
  %635 = vmatpush2.msra.mxu0 0.0
  %636 = vmatprep.subr.mxu0 0.0
  %637 = vmatpush2.msra.mxu0 0.0
  %638 = vmatprep.subr.mxu0 0.0
  %639 = vmatpush2.msra.mxu0 0.0
  %640 = vmatprep.subr.mxu0 0.0
  %641 = vmatpush2.msra.mxu0 0.0
  %642 = vmatprep.mubr.f32.mxu0 0.0
  %643 = vmatmul.mubr.f32.gmra.mxu0 %v338
  %v644 = vpop.f32.mrf.mxu0
  %v645 = vadd.f32 %v500, %v644
  %v646 = vpop.f32.mrf.mxu0
  %647 = vmatprep.mubr.f32.mxu0 0.0
  %648 = vmatmul.mubr.f32.gmra.mxu0 %v341
  %v649 = vpop.f32.mrf.mxu0
  %v650 = vadd.f32 %v505, %v649
  %v651 = vpop.f32.mrf.mxu0
  %652 = vmatprep.mubr.f32.mxu0 0.0
  %653 = vmatmul.mubr.f32.gmra.mxu0 %v344
  %v654 = vpop.f32.mrf.mxu0
  %v655 = vadd.f32 %v510, %v654
  %v656 = vpop.f32.mrf.mxu0
  %657 = vmatprep.mubr.f32.mxu0 0.0
  %658 = vmatmul.mubr.f32.gmra.mxu0 %v347
  %v659 = vpop.f32.mrf.mxu0
  %v660 = vadd.f32 %v515, %v659
  %v661 = vpop.f32.mrf.mxu0
  %662 = vmatprep.mubr.f32.mxu0 0.0
  %663 = vmatmul.mubr.f32.gmra.mxu0 %v350
  %v664 = vpop.f32.mrf.mxu0
  %v665 = vadd.f32 %v520, %v664
  %v666 = vpop.f32.mrf.mxu0
  %667 = vmatprep.mubr.f32.mxu0 0.0
  %668 = vmatmul.mubr.f32.gmra.mxu0 %v353
  %v669 = vpop.f32.mrf.mxu0
  %v670 = vadd.f32 %v525, %v669
  %v671 = vpop.f32.mrf.mxu0
  %672 = vmatprep.mubr.f32.mxu0 0.0
  %673 = vmatmul.mubr.f32.gmra.mxu0 %v356
  %v674 = vpop.f32.mrf.mxu0
  %v675 = vadd.f32 %v530, %v674
  %v676 = vpop.f32.mrf.mxu0
  %677 = vmatprep.mubr.f32.mxu0 0.0
  %678 = vmatmul.mubr.f32.gmra.mxu0 %v359
  %v679 = vpop.f32.mrf.mxu0
  %v680 = vadd.f32 %v535, %v679
  %v681 = vpop.f32.mrf.mxu0
  %682 = vmatprep.mubr.f32.mxu0 0.0
  %683 = vmatmul.mubr.f32.gmra.mxu0 %v362
  %v684 = vpop.f32.mrf.mxu0
  %v685 = vadd.f32 %v540, %v684
  %v686 = vpop.f32.mrf.mxu0
  %687 = vmatprep.mubr.f32.mxu0 0.0
  %688 = vmatmul.mubr.f32.gmra.mxu0 %v365
  %v689 = vpop.f32.mrf.mxu0
  %v690 = vadd.f32 %v545, %v689
  %v691 = vpop.f32.mrf.mxu0
  %692 = vmatprep.mubr.f32.mxu0 0.0
  %693 = vmatmul.mubr.f32.gmra.mxu0 %v368
  %v694 = vpop.f32.mrf.mxu0
  %v695 = vadd.f32 %v550, %v694
  %v696 = vpop.f32.mrf.mxu0
  %697 = vmatprep.mubr.f32.mxu0 0.0
  %698 = vmatmul.mubr.f32.gmra.mxu0 %v371
  %v699 = vpop.f32.mrf.mxu0
  %v700 = vadd.f32 %v555, %v699
  %v701 = vpop.f32.mrf.mxu0
  %702 = vmatprep.mubr.f32.mxu0 0.0
  %703 = vmatmul.mubr.f32.gmra.mxu0 %v374
  %v704 = vpop.f32.mrf.mxu0
  %v705 = vadd.f32 %v560, %v704
  %v706 = vpop.f32.mrf.mxu0
  %707 = vmatprep.mubr.f32.mxu0 0.0
  %708 = vmatmul.mubr.f32.gmra.mxu0 %v377
  %v709 = vpop.f32.mrf.mxu0
  %v710 = vadd.f32 %v565, %v709
  %v711 = vpop.f32.mrf.mxu0
  %712 = vmatprep.mubr.f32.mxu0 0.0
  %713 = vmatmul.mubr.f32.gmra.mxu0 %v380
  %v714 = vpop.f32.mrf.mxu0
  %v715 = vadd.f32 %v570, %v714
  %v716 = vpop.f32.mrf.mxu0
  %717 = vmatprep.mubr.f32.mxu0 0.0
  %718 = vmatmul.mubr.f32.gmra.mxu0 %v383
  %v719 = vpop.f32.mrf.mxu0
  %v720 = vadd.f32 %v575, %v719
  %v721 = vpop.f32.mrf.mxu0
  %722 = vdwg.mxu0
  %723 = vmatprep.subr.mxu0 0.0
  %724 = vmatpush1.msra.mxu0 %v303
  %725 = vmatprep.subr.mxu0 0.0
  %726 = vmatpush1.msra.mxu0 %v302
  %727 = vmatprep.subr.mxu0 0.0
  %728 = vmatpush1.msra.mxu0 %v301
  %729 = vmatprep.subr.mxu0 0.0
  %730 = vmatpush1.msra.mxu0 %v300
  %731 = vmatprep.subr.mxu0 0.0
  %732 = vmatpush1.msra.mxu0 %v299
  %733 = vmatprep.subr.mxu0 0.0
  %734 = vmatpush1.msra.mxu0 %v298
  %735 = vmatprep.subr.mxu0 0.0
  %736 = vmatpush1.msra.mxu0 %v297
  %737 = vmatprep.subr.mxu0 0.0
  %738 = vmatpush1.msra.mxu0 %v296
  %739 = vmatprep.subr.mxu0 0.0
  %740 = vmatpush1.msra.mxu0 %v295
  %741 = vmatprep.subr.mxu0 0.0
  %742 = vmatpush1.msra.mxu0 %v294
  %743 = vmatprep.subr.mxu0 0.0
  %744 = vmatpush1.msra.mxu0 %v293
  %745 = vmatprep.subr.mxu0 0.0
  %746 = vmatpush1.msra.mxu0 %v292
  %747 = vmatprep.subr.mxu0 0.0
  %748 = vmatpush1.msra.mxu0 %v291
  %749 = vmatprep.subr.mxu0 0.0
  %750 = vmatpush1.msra.mxu0 %v290
  %751 = vmatprep.subr.mxu0 0.0
  %752 = vmatpush1.msra.mxu0 %v289
  %753 = vmatprep.subr.mxu0 0.0
  %754 = vmatpush1.msra.mxu0 %v288
  %755 = vmatprep.subr.mxu0 0.0
  %756 = vmatpush2.msra.mxu0 %v319
  %757 = vmatprep.subr.mxu0 0.0
  %758 = vmatpush2.msra.mxu0 %v318
  %759 = vmatprep.subr.mxu0 0.0
  %760 = vmatpush2.msra.mxu0 %v317
  %761 = vmatprep.subr.mxu0 0.0
  %762 = vmatpush2.msra.mxu0 %v316
  %763 = vmatprep.subr.mxu0 0.0
  %764 = vmatpush2.msra.mxu0 %v315
  %765 = vmatprep.subr.mxu0 0.0
  %766 = vmatpush2.msra.mxu0 %v314
  %767 = vmatprep.subr.mxu0 0.0
  %768 = vmatpush2.msra.mxu0 %v313
  %769 = vmatprep.subr.mxu0 0.0
  %770 = vmatpush2.msra.mxu0 %v312
  %771 = vmatprep.subr.mxu0 0.0
  %772 = vmatpush2.msra.mxu0 %v311
  %773 = vmatprep.subr.mxu0 0.0
  %774 = vmatpush2.msra.mxu0 %v310
  %775 = vmatprep.subr.mxu0 0.0
  %776 = vmatpush2.msra.mxu0 %v309
  %777 = vmatprep.subr.mxu0 0.0
  %778 = vmatpush2.msra.mxu0 %v308
  %779 = vmatprep.subr.mxu0 0.0
  %780 = vmatpush2.msra.mxu0 %v307
  %781 = vmatprep.subr.mxu0 0.0
  %782 = vmatpush2.msra.mxu0 %v306
  %783 = vmatprep.subr.mxu0 0.0
  %784 = vmatpush2.msra.mxu0 %v305
  %785 = vmatprep.subr.mxu0 0.0
  %786 = vmatpush2.msra.mxu0 %v304
  %787 = vmatprep.mubr.f32.mxu0 %v241
  %788 = vmatmul.mubr.f32.gmra.mxu0 %v240
  %v789 = vpop.f32.mrf.mxu0
  %v790 = vadd.f32 %v645, %v789
  %v791 = vpop.f32.mrf.mxu0
  %792 = vmatprep.mubr.f32.mxu0 %v244
  %793 = vmatmul.mubr.f32.gmra.mxu0 %v243
  %v794 = vpop.f32.mrf.mxu0
  %v795 = vadd.f32 %v650, %v794
  %v796 = vpop.f32.mrf.mxu0
  %797 = vmatprep.mubr.f32.mxu0 %v247
  %798 = vmatmul.mubr.f32.gmra.mxu0 %v246
  %v799 = vpop.f32.mrf.mxu0
  %v800 = vadd.f32 %v655, %v799
  %v801 = vpop.f32.mrf.mxu0
  %802 = vmatprep.mubr.f32.mxu0 %v250
  %803 = vmatmul.mubr.f32.gmra.mxu0 %v249
  %v804 = vpop.f32.mrf.mxu0
  %v805 = vadd.f32 %v660, %v804
  %v806 = vpop.f32.mrf.mxu0
  %807 = vmatprep.mubr.f32.mxu0 %v253
  %808 = vmatmul.mubr.f32.gmra.mxu0 %v252
  %v809 = vpop.f32.mrf.mxu0
  %v810 = vadd.f32 %v665, %v809
  %v811 = vpop.f32.mrf.mxu0
  %812 = vmatprep.mubr.f32.mxu0 %v256
  %813 = vmatmul.mubr.f32.gmra.mxu0 %v255
  %v814 = vpop.f32.mrf.mxu0
  %v815 = vadd.f32 %v670, %v814
  %v816 = vpop.f32.mrf.mxu0
  %817 = vmatprep.mubr.f32.mxu0 %v259
  %818 = vmatmul.mubr.f32.gmra.mxu0 %v258
  %v819 = vpop.f32.mrf.mxu0
  %v820 = vadd.f32 %v675, %v819
  %v821 = vpop.f32.mrf.mxu0
  %822 = vmatprep.mubr.f32.mxu0 %v262
  %823 = vmatmul.mubr.f32.gmra.mxu0 %v261
  %v824 = vpop.f32.mrf.mxu0
  %v825 = vadd.f32 %v680, %v824
  %v826 = vpop.f32.mrf.mxu0
  %827 = vmatprep.mubr.f32.mxu0 %v265
  %828 = vmatmul.mubr.f32.gmra.mxu0 %v264
  %v829 = vpop.f32.mrf.mxu0
  %v830 = vadd.f32 %v685, %v829
  %v831 = vpop.f32.mrf.mxu0
  %832 = vmatprep.mubr.f32.mxu0 %v268
  %833 = vmatmul.mubr.f32.gmra.mxu0 %v267
  %v834 = vpop.f32.mrf.mxu0
  %v835 = vadd.f32 %v690, %v834
  %v836 = vpop.f32.mrf.mxu0
  %837 = vmatprep.mubr.f32.mxu0 %v271
  %838 = vmatmul.mubr.f32.gmra.mxu0 %v270
  %v839 = vpop.f32.mrf.mxu0
  %v840 = vadd.f32 %v695, %v839
  %v841 = vpop.f32.mrf.mxu0
  %842 = vmatprep.mubr.f32.mxu0 %v274
  %843 = vmatmul.mubr.f32.gmra.mxu0 %v273
  %v844 = vpop.f32.mrf.mxu0
  %v845 = vadd.f32 %v700, %v844
  %v846 = vpop.f32.mrf.mxu0
  %847 = vmatprep.mubr.f32.mxu0 %v277
  %848 = vmatmul.mubr.f32.gmra.mxu0 %v276
  %v849 = vpop.f32.mrf.mxu0
  %v850 = vadd.f32 %v705, %v849
  %v851 = vpop.f32.mrf.mxu0
  %852 = vmatprep.mubr.f32.mxu0 %v280
  %853 = vmatmul.mubr.f32.gmra.mxu0 %v279
  %v854 = vpop.f32.mrf.mxu0
  %v855 = vadd.f32 %v710, %v854
  %v856 = vpop.f32.mrf.mxu0
  %857 = vmatprep.mubr.f32.mxu0 %v283
  %858 = vmatmul.mubr.f32.gmra.mxu0 %v282
  %v859 = vpop.f32.mrf.mxu0
  %v860 = vadd.f32 %v715, %v859
  %v861 = vpop.f32.mrf.mxu0
  %862 = vmatprep.mubr.f32.mxu0 %v286
  %863 = vmatmul.mubr.f32.gmra.mxu0 %v285
  %v864 = vpop.f32.mrf.mxu0
  %v865 = vadd.f32 %v720, %v864
  %v866 = vpop.f32.mrf.mxu0
  %867 = vdwg.mxu0
  %868 = vmatprep.subr.mxu0 0.0
  %869 = vmatpush1.msra.mxu0 %v335
  %870 = vmatprep.subr.mxu0 0.0
  %871 = vmatpush1.msra.mxu0 %v334
  %872 = vmatprep.subr.mxu0 0.0
  %873 = vmatpush1.msra.mxu0 %v333
  %874 = vmatprep.subr.mxu0 0.0
  %875 = vmatpush1.msra.mxu0 %v332
  %876 = vmatprep.subr.mxu0 0.0
  %877 = vmatpush1.msra.mxu0 %v331
  %878 = vmatprep.subr.mxu0 0.0
  %879 = vmatpush1.msra.mxu0 %v330
  %880 = vmatprep.subr.mxu0 0.0
  %881 = vmatpush1.msra.mxu0 %v329
  %882 = vmatprep.subr.mxu0 0.0
  %883 = vmatpush1.msra.mxu0 %v328
  %884 = vmatprep.subr.mxu0 0.0
  %885 = vmatpush1.msra.mxu0 %v327
  %886 = vmatprep.subr.mxu0 0.0
  %887 = vmatpush1.msra.mxu0 %v326
  %888 = vmatprep.subr.mxu0 0.0
  %889 = vmatpush1.msra.mxu0 %v325
  %890 = vmatprep.subr.mxu0 0.0
  %891 = vmatpush1.msra.mxu0 %v324
  %892 = vmatprep.subr.mxu0 0.0
  %893 = vmatpush1.msra.mxu0 %v323
  %894 = vmatprep.subr.mxu0 0.0
  %895 = vmatpush1.msra.mxu0 %v322
  %896 = vmatprep.subr.mxu0 0.0
  %897 = vmatpush1.msra.mxu0 %v321
  %898 = vmatprep.subr.mxu0 0.0
  %899 = vmatpush1.msra.mxu0 %v320
  %900 = vmatprep.subr.mxu0 0.0
  %901 = vmatpush2.msra.mxu0 0.0
  %902 = vmatprep.subr.mxu0 0.0
  %903 = vmatpush2.msra.mxu0 0.0
  %904 = vmatprep.subr.mxu0 0.0
  %905 = vmatpush2.msra.mxu0 0.0
  %906 = vmatprep.subr.mxu0 0.0
  %907 = vmatpush2.msra.mxu0 0.0
  %908 = vmatprep.subr.mxu0 0.0
  %909 = vmatpush2.msra.mxu0 0.0
  %910 = vmatprep.subr.mxu0 0.0
  %911 = vmatpush2.msra.mxu0 0.0
  %912 = vmatprep.subr.mxu0 0.0
  %913 = vmatpush2.msra.mxu0 0.0
  %914 = vmatprep.subr.mxu0 0.0
  %915 = vmatpush2.msra.mxu0 0.0
  %916 = vmatprep.subr.mxu0 0.0
  %917 = vmatpush2.msra.mxu0 0.0
  %918 = vmatprep.subr.mxu0 0.0
  %919 = vmatpush2.msra.mxu0 0.0
  %920 = vmatprep.subr.mxu0 0.0
  %921 = vmatpush2.msra.mxu0 0.0
  %922 = vmatprep.subr.mxu0 0.0
  %923 = vmatpush2.msra.mxu0 0.0
  %924 = vmatprep.subr.mxu0 0.0
  %925 = vmatpush2.msra.mxu0 0.0
  %926 = vmatprep.subr.mxu0 0.0
  %927 = vmatpush2.msra.mxu0 0.0
  %928 = vmatprep.subr.mxu0 0.0
  %929 = vmatpush2.msra.mxu0 0.0
  %930 = vmatprep.subr.mxu0 0.0
  %931 = vmatpush2.msra.mxu0 0.0
  %932 = vmatprep.mubr.f32.mxu0 0.0
  %933 = vmatmul.mubr.f32.gmra.mxu0 %v242
  %v934 = vpop.f32.mrf.mxu0
  %v935 = vadd.f32 %v790, %v934
  %v936 = vpop.f32.mrf.mxu0
  %937 = vmatprep.mubr.f32.mxu0 0.0
  %938 = vmatmul.mubr.f32.gmra.mxu0 %v245
  %v939 = vpop.f32.mrf.mxu0
  %v940 = vadd.f32 %v795, %v939
  %v941 = vpop.f32.mrf.mxu0
  %942 = vmatprep.mubr.f32.mxu0 0.0
  %943 = vmatmul.mubr.f32.gmra.mxu0 %v248
  %v944 = vpop.f32.mrf.mxu0
  %v945 = vadd.f32 %v800, %v944
  %v946 = vpop.f32.mrf.mxu0
  %947 = vmatprep.mubr.f32.mxu0 0.0
  %948 = vmatmul.mubr.f32.gmra.mxu0 %v251
  %v949 = vpop.f32.mrf.mxu0
  %v950 = vadd.f32 %v805, %v949
  %v951 = vpop.f32.mrf.mxu0
  %952 = vmatprep.mubr.f32.mxu0 0.0
  %953 = vmatmul.mubr.f32.gmra.mxu0 %v254
  %v954 = vpop.f32.mrf.mxu0
  %v955 = vadd.f32 %v810, %v954
  %v956 = vpop.f32.mrf.mxu0
  %957 = vmatprep.mubr.f32.mxu0 0.0
  %958 = vmatmul.mubr.f32.gmra.mxu0 %v257
  %v959 = vpop.f32.mrf.mxu0
  %v960 = vadd.f32 %v815, %v959
  %v961 = vpop.f32.mrf.mxu0
  %962 = vmatprep.mubr.f32.mxu0 0.0
  %963 = vmatmul.mubr.f32.gmra.mxu0 %v260
  %v964 = vpop.f32.mrf.mxu0
  %v965 = vadd.f32 %v820, %v964
  %v966 = vpop.f32.mrf.mxu0
  %967 = vmatprep.mubr.f32.mxu0 0.0
  %968 = vmatmul.mubr.f32.gmra.mxu0 %v263
  %v969 = vpop.f32.mrf.mxu0
  %v970 = vadd.f32 %v825, %v969
  %v971 = vpop.f32.mrf.mxu0
  %972 = vmatprep.mubr.f32.mxu0 0.0
  %973 = vmatmul.mubr.f32.gmra.mxu0 %v266
  %v974 = vpop.f32.mrf.mxu0
  %v975 = vadd.f32 %v830, %v974
  %v976 = vpop.f32.mrf.mxu0
  %977 = vmatprep.mubr.f32.mxu0 0.0
  %978 = vmatmul.mubr.f32.gmra.mxu0 %v269
  %v979 = vpop.f32.mrf.mxu0
  %v980 = vadd.f32 %v835, %v979
  %v981 = vpop.f32.mrf.mxu0
  %982 = vmatprep.mubr.f32.mxu0 0.0
  %983 = vmatmul.mubr.f32.gmra.mxu0 %v272
  %v984 = vpop.f32.mrf.mxu0
  %v985 = vadd.f32 %v840, %v984
  %v986 = vpop.f32.mrf.mxu0
  %987 = vmatprep.mubr.f32.mxu0 0.0
  %988 = vmatmul.mubr.f32.gmra.mxu0 %v275
  %v989 = vpop.f32.mrf.mxu0
  %v990 = vadd.f32 %v845, %v989
  %v991 = vpop.f32.mrf.mxu0
  %992 = vmatprep.mubr.f32.mxu0 0.0
  %993 = vmatmul.mubr.f32.gmra.mxu0 %v278
  %v994 = vpop.f32.mrf.mxu0
  %v995 = vadd.f32 %v850, %v994
  %v996 = vpop.f32.mrf.mxu0
  %997 = vmatprep.mubr.f32.mxu0 0.0
  %998 = vmatmul.mubr.f32.gmra.mxu0 %v281
  %v999 = vpop.f32.mrf.mxu0
  %v1000 = vadd.f32 %v855, %v999
  %v1001 = vpop.f32.mrf.mxu0
  %1002 = vmatprep.mubr.f32.mxu0 0.0
  %1003 = vmatmul.mubr.f32.gmra.mxu0 %v284
  %v1004 = vpop.f32.mrf.mxu0
  %v1005 = vadd.f32 %v860, %v1004
  %v1006 = vpop.f32.mrf.mxu0
  %1007 = vmatprep.mubr.f32.mxu0 0.0
  %1008 = vmatmul.mubr.f32.gmra.mxu0 %v287
  %v1009 = vpop.f32.mrf.mxu0
  %v1010 = vadd.f32 %v865, %v1009
  %v1011 = vpop.f32.mrf.mxu0
  %1012 = vdwg.mxu0
  %s1013 = scalar_lea.vmem [#allocation2], 24
  %v1014 = vld [vmem:[%s1013] sm:$0xff]
  %v1015 = vld [vmem:[%s1013 + $0x8] sm:$0xff]
  %v1016 = vld [vmem:[%s1013 + $0x10] sm:$0xff]
  %v1017 = vld [vmem:[%s1013 + $0x18] sm:$0xff]
  %v1018 = vld [vmem:[%s1013 + $0x20] sm:$0xff]
  %v1019 = vld [vmem:[%s1013 + $0x28] sm:$0xff]
  %v1020 = vld [vmem:[%s1013 + $0x30] sm:$0xff]
  %v1021 = vld [vmem:[%s1013 + $0x38] sm:$0xff]
  %v1022 = vld [vmem:[%s1013 + $0x40] sm:$0xff]
  %v1023 = vld [vmem:[%s1013 + $0x48] sm:$0xff]
  %v1024 = vld [vmem:[%s1013 + $0x50] sm:$0xff]
  %v1025 = vld [vmem:[%s1013 + $0x58] sm:$0xff]
  %v1026 = vld [vmem:[%s1013 + $0x60] sm:$0xff]
  %v1027 = vld [vmem:[%s1013 + $0x68] sm:$0xff]
  %v1028 = vld [vmem:[%s1013 + $0x70] sm:$0xff]
  %v1029 = vld [vmem:[%s1013 + $0x78] sm:$0xff]
  %v1030 = vld [vmem:[%s1013 + $0x80] sm:$0xff]
  %v1031 = vld [vmem:[%s1013 + $0x88] sm:$0xff]
  %v1032 = vld [vmem:[%s1013 + $0x90] sm:$0xff]
  %v1033 = vld [vmem:[%s1013 + $0x98] sm:$0xff]
  %v1034 = vld [vmem:[%s1013 + $0xa0] sm:$0xff]
  %v1035 = vld [vmem:[%s1013 + $0xa8] sm:$0xff]
  %v1036 = vld [vmem:[%s1013 + $0xb0] sm:$0xff]
  %v1037 = vld [vmem:[%s1013 + $0xb8] sm:$0xff]
  %v1038 = vld [vmem:[%s1013 + $0xd8] sm:$0xff]
  %v1039 = vld [vmem:[%s1013 + $0xe0] sm:$0xff]
  %v1040 = vld [vmem:[%s1013 + $0xe8] sm:$0xff]
  %v1041 = vld [vmem:[%s1013 + $0xf0] sm:$0xff]
  %v1042 = vld [vmem:[%s1013 + $0xf8] sm:$0xff]
  %v1043 = vld [vmem:[%s1013 + $0x100] sm:$0xff]
  %v1044 = vld [vmem:[%s1013 + $0x108] sm:$0xff]
  %v1045 = vld [vmem:[%s1013 + $0x110] sm:$0xff]
  %v1046 = vld [vmem:[%s1013 + $0x118] sm:$0xff]
  %v1047 = vld [vmem:[%s1013 + $0x120] sm:$0xff]
  %v1048 = vld [vmem:[%s1013 + $0x128] sm:$0xff]
  %v1049 = vld [vmem:[%s1013 + $0x130] sm:$0xff]
  %v1050 = vld [vmem:[%s1013 + $0x138] sm:$0xff]
  %v1051 = vld [vmem:[%s1013 + $0x140] sm:$0xff]
  %v1052 = vld [vmem:[%s1013 + $0x148] sm:$0xff]
  %v1053 = vld [vmem:[%s1013 + $0x150] sm:$0xff]
  %v1054 = vld [vmem:[%s1013 + $0x158] sm:$0xff]
  %v1055 = vld [vmem:[%s1013 + $0x160] sm:$0xff]
  %v1056 = vld [vmem:[%s1013 + $0x168] sm:$0xff]
  %v1057 = vld [vmem:[%s1013 + $0x170] sm:$0xff]
  %v1058 = vld [vmem:[%s1013 + $0x178] sm:$0xff]
  %v1059 = vld [vmem:[%s1013 + $0x180] sm:$0xff]
  %v1060 = vld [vmem:[%s1013 + $0x188] sm:$0xff]
  %v1061 = vld [vmem:[%s1013 + $0x190] sm:$0xff]
  %s1062 = scalar_lea.vmem %s1, 768
  %v1063 = vld [vmem:[%s1062] sm:$0xff]
  %v1064 = vld [vmem:[%s1062 + $0x8] sm:$0xff]
  %v1065 = vld [vmem:[%s1062 + $0x10] sm:$0xff]
  %v1066 = vld [vmem:[%s1062 + $0x18] sm:$0xff]
  %v1067 = vld [vmem:[%s1062 + $0x20] sm:$0xff]
  %v1068 = vld [vmem:[%s1062 + $0x28] sm:$0xff]
  %v1069 = vld [vmem:[%s1062 + $0x30] sm:$0xff]
  %v1070 = vld [vmem:[%s1062 + $0x38] sm:$0xff]
  %v1071 = vld [vmem:[%s1062 + $0x40] sm:$0xff]
  %v1072 = vld [vmem:[%s1062 + $0x48] sm:$0xff]
  %v1073 = vld [vmem:[%s1062 + $0x50] sm:$0xff]
  %v1074 = vld [vmem:[%s1062 + $0x58] sm:$0xff]
  %v1075 = vld [vmem:[%s1062 + $0x60] sm:$0xff]
  %v1076 = vld [vmem:[%s1062 + $0x68] sm:$0xff]
  %v1077 = vld [vmem:[%s1062 + $0x70] sm:$0xff]
  %v1078 = vld [vmem:[%s1062 + $0x78] sm:$0xff]
  %v1079 = vld [vmem:[%s1062 + $0x80] sm:$0xff]
  %v1080 = vld [vmem:[%s1062 + $0x88] sm:$0xff]
  %v1081 = vld [vmem:[%s1062 + $0x90] sm:$0xff]
  %v1082 = vld [vmem:[%s1062 + $0x98] sm:$0xff]
  %v1083 = vld [vmem:[%s1062 + $0xa0] sm:$0xff]
  %v1084 = vld [vmem:[%s1062 + $0xa8] sm:$0xff]
  %v1085 = vld [vmem:[%s1062 + $0xb0] sm:$0xff]
  %v1086 = vld [vmem:[%s1062 + $0xb8] sm:$0xff]
  %v1087 = vld [vmem:[%s1062 + $0xc0] sm:$0xff]
  %v1088 = vld [vmem:[%s1062 + $0xc8] sm:$0xff]
  %v1089 = vld [vmem:[%s1062 + $0xd0] sm:$0xff]
  %v1090 = vld [vmem:[%s1062 + $0xd8] sm:$0xff]
  %v1091 = vld [vmem:[%s1062 + $0xe0] sm:$0xff]
  %v1092 = vld [vmem:[%s1062 + $0xe8] sm:$0xff]
  %v1093 = vld [vmem:[%s1062 + $0xf0] sm:$0xff]
  %v1094 = vld [vmem:[%s1062 + $0xf8] sm:$0xff]
  %v1095 = vld [vmem:[%s1062 + $0x100] sm:$0xff]
  %v1096 = vld [vmem:[%s1062 + $0x108] sm:$0xff]
  %v1097 = vld [vmem:[%s1062 + $0x110] sm:$0xff]
  %v1098 = vld [vmem:[%s1062 + $0x118] sm:$0xff]
  %v1099 = vld [vmem:[%s1062 + $0x120] sm:$0xff]
  %v1100 = vld [vmem:[%s1062 + $0x128] sm:$0xff]
  %v1101 = vld [vmem:[%s1062 + $0x130] sm:$0xff]
  %v1102 = vld [vmem:[%s1062 + $0x138] sm:$0xff]
  %v1103 = vld [vmem:[%s1062 + $0x140] sm:$0xff]
  %v1104 = vld [vmem:[%s1062 + $0x148] sm:$0xff]
  %v1105 = vld [vmem:[%s1062 + $0x150] sm:$0xff]
  %v1106 = vld [vmem:[%s1062 + $0x158] sm:$0xff]
  %v1107 = vld [vmem:[%s1062 + $0x160] sm:$0xff]
  %v1108 = vld [vmem:[%s1062 + $0x168] sm:$0xff]
  %v1109 = vld [vmem:[%s1062 + $0x170] sm:$0xff]
  %v1110 = vld [vmem:[%s1062 + $0x178] sm:$0xff]
  %1111 = vmatprep.subr.mxu0 0.0
  %1112 = vmatpush1.msra.mxu0 %v1078
  %1113 = vmatprep.subr.mxu0 0.0
  %1114 = vmatpush1.msra.mxu0 %v1077
  %1115 = vmatprep.subr.mxu0 0.0
  %1116 = vmatpush1.msra.mxu0 %v1076
  %1117 = vmatprep.subr.mxu0 0.0
  %1118 = vmatpush1.msra.mxu0 %v1075
  %1119 = vmatprep.subr.mxu0 0.0
  %1120 = vmatpush1.msra.mxu0 %v1074
  %1121 = vmatprep.subr.mxu0 0.0
  %1122 = vmatpush1.msra.mxu0 %v1073
  %1123 = vmatprep.subr.mxu0 0.0
  %1124 = vmatpush1.msra.mxu0 %v1072
  %1125 = vmatprep.subr.mxu0 0.0
  %1126 = vmatpush1.msra.mxu0 %v1071
  %1127 = vmatprep.subr.mxu0 0.0
  %1128 = vmatpush1.msra.mxu0 %v1070
  %1129 = vmatprep.subr.mxu0 0.0
  %1130 = vmatpush1.msra.mxu0 %v1069
  %1131 = vmatprep.subr.mxu0 0.0
  %1132 = vmatpush1.msra.mxu0 %v1068
  %1133 = vmatprep.subr.mxu0 0.0
  %1134 = vmatpush1.msra.mxu0 %v1067
  %1135 = vmatprep.subr.mxu0 0.0
  %1136 = vmatpush1.msra.mxu0 %v1066
  %1137 = vmatprep.subr.mxu0 0.0
  %1138 = vmatpush1.msra.mxu0 %v1065
  %1139 = vmatprep.subr.mxu0 0.0
  %1140 = vmatpush1.msra.mxu0 %v1064
  %1141 = vmatprep.subr.mxu0 0.0
  %1142 = vmatpush1.msra.mxu0 %v1063
  %1143 = vmatprep.subr.mxu0 0.0
  %1144 = vmatpush2.msra.mxu0 %v1094
  %1145 = vmatprep.subr.mxu0 0.0
  %1146 = vmatpush2.msra.mxu0 %v1093
  %1147 = vmatprep.subr.mxu0 0.0
  %1148 = vmatpush2.msra.mxu0 %v1092
  %1149 = vmatprep.subr.mxu0 0.0
  %1150 = vmatpush2.msra.mxu0 %v1091
  %1151 = vmatprep.subr.mxu0 0.0
  %1152 = vmatpush2.msra.mxu0 %v1090
  %1153 = vmatprep.subr.mxu0 0.0
  %1154 = vmatpush2.msra.mxu0 %v1089
  %1155 = vmatprep.subr.mxu0 0.0
  %1156 = vmatpush2.msra.mxu0 %v1088
  %1157 = vmatprep.subr.mxu0 0.0
  %1158 = vmatpush2.msra.mxu0 %v1087
  %1159 = vmatprep.subr.mxu0 0.0
  %1160 = vmatpush2.msra.mxu0 %v1086
  %1161 = vmatprep.subr.mxu0 0.0
  %1162 = vmatpush2.msra.mxu0 %v1085
  %1163 = vmatprep.subr.mxu0 0.0
  %1164 = vmatpush2.msra.mxu0 %v1084
  %1165 = vmatprep.subr.mxu0 0.0
  %1166 = vmatpush2.msra.mxu0 %v1083
  %1167 = vmatprep.subr.mxu0 0.0
  %1168 = vmatpush2.msra.mxu0 %v1082
  %1169 = vmatprep.subr.mxu0 0.0
  %1170 = vmatpush2.msra.mxu0 %v1081
  %1171 = vmatprep.subr.mxu0 0.0
  %1172 = vmatpush2.msra.mxu0 %v1080
  %1173 = vmatprep.subr.mxu0 0.0
  %1174 = vmatpush2.msra.mxu0 %v1079
  %1175 = vmatprep.mubr.f32.mxu0 %v1015
  %1176 = vmatmul.mubr.f32.gmra.mxu0 %v1014
  %v1177 = vpop.f32.mrf.mxu0
  %v1178 = vadd.f32 0.0, %v1177
  %v1179 = vpop.f32.mrf.mxu0
  %1180 = vmatprep.mubr.f32.mxu0 %v1018
  %1181 = vmatmul.mubr.f32.gmra.mxu0 %v1017
  %v1182 = vpop.f32.mrf.mxu0
  %v1183 = vadd.f32 0.0, %v1182
  %v1184 = vpop.f32.mrf.mxu0
  %1185 = vmatprep.mubr.f32.mxu0 %v1021
  %1186 = vmatmul.mubr.f32.gmra.mxu0 %v1020
  %v1187 = vpop.f32.mrf.mxu0
  %v1188 = vadd.f32 0.0, %v1187
  %v1189 = vpop.f32.mrf.mxu0
  %1190 = vmatprep.mubr.f32.mxu0 %v1024
  %1191 = vmatmul.mubr.f32.gmra.mxu0 %v1023
  %v1192 = vpop.f32.mrf.mxu0
  %v1193 = vadd.f32 0.0, %v1192
  %v1194 = vpop.f32.mrf.mxu0
  %1195 = vmatprep.mubr.f32.mxu0 %v1027
  %1196 = vmatmul.mubr.f32.gmra.mxu0 %v1026
  %v1197 = vpop.f32.mrf.mxu0
  %v1198 = vadd.f32 0.0, %v1197
  %v1199 = vpop.f32.mrf.mxu0
  %1200 = vmatprep.mubr.f32.mxu0 %v1030
  %1201 = vmatmul.mubr.f32.gmra.mxu0 %v1029
  %v1202 = vpop.f32.mrf.mxu0
  %v1203 = vadd.f32 0.0, %v1202
  %v1204 = vpop.f32.mrf.mxu0
  %1205 = vmatprep.mubr.f32.mxu0 %v1033
  %1206 = vmatmul.mubr.f32.gmra.mxu0 %v1032
  %v1207 = vpop.f32.mrf.mxu0
  %v1208 = vadd.f32 0.0, %v1207
  %v1209 = vpop.f32.mrf.mxu0
  %1210 = vmatprep.mubr.f32.mxu0 %v1036
  %1211 = vmatmul.mubr.f32.gmra.mxu0 %v1035
  %v1212 = vpop.f32.mrf.mxu0
  %v1213 = vadd.f32 0.0, %v1212
  %v1214 = vpop.f32.mrf.mxu0
  %1215 = vmatprep.mubr.f32.mxu0 %v1039
  %1216 = vmatmul.mubr.f32.gmra.mxu0 %v1038
  %v1217 = vpop.f32.mrf.mxu0
  %v1218 = vadd.f32 0.0, %v1217
  %v1219 = vpop.f32.mrf.mxu0
  %1220 = vmatprep.mubr.f32.mxu0 %v1042
  %1221 = vmatmul.mubr.f32.gmra.mxu0 %v1041
  %v1222 = vpop.f32.mrf.mxu0
  %v1223 = vadd.f32 0.0, %v1222
  %v1224 = vpop.f32.mrf.mxu0
  %1225 = vmatprep.mubr.f32.mxu0 %v1045
  %1226 = vmatmul.mubr.f32.gmra.mxu0 %v1044
  %v1227 = vpop.f32.mrf.mxu0
  %v1228 = vadd.f32 0.0, %v1227
  %v1229 = vpop.f32.mrf.mxu0
  %1230 = vmatprep.mubr.f32.mxu0 %v1048
  %1231 = vmatmul.mubr.f32.gmra.mxu0 %v1047
  %v1232 = vpop.f32.mrf.mxu0
  %v1233 = vadd.f32 0.0, %v1232
  %v1234 = vpop.f32.mrf.mxu0
  %1235 = vmatprep.mubr.f32.mxu0 %v1051
  %1236 = vmatmul.mubr.f32.gmra.mxu0 %v1050
  %v1237 = vpop.f32.mrf.mxu0
  %v1238 = vadd.f32 0.0, %v1237
  %v1239 = vpop.f32.mrf.mxu0
  %1240 = vmatprep.mubr.f32.mxu0 %v1054
  %1241 = vmatmul.mubr.f32.gmra.mxu0 %v1053
  %v1242 = vpop.f32.mrf.mxu0
  %v1243 = vadd.f32 0.0, %v1242
  %v1244 = vpop.f32.mrf.mxu0
  %1245 = vmatprep.mubr.f32.mxu0 %v1057
  %1246 = vmatmul.mubr.f32.gmra.mxu0 %v1056
  %v1247 = vpop.f32.mrf.mxu0
  %v1248 = vadd.f32 0.0, %v1247
  %v1249 = vpop.f32.mrf.mxu0
  %1250 = vmatprep.mubr.f32.mxu0 %v1060
  %1251 = vmatmul.mubr.f32.gmra.mxu0 %v1059
  %v1252 = vpop.f32.mrf.mxu0
  %v1253 = vadd.f32 0.0, %v1252
  %v1254 = vpop.f32.mrf.mxu0
  %1255 = vdwg.mxu0
  %1256 = vmatprep.subr.mxu0 0.0
  %1257 = vmatpush1.msra.mxu0 %v1110
  %1258 = vmatprep.subr.mxu0 0.0
  %1259 = vmatpush1.msra.mxu0 %v1109
  %1260 = vmatprep.subr.mxu0 0.0
  %1261 = vmatpush1.msra.mxu0 %v1108
  %1262 = vmatprep.subr.mxu0 0.0
  %1263 = vmatpush1.msra.mxu0 %v1107
  %1264 = vmatprep.subr.mxu0 0.0
  %1265 = vmatpush1.msra.mxu0 %v1106
  %1266 = vmatprep.subr.mxu0 0.0
  %1267 = vmatpush1.msra.mxu0 %v1105
  %1268 = vmatprep.subr.mxu0 0.0
  %1269 = vmatpush1.msra.mxu0 %v1104
  %1270 = vmatprep.subr.mxu0 0.0
  %1271 = vmatpush1.msra.mxu0 %v1103
  %1272 = vmatprep.subr.mxu0 0.0
  %1273 = vmatpush1.msra.mxu0 %v1102
  %1274 = vmatprep.subr.mxu0 0.0
  %1275 = vmatpush1.msra.mxu0 %v1101
  %1276 = vmatprep.subr.mxu0 0.0
  %1277 = vmatpush1.msra.mxu0 %v1100
  %1278 = vmatprep.subr.mxu0 0.0
  %1279 = vmatpush1.msra.mxu0 %v1099
  %1280 = vmatprep.subr.mxu0 0.0
  %1281 = vmatpush1.msra.mxu0 %v1098
  %1282 = vmatprep.subr.mxu0 0.0
  %1283 = vmatpush1.msra.mxu0 %v1097
  %1284 = vmatprep.subr.mxu0 0.0
  %1285 = vmatpush1.msra.mxu0 %v1096
  %1286 = vmatprep.subr.mxu0 0.0
  %1287 = vmatpush1.msra.mxu0 %v1095
  %1288 = vmatprep.subr.mxu0 0.0
  %1289 = vmatpush2.msra.mxu0 0.0
  %1290 = vmatprep.subr.mxu0 0.0
  %1291 = vmatpush2.msra.mxu0 0.0
  %1292 = vmatprep.subr.mxu0 0.0
  %1293 = vmatpush2.msra.mxu0 0.0
  %1294 = vmatprep.subr.mxu0 0.0
  %1295 = vmatpush2.msra.mxu0 0.0
  %1296 = vmatprep.subr.mxu0 0.0
  %1297 = vmatpush2.msra.mxu0 0.0
  %1298 = vmatprep.subr.mxu0 0.0
  %1299 = vmatpush2.msra.mxu0 0.0
  %1300 = vmatprep.subr.mxu0 0.0
  %1301 = vmatpush2.msra.mxu0 0.0
  %1302 = vmatprep.subr.mxu0 0.0
  %1303 = vmatpush2.msra.mxu0 0.0
  %1304 = vmatprep.subr.mxu0 0.0
  %1305 = vmatpush2.msra.mxu0 0.0
  %1306 = vmatprep.subr.mxu0 0.0
  %1307 = vmatpush2.msra.mxu0 0.0
  %1308 = vmatprep.subr.mxu0 0.0
  %1309 = vmatpush2.msra.mxu0 0.0
  %1310 = vmatprep.subr.mxu0 0.0
  %1311 = vmatpush2.msra.mxu0 0.0
  %1312 = vmatprep.subr.mxu0 0.0
  %1313 = vmatpush2.msra.mxu0 0.0
  %1314 = vmatprep.subr.mxu0 0.0
  %1315 = vmatpush2.msra.mxu0 0.0
  %1316 = vmatprep.subr.mxu0 0.0
  %1317 = vmatpush2.msra.mxu0 0.0
  %1318 = vmatprep.subr.mxu0 0.0
  %1319 = vmatpush2.msra.mxu0 0.0
  %1320 = vmatprep.mubr.f32.mxu0 0.0
  %1321 = vmatmul.mubr.f32.gmra.mxu0 %v1016
  %v1322 = vpop.f32.mrf.mxu0
  %v1323 = vadd.f32 %v1178, %v1322
  %v1324 = vpop.f32.mrf.mxu0
  %1325 = vmatprep.mubr.f32.mxu0 0.0
  %1326 = vmatmul.mubr.f32.gmra.mxu0 %v1019
  %v1327 = vpop.f32.mrf.mxu0
  %v1328 = vadd.f32 %v1183, %v1327
  %v1329 = vpop.f32.mrf.mxu0
  %1330 = vmatprep.mubr.f32.mxu0 0.0
  %1331 = vmatmul.mubr.f32.gmra.mxu0 %v1022
  %v1332 = vpop.f32.mrf.mxu0
  %v1333 = vadd.f32 %v1188, %v1332
  %v1334 = vpop.f32.mrf.mxu0
  %1335 = vmatprep.mubr.f32.mxu0 0.0
  %1336 = vmatmul.mubr.f32.gmra.mxu0 %v1025
  %v1337 = vpop.f32.mrf.mxu0
  %v1338 = vadd.f32 %v1193, %v1337
  %v1339 = vpop.f32.mrf.mxu0
  %1340 = vmatprep.mubr.f32.mxu0 0.0
  %1341 = vmatmul.mubr.f32.gmra.mxu0 %v1028
  %v1342 = vpop.f32.mrf.mxu0
  %v1343 = vadd.f32 %v1198, %v1342
  %v1344 = vpop.f32.mrf.mxu0
  %1345 = vmatprep.mubr.f32.mxu0 0.0
  %1346 = vmatmul.mubr.f32.gmra.mxu0 %v1031
  %v1347 = vpop.f32.mrf.mxu0
  %v1348 = vadd.f32 %v1203, %v1347
  %v1349 = vpop.f32.mrf.mxu0
  %1350 = vmatprep.mubr.f32.mxu0 0.0
  %1351 = vmatmul.mubr.f32.gmra.mxu0 %v1034
  %v1352 = vpop.f32.mrf.mxu0
  %v1353 = vadd.f32 %v1208, %v1352
  %v1354 = vpop.f32.mrf.mxu0
  %1355 = vmatprep.mubr.f32.mxu0 0.0
  %1356 = vmatmul.mubr.f32.gmra.mxu0 %v1037
  %v1357 = vpop.f32.mrf.mxu0
  %v1358 = vadd.f32 %v1213, %v1357
  %v1359 = vpop.f32.mrf.mxu0
  %1360 = vmatprep.mubr.f32.mxu0 0.0
  %1361 = vmatmul.mubr.f32.gmra.mxu0 %v1040
  %v1362 = vpop.f32.mrf.mxu0
  %v1363 = vadd.f32 %v1218, %v1362
  %v1364 = vpop.f32.mrf.mxu0
  %1365 = vmatprep.mubr.f32.mxu0 0.0
  %1366 = vmatmul.mubr.f32.gmra.mxu0 %v1043
  %v1367 = vpop.f32.mrf.mxu0
  %v1368 = vadd.f32 %v1223, %v1367
  %v1369 = vpop.f32.mrf.mxu0
  %1370 = vmatprep.mubr.f32.mxu0 0.0
  %1371 = vmatmul.mubr.f32.gmra.mxu0 %v1046
  %v1372 = vpop.f32.mrf.mxu0
  %v1373 = vadd.f32 %v1228, %v1372
  %v1374 = vpop.f32.mrf.mxu0
  %1375 = vmatprep.mubr.f32.mxu0 0.0
  %1376 = vmatmul.mubr.f32.gmra.mxu0 %v1049
  %v1377 = vpop.f32.mrf.mxu0
  %v1378 = vadd.f32 %v1233, %v1377
  %v1379 = vpop.f32.mrf.mxu0
  %1380 = vmatprep.mubr.f32.mxu0 0.0
  %1381 = vmatmul.mubr.f32.gmra.mxu0 %v1052
  %v1382 = vpop.f32.mrf.mxu0
  %v1383 = vadd.f32 %v1238, %v1382
  %v1384 = vpop.f32.mrf.mxu0
  %1385 = vmatprep.mubr.f32.mxu0 0.0
  %1386 = vmatmul.mubr.f32.gmra.mxu0 %v1055
  %v1387 = vpop.f32.mrf.mxu0
  %v1388 = vadd.f32 %v1243, %v1387
  %v1389 = vpop.f32.mrf.mxu0
  %1390 = vmatprep.mubr.f32.mxu0 0.0
  %1391 = vmatmul.mubr.f32.gmra.mxu0 %v1058
  %v1392 = vpop.f32.mrf.mxu0
  %v1393 = vadd.f32 %v1248, %v1392
  %v1394 = vpop.f32.mrf.mxu0
  %1395 = vmatprep.mubr.f32.mxu0 0.0
  %1396 = vmatmul.mubr.f32.gmra.mxu0 %v1061
  %v1397 = vpop.f32.mrf.mxu0
  %v1398 = vadd.f32 %v1253, %v1397
  %v1399 = vpop.f32.mrf.mxu0
  %1400 = vdwg.mxu0
  %v1401 = vadd.f32 %v935, %v1323
  %v1402 = vadd.f32 %v940, %v1328
  %v1403 = vadd.f32 %v945, %v1333
  %v1404 = vadd.f32 %v950, %v1338
  %v1405 = vadd.f32 %v955, %v1343
  %v1406 = vadd.f32 %v960, %v1348
  %v1407 = vadd.f32 %v965, %v1353
  %v1408 = vadd.f32 %v970, %v1358
  %v1409 = vadd.f32 %v975, %v1363
  %v1410 = vadd.f32 %v980, %v1368
  %v1411 = vadd.f32 %v985, %v1373
  %v1412 = vadd.f32 %v990, %v1378
  %v1413 = vadd.f32 %v995, %v1383
  %v1414 = vadd.f32 %v1000, %v1388
  %v1415 = vadd.f32 %v1005, %v1393
  %v1416 = vadd.f32 %v1010, %v1398
  %1417 = vst [vmem:[%s2] sm:$0xff] %v1401
  %1418 = vst [vmem:[%s2 + $0x8] sm:$0xff] %v1402
  %1419 = vst [vmem:[%s2 + $0x10] sm:$0xff] %v1403
  %1420 = vst [vmem:[%s2 + $0x18] sm:$0xff] %v1404
  %1421 = vst [vmem:[%s2 + $0x20] sm:$0xff] %v1405
  %1422 = vst [vmem:[%s2 + $0x28] sm:$0xff] %v1406
  %1423 = vst [vmem:[%s2 + $0x30] sm:$0xff] %v1407
  %1424 = vst [vmem:[%s2 + $0x38] sm:$0xff] %v1408
  %1425 = vst [vmem:[%s2 + $0x40] sm:$0xff] %v1409
  %1426 = vst [vmem:[%s2 + $0x48] sm:$0xff] %v1410
  %1427 = vst [vmem:[%s2 + $0x50] sm:$0xff] %v1411
  %1428 = vst [vmem:[%s2 + $0x58] sm:$0xff] %v1412
  %1429 = vst [vmem:[%s2 + $0x60] sm:$0xff] %v1413
  %1430 = vst [vmem:[%s2 + $0x68] sm:$0xff] %v1414
  %1431 = vst [vmem:[%s2 + $0x70] sm:$0xff] %v1415
  %1432 = vst [vmem:[%s2 + $0x78] sm:$0xff] %v1416
  %v1433 = vadd.f32 %v1401, %v1402
  %v1434 = vadd.f32 %v1433, %v1403
  %v1435 = vadd.f32 %v1434, %v1404
  %v1436 = vadd.f32 %v1435, %v1405
  %v1437 = vadd.f32 %v1436, %v1406
  %v1438 = vadd.f32 %v1437, %v1407
  %v1439 = vadd.f32 %v1438, %v1408
  %v1440 = vadd.f32 %v1439, %v1409
  %v1441 = vadd.f32 %v1440, %v1410
  %v1442 = vadd.f32 %v1441, %v1411
  %v1443 = vadd.f32 %v1442, %v1412
  %v1444 = vadd.f32 %v1443, %v1413
  %v1445 = vadd.f32 %v1444, %v1414
  %v1446 = vadd.f32 %v1445, %v1415
  %v1447 = vadd.f32 %v1446, %v1416
  %v1448 = vrot.slane %v1447, 4
  %v1449 = vadd.f32 %v1447, %v1448
  %v1450 = vrot.slane %v1449, 2
  %v1451 = vadd.f32 %v1449, %v1450
  %v1452 = vrot.slane %v1451, 1
  %v1453 = vadd.f32 %v1451, %v1452
  %1454 = vst [vmem:[%s3] sm:$0x1] %v1453
  %v1455 = vmul.f32 %v1401, %v1401
  %v1456 = vmul.f32 %v1402, %v1402
  %v1457 = vmul.f32 %v1403, %v1403
  %v1458 = vmul.f32 %v1404, %v1404
  %v1459 = vmul.f32 %v1405, %v1405
  %v1460 = vmul.f32 %v1406, %v1406
  %v1461 = vmul.f32 %v1407, %v1407
  %v1462 = vmul.f32 %v1408, %v1408
  %v1463 = vmul.f32 %v1409, %v1409
  %v1464 = vmul.f32 %v1410, %v1410
  %v1465 = vmul.f32 %v1411, %v1411
  %v1466 = vmul.f32 %v1412, %v1412
  %v1467 = vmul.f32 %v1413, %v1413
  %v1468 = vmul.f32 %v1414, %v1414
  %v1469 = vmul.f32 %v1415, %v1415
  %v1470 = vmul.f32 %v1416, %v1416
  %v1471 = vadd.f32 %v1455, %v1456
  %v1472 = vadd.f32 %v1471, %v1457
  %v1473 = vadd.f32 %v1472, %v1458
  %v1474 = vadd.f32 %v1473, %v1459
  %v1475 = vadd.f32 %v1474, %v1460
  %v1476 = vadd.f32 %v1475, %v1461
  %v1477 = vadd.f32 %v1476, %v1462
  %v1478 = vadd.f32 %v1477, %v1463
  %v1479 = vadd.f32 %v1478, %v1464
  %v1480 = vadd.f32 %v1479, %v1465
  %v1481 = vadd.f32 %v1480, %v1466
  %v1482 = vadd.f32 %v1481, %v1467
  %v1483 = vadd.f32 %v1482, %v1468
  %v1484 = vadd.f32 %v1483, %v1469
  %v1485 = vadd.f32 %v1484, %v1470
  %v1486 = vrot.slane %v1485, 4
  %v1487 = vadd.f32 %v1485, %v1486
  %v1488 = vrot.slane %v1487, 2
  %v1489 = vadd.f32 %v1487, %v1488
  %v1490 = vrot.slane %v1489, 1
  %v1491 = vadd.f32 %v1489, %v1490
  %1492 = vst [vmem:[%s4] sm:$0x1] %v1491
  // Predicated region
  $region10: #{residual_forward.3} parent=0 // pred_check
    _
  $region11: #{residual_forward.3} parent=0 // pred_check_branch
    %1494 = sbr.rel (0) target = $region13
  $region12: #{residual_forward.3} parent=0 // pred_region
    _
  $region13: #{residual_forward.3} parent=0 // pred_fallthru
    _
  // Predicated region
  $region14: #{residual_forward.3} parent=0 // pred_check
    _
  $region15: #{residual_forward.3} parent=0 // pred_check_branch
    %1496 = sbr.rel (0) target = $region17
  $region16: #{residual_forward.3} parent=0 // pred_region
    _
  $region17: #{residual_forward.3} parent=0 // pred_fallthru
    _
  // Predicated region
  $region18: #{residual_forward.3} parent=0 // pred_check
    _
  $region19: #{residual_forward.3} parent=0 // pred_check_branch
    %1498 = sbr.rel (0) target = $region21
  $region20: #{residual_forward.3} parent=0 // pred_region
    _
  $region21: #{residual_forward.3} parent=0 // pred_fallthru
    _
  // Predicated region
  $region22: #{residual_forward.3} parent=0 // pred_check
    _
  $region23: #{residual_forward.3} parent=0 // pred_check_branch
    %1500 = sbr.rel (0) target = $region25
  $region24: #{residual_forward.3} parent=0 // pred_region
    _
  $region25: #{residual_forward.3} parent=0 // pred_fallthru
    _
  // Predicated region
  $region26: #{residual_forward.3} parent=0 // pred_check
    _
  $region27: #{residual_forward.3} parent=0 // pred_check_branch
    %1502 = sbr.rel (0) target = $region29
  $region28: #{residual_forward.3} parent=0 // pred_region
    _
  $region29: #{residual_forward.3} parent=0 // pred_fallthru
    _
  // Predicated region
  $region30: #{residual_forward.3} parent=0 // pred_check
    _
  $region31: #{residual_forward.3} parent=0 // pred_check_branch
    %1504 = sbr.rel (0) target = $region33
  $region32: #{residual_forward.3} parent=0 // pred_region
    _
  $region33: #{residual_forward.3} parent=0 // pred_fallthru
    _

// kernel: residual_forward.4
$region0: #{residual_forward.4}
  #allocation0 [shape = 'u32[]', space=smem, size = 0x4, offset = 0x4, fixed_abs, tag = 'smem constant byte address 0x4 - core index']
  #allocation1 [shape = 'u32[144,128]{1,0:T(1,128)}', space=vmem, size = 0x12000, scoped, tag = 'internal scratch']
  #allocation2 [shape = 'f32[2,10,8,384]{3,2,1,0:T(8,128)}', space=vmem, size = 0x3c000, scoped, tag = 'scratch operand']
  %s0 = inlined_call_operand.vmem [shape: f32[2,64,128], index: 0, kind: input, shape index: {}]
  %s1 = inlined_call_operand.vmem [shape: f32[1,128], index: 1, kind: input, shape index: {}]
  %s2 = inlined_call_operand.vmem [shape: f32[1,128], index: 2, kind: input, shape index: {}]
  %s3 = inlined_call_operand.vmem [shape: f32[3,384,128], index: 3, kind: input, shape index: {}]
  %s4 = inlined_call_operand.vmem [shape: f32[2,64,128], index: 4, kind: output, shape index: {0}]
  %s5 = inlined_call_operand.vmem [shape: f32[1,1,128], index: 5, kind: output, shape index: {1}]
  %s6 = inlined_call_operand.vmem [shape: f32[1,1,128], index: 6, kind: output, shape index: {2}]
  %7 = xla_tuple %s4, %s5, %s6
  %s8 = sld [smem:[#allocation0]]
  $region42: #{residual_forward.4} parent=0
    _
  %s10 = ssub.s32 1, %s8
  %s11 = scalar_select 0, %s10, %s8
  // Predicated region
  $region2: #{residual_forward.4} parent=0 // pred_check
    _
  $region3: #{residual_forward.4} parent=0 // pred_check_branch
    %13 = sbr.rel (0) target = $region5
  $region4: #{residual_forward.4} parent=0 // pred_region
    _
  $region5: #{residual_forward.4} parent=0 // pred_fallthru
    _
  // Predicated region
  $region6: #{residual_forward.4} parent=0 // pred_check
    _
  $region7: #{residual_forward.4} parent=0 // pred_check_branch
    %15 = sbr.rel (0) target = $region9
  $region8: #{residual_forward.4} parent=0 // pred_region
    _
  $region9: #{residual_forward.4} parent=0 // pred_fallthru
    _
  // Predicated region
  $region10: #{residual_forward.4} parent=0 // pred_check
    _
  $region11: #{residual_forward.4} parent=0 // pred_check_branch
    %17 = sbr.rel (0) target = $region13
  $region12: #{residual_forward.4} parent=0 // pred_region
    _
  $region13: #{residual_forward.4} parent=0 // pred_fallthru
    _
  // Predicated region
  $region14: #{residual_forward.4} parent=0 // pred_check
    _
  $region15: #{residual_forward.4} parent=0 // pred_check_branch
    %19 = sbr.rel (0) target = $region17
  $region16: #{residual_forward.4} parent=0 // pred_region
    _
  $region17: #{residual_forward.4} parent=0 // pred_fallthru
    _
  %v20 = vld [vmem:[%s0] sm:$0xff]
  %v21 = vld [vmem:[%s0 + $0x8] sm:$0xff]
  %v22 = vld [vmem:[%s0 + $0x10] sm:$0xff]
  %v23 = vld [vmem:[%s0 + $0x18] sm:$0xff]
  %v24 = vld [vmem:[%s0 + $0x20] sm:$0xff]
  %v25 = vld [vmem:[%s0 + $0x28] sm:$0xff]
  %v26 = vld [vmem:[%s0 + $0x30] sm:$0xff]
  %v27 = vld [vmem:[%s0 + $0x38] sm:$0xff]
  %v28 = vld [vmem:[%s0 + $0x40] sm:$0xff]
  %v29 = vld [vmem:[%s0 + $0x48] sm:$0xff]
  %v30 = vld [vmem:[%s0 + $0x50] sm:$0xff]
  %v31 = vld [vmem:[%s0 + $0x58] sm:$0xff]
  %v32 = vld [vmem:[%s0 + $0x60] sm:$0xff]
  %v33 = vld [vmem:[%s0 + $0x68] sm:$0xff]
  %v34 = vld [vmem:[%s0 + $0x70] sm:$0xff]
  %v35 = vld [vmem:[%s0 + $0x78] sm:$0xff]
  %v36 = vld [vmem:[%s1] sm:$0x1]
  %v38 = vlaneseq
  %v39 = vshrl.u32 %v38, 7
  %v40 = vsub.s32 0, %v39
  %v41 = vrot.slane %v36, %v40
  %v43 = vmul.f32 %v20, %v41
  %v44 = vmul.f32 %v21, %v41
  %v45 = vmul.f32 %v22, %v41
  %v46 = vmul.f32 %v23, %v41
  %v47 = vmul.f32 %v24, %v41
  %v48 = vmul.f32 %v25, %v41
  %v49 = vmul.f32 %v26, %v41
  %v50 = vmul.f32 %v27, %v41
  %v51 = vmul.f32 %v28, %v41
  %v52 = vmul.f32 %v29, %v41
  %v53 = vmul.f32 %v30, %v41
  %v54 = vmul.f32 %v31, %v41
  %v55 = vmul.f32 %v32, %v41
  %v56 = vmul.f32 %v33, %v41
  %v57 = vmul.f32 %v34, %v41
  %v58 = vmul.f32 %v35, %v41
  %v59 = vld [vmem:[%s2] sm:$0x1]
  %v61 = vlaneseq
  %v62 = vshrl.u32 %v61, 7
  %v63 = vsub.s32 0, %v62
  %v64 = vrot.slane %v59, %v63
  %v66 = vadd.f32 %v43, %v64
  %v67 = vadd.f32 %v44, %v64
  %v68 = vadd.f32 %v45, %v64
  %v69 = vadd.f32 %v46, %v64
  %v70 = vadd.f32 %v47, %v64
  %v71 = vadd.f32 %v48, %v64
  %v72 = vadd.f32 %v49, %v64
  %v73 = vadd.f32 %v50, %v64
  %v74 = vadd.f32 %v51, %v64
  %v75 = vadd.f32 %v52, %v64
  %v76 = vadd.f32 %v53, %v64
  %v77 = vadd.f32 %v54, %v64
  %v78 = vadd.f32 %v55, %v64
  %v79 = vadd.f32 %v56, %v64
  %v80 = vadd.f32 %v57, %v64
  %v81 = vadd.f32 %v58, %v64
  %v82 = vmax.f32 %v66, 0.0
  %v83 = vmax.f32 %v67, 0.0
  %v84 = vmax.f32 %v68, 0.0
  %v85 = vmax.f32 %v69, 0.0
  %v86 = vmax.f32 %v70, 0.0
  %v87 = vmax.f32 %v71, 0.0
  %v88 = vmax.f32 %v72, 0.0
  %v89 = vmax.f32 %v73, 0.0
  %v90 = vmax.f32 %v74, 0.0
  %v91 = vmax.f32 %v75, 0.0
  %v92 = vmax.f32 %v76, 0.0
  %v93 = vmax.f32 %v77, 0.0
  %v94 = vmax.f32 %v78, 0.0
  %v95 = vmax.f32 %v79, 0.0
  %v96 = vmax.f32 %v80, 0.0
  %v97 = vmax.f32 %v81, 0.0
  %98 = vst [vmem:[#allocation2] sm:$0xff] 0.0
  %99 = vst [vmem:[#allocation2 + $0x8] sm:$0xff] 0.0
  %100 = vst [vmem:[#allocation2 + $0x10] sm:$0xff] 0.0
  %101 = vst [vmem:[#allocation2 + $0xf0] sm:$0xff] 0.0
  %102 = vst [vmem:[#allocation2 + $0xf8] sm:$0xff] 0.0
  %103 = vst [vmem:[#allocation2 + $0x100] sm:$0xff] 0.0
  %s104 = scalar_lea.vmem [#allocation2], 216
  %105 = vst [vmem:[%s104] sm:$0xff] 0.0
  %106 = vst [vmem:[%s104 + $0x8] sm:$0xff] 0.0
  %107 = vst [vmem:[%s104 + $0x10] sm:$0xff] 0.0
  %108 = vst [vmem:[%s104 + $0xf0] sm:$0xff] 0.0
  %109 = vst [vmem:[%s104 + $0xf8] sm:$0xff] 0.0
  %110 = vst [vmem:[%s104 + $0x100] sm:$0xff] 0.0
  %s111 = scalar_lea.vmem [#allocation2], 24
  %112 = vst [vmem:[%s111] sm:$0x1] 0.0
  %113 = vst [vmem:[%s111 + $0x18] sm:$0x1] 0.0
  %114 = vst [vmem:[%s111 + $0x30] sm:$0x1] 0.0
  %115 = vst [vmem:[%s111 + $0x48] sm:$0x1] 0.0
  %116 = vst [vmem:[%s111 + $0x60] sm:$0x1] 0.0
  %117 = vst [vmem:[%s111 + $0x78] sm:$0x1] 0.0
  %118 = vst [vmem:[%s111 + $0x90] sm:$0x1] 0.0
  %119 = vst [vmem:[%s111 + $0xa8] sm:$0x1] 0.0
  %120 = vst [vmem:[%s111 + $0xf0] sm:$0x1] 0.0
  %121 = vst [vmem:[%s111 + $0x108] sm:$0x1] 0.0
  %122 = vst [vmem:[%s111 + $0x120] sm:$0x1] 0.0
  %123 = vst [vmem:[%s111 + $0x138] sm:$0x1] 0.0
  %124 = vst [vmem:[%s111 + $0x150] sm:$0x1] 0.0
  %125 = vst [vmem:[%s111 + $0x168] sm:$0x1] 0.0
  %126 = vst [vmem:[%s111 + $0x180] sm:$0x1] 0.0
  %127 = vst [vmem:[%s111 + $0x198] sm:$0x1] 0.0
  %128 = vst [vmem:[%s111 + $0x17] sm:$0x1] 0.0
  %129 = vst [vmem:[%s111 + $0x2f] sm:$0x1] 0.0
  %130 = vst [vmem:[%s111 + $0x47] sm:$0x1] 0.0
  %131 = vst [vmem:[%s111 + $0x5f] sm:$0x1] 0.0
  %132 = vst [vmem:[%s111 + $0x77] sm:$0x1] 0.0
  %133 = vst [vmem:[%s111 + $0x8f] sm:$0x1] 0.0
  %134 = vst [vmem:[%s111 + $0xa7] sm:$0x1] 0.0
  %135 = vst [vmem:[%s111 + $0xbf] sm:$0x1] 0.0
  %136 = vst [vmem:[%s111 + $0x107] sm:$0x1] 0.0
  %137 = vst [vmem:[%s111 + $0x11f] sm:$0x1] 0.0
  %138 = vst [vmem:[%s111 + $0x137] sm:$0x1] 0.0
  %139 = vst [vmem:[%s111 + $0x14f] sm:$0x1] 0.0
  %140 = vst [vmem:[%s111 + $0x167] sm:$0x1] 0.0
  %141 = vst [vmem:[%s111 + $0x17f] sm:$0x1] 0.0
  %142 = vst [vmem:[%s111 + $0x197] sm:$0x1] 0.0
  %143 = vst [vmem:[%s111 + $0x1af] sm:$0x1] 0.0
  %144 = vst [vmem:[%s111 + $0x8] sm:$0xff] %v82
  %145 = vst [vmem:[%s111 + $0x20] sm:$0xff] %v83
  %146 = vst [vmem:[%s111 + $0x38] sm:$0xff] %v84
  %147 = vst [vmem:[%s111 + $0x50] sm:$0xff] %v85
  %148 = vst [vmem:[%s111 + $0x68] sm:$0xff] %v86
  %149 = vst [vmem:[%s111 + $0x80] sm:$0xff] %v87
  %150 = vst [vmem:[%s111 + $0x98] sm:$0xff] %v88
  %151 = vst [vmem:[%s111 + $0xb0] sm:$0xff] %v89
  %152 = vst [vmem:[%s111 + $0xf8] sm:$0xff] %v90
  %153 = vst [vmem:[%s111 + $0x110] sm:$0xff] %v91
  %154 = vst [vmem:[%s111 + $0x128] sm:$0xff] %v92
  %155 = vst [vmem:[%s111 + $0x140] sm:$0xff] %v93
  %156 = vst [vmem:[%s111 + $0x158] sm:$0xff] %v94
  %157 = vst [vmem:[%s111 + $0x170] sm:$0xff] %v95
  %158 = vst [vmem:[%s111 + $0x188] sm:$0xff] %v96
  %159 = vst [vmem:[%s111 + $0x1a0] sm:$0xff] %v97
  %v176 = vrot.slane %v82, 7
  %v177 = vrot.slane %v83, 7
  %v178 = vrot.slane %v84, 7
  %v179 = vrot.slane %v85, 7
  %v180 = vrot.slane %v86, 7
  %v181 = vrot.slane %v87, 7
  %v182 = vrot.slane %v88, 7
  %v183 = vrot.slane %v89, 7
  %v184 = vrot.slane %v90, 7
  %v185 = vrot.slane %v91, 7
  %v186 = vrot.slane %v92, 7
  %v187 = vrot.slane %v93, 7
  %v188 = vrot.slane %v94, 7
  %v189 = vrot.slane %v95, 7
  %v190 = vrot.slane %v96, 7
  %v191 = vrot.slane %v97, 7
  %208 = vst [vmem:[%s111] sm:$0xfe] %v176
  %209 = vst [vmem:[%s111 + $0x18] sm:$0xfe] %v177
  %210 = vst [vmem:[%s111 + $0x30] sm:$0xfe] %v178
  %211 = vst [vmem:[%s111 + $0x48] sm:$0xfe] %v179
  %212 = vst [vmem:[%s111 + $0x60] sm:$0xfe] %v180
  %213 = vst [vmem:[%s111 + $0x78] sm:$0xfe] %v181
  %214 = vst [vmem:[%s111 + $0x90] sm:$0xfe] %v182
  %215 = vst [vmem:[%s111 + $0xa8] sm:$0xfe] %v183
  %216 = vst [vmem:[%s111 + $0xf0] sm:$0xfe] %v184
  %217 = vst [vmem:[%s111 + $0x108] sm:$0xfe] %v185
  %218 = vst [vmem:[%s111 + $0x120] sm:$0xfe] %v186
  %219 = vst [vmem:[%s111 + $0x138] sm:$0xfe] %v187
  %220 = vst [vmem:[%s111 + $0x150] sm:$0xfe] %v188
  %221 = vst [vmem:[%s111 + $0x168] sm:$0xfe] %v189
  %222 = vst [vmem:[%s111 + $0x180] sm:$0xfe] %v190
  %223 = vst [vmem:[%s111 + $0x198] sm:$0xfe] %v191
  %v224 = vrot.slane %v82, 1
  %v225 = vrot.slane %v83, 1
  %v226 = vrot.slane %v84, 1
  %v227 = vrot.slane %v85, 1
  %v228 = vrot.slane %v86, 1
  %v229 = vrot.slane %v87, 1
  %v230 = vrot.slane %v88, 1
  %v231 = vrot.slane %v89, 1
  %v232 = vrot.slane %v90, 1
  %v233 = vrot.slane %v91, 1
  %v234 = vrot.slane %v92, 1
  %v235 = vrot.slane %v93, 1
  %v236 = vrot.slane %v94, 1
  %v237 = vrot.slane %v95, 1
  %v238 = vrot.slane %v96, 1
  %v239 = vrot.slane %v97, 1
  %256 = vst [vmem:[%s111 + $0x10] sm:$0x7f] %v224
  %257 = vst [vmem:[%s111 + $0x28] sm:$0x7f] %v225
  %258 = vst [vmem:[%s111 + $0x40] sm:$0x7f] %v226
  %259 = vst [vmem:[%s111 + $0x58] sm:$0x7f] %v227
  %260 = vst [vmem:[%s111 + $0x70] sm:$0x7f] %v228
  %261 = vst [vmem:[%s111 + $0x88] sm:$0x7f] %v229
  %262 = vst [vmem:[%s111 + $0xa0] sm:$0x7f] %v230
  %263 = vst [vmem:[%s111 + $0xb8] sm:$0x7f] %v231
  %264 = vst [vmem:[%s111 + $0x100] sm:$0x7f] %v232
  %265 = vst [vmem:[%s111 + $0x118] sm:$0x7f] %v233
  %266 = vst [vmem:[%s111 + $0x130] sm:$0x7f] %v234
  %267 = vst [vmem:[%s111 + $0x148] sm:$0x7f] %v235
  %268 = vst [vmem:[%s111 + $0x160] sm:$0x7f] %v236
  %269 = vst [vmem:[%s111 + $0x178] sm:$0x7f] %v237
  %270 = vst [vmem:[%s111 + $0x190] sm:$0x7f] %v238
  %271 = vst [vmem:[%s111 + $0x1a8] sm:$0x7f] %v239
  %v272 = vld [vmem:[#allocation2] sm:$0xff]
  %v273 = vld [vmem:[#allocation2 + $0x8] sm:$0xff]
  %v274 = vld [vmem:[#allocation2 + $0x10] sm:$0xff]
  %v275 = vld [vmem:[#allocation2 + $0x18] sm:$0xff]
  %v276 = vld [vmem:[#allocation2 + $0x20] sm:$0xff]
  %v277 = vld [vmem:[#allocation2 + $0x28] sm:$0xff]
  %v278 = vld [vmem:[#allocation2 + $0x30] sm:$0xff]
  %v279 = vld [vmem:[#allocation2 + $0x38] sm:$0xff]
  %v280 = vld [vmem:[#allocation2 + $0x40] sm:$0xff]
  %v281 = vld [vmem:[#allocation2 + $0x48] sm:$0xff]
  %v282 = vld [vmem:[#allocation2 + $0x50] sm:$0xff]
  %v283 = vld [vmem:[#allocation2 + $0x58] sm:$0xff]
  %v284 = vld [vmem:[#allocation2 + $0x60] sm:$0xff]
  %v285 = vld [vmem:[#allocation2 + $0x68] sm:$0xff]
  %v286 = vld [vmem:[#allocation2 + $0x70] sm:$0xff]
  %v287 = vld [vmem:[#allocation2 + $0x78] sm:$0xff]
  %v288 = vld [vmem:[#allocation2 + $0x80] sm:$0xff]
  %v289 = vld [vmem:[#allocation2 + $0x88] sm:$0xff]
  %v290 = vld [vmem:[#allocation2 + $0x90] sm:$0xff]
  %v291 = vld [vmem:[#allocation2 + $0x98] sm:$0xff]
  %v292 = vld [vmem:[#allocation2 + $0xa0] sm:$0xff]
  %v293 = vld [vmem:[#allocation2 + $0xa8] sm:$0xff]
  %v294 = vld [vmem:[#allocation2 + $0xb0] sm:$0xff]
  %v295 = vld [vmem:[#allocation2 + $0xb8] sm:$0xff]
  %v296 = vld [vmem:[#allocation2 + $0xf0] sm:$0xff]
  %v297 = vld [vmem:[#allocation2 + $0xf8] sm:$0xff]
  %v298 = vld [vmem:[#allocation2 + $0x100] sm:$0xff]
  %v299 = vld [vmem:[#allocation2 + $0x108] sm:$0xff]
  %v300 = vld [vmem:[#allocation2 + $0x110] sm:$0xff]
  %v301 = vld [vmem:[#allocation2 + $0x118] sm:$0xff]
  %v302 = vld [vmem:[#allocation2 + $0x120] sm:$0xff]
  %v303 = vld [vmem:[#allocation2 + $0x128] sm:$0xff]
  %v304 = vld [vmem:[#allocation2 + $0x130] sm:$0xff]
  %v305 = vld [vmem:[#allocation2 + $0x138] sm:$0xff]
  %v306 = vld [vmem:[#allocation2 + $0x140] sm:$0xff]
  %v307 = vld [vmem:[#allocation2 + $0x148] sm:$0xff]
  %v308 = vld [vmem:[#allocation2 + $0x150] sm:$0xff]
  %v309 = vld [vmem:[#allocation2 + $0x158] sm:$0xff]
  %v310 = vld [vmem:[#allocation2 + $0x160] sm:$0xff]
  %v311 = vld [vmem:[#allocation2 + $0x168] sm:$0xff]
  %v312 = vld [vmem:[#allocation2 + $0x170] sm:$0xff]
  %v313 = vld [vmem:[#allocation2 + $0x178] sm:$0xff]
  %v314 = vld [vmem:[#allocation2 + $0x180] sm:$0xff]
  %v315 = vld [vmem:[#allocation2 + $0x188] sm:$0xff]
  %v316 = vld [vmem:[#allocation2 + $0x190] sm:$0xff]
  %v317 = vld [vmem:[#allocation2 + $0x198] sm:$0xff]
  %v318 = vld [vmem:[#allocation2 + $0x1a0] sm:$0xff]
  %v319 = vld [vmem:[#allocation2 + $0x1a8] sm:$0xff]
  %v320 = vld [vmem:[%s3] sm:$0xff]
  %v321 = vld [vmem:[%s3 + $0x8] sm:$0xff]
  %v322 = vld [vmem:[%s3 + $0x10] sm:$0xff]
  %v323 = vld [vmem:[%s3 + $0x18] sm:$0xff]
  %v324 = vld [vmem:[%s3 + $0x20] sm:$0xff]
  %v325 = vld [vmem:[%s3 + $0x28] sm:$0xff]
  %v326 = vld [vmem:[%s3 + $0x30] sm:$0xff]
  %v327 = vld [vmem:[%s3 + $0x38] sm:$0xff]
  %v328 = vld [vmem:[%s3 + $0x40] sm:$0xff]
  %v329 = vld [vmem:[%s3 + $0x48] sm:$0xff]
  %v330 = vld [vmem:[%s3 + $0x50] sm:$0xff]
  %v331 = vld [vmem:[%s3 + $0x58] sm:$0xff]
  %v332 = vld [vmem:[%s3 + $0x60] sm:$0xff]
  %v333 = vld [vmem:[%s3 + $0x68] sm:$0xff]
  %v334 = vld [vmem:[%s3 + $0x70] sm:$0xff]
  %v335 = vld [vmem:[%s3 + $0x78] sm:$0xff]
  %v336 = vld [vmem:[%s3 + $0x80] sm:$0xff]
  %v337 = vld [vmem:[%s3 + $0x88] sm:$0xff]
  %v338 = vld [vmem:[%s3 + $0x90] sm:$0xff]
  %v339 = vld [vmem:[%s3 + $0x98] sm:$0xff]
  %v340 = vld [vmem:[%s3 + $0xa0] sm:$0xff]
  %v341 = vld [vmem:[%s3 + $0xa8] sm:$0xff]
  %v342 = vld [vmem:[%s3 + $0xb0] sm:$0xff]
  %v343 = vld [vmem:[%s3 + $0xb8] sm:$0xff]
  %v344 = vld [vmem:[%s3 + $0xc0] sm:$0xff]
  %v345 = vld [vmem:[%s3 + $0xc8] sm:$0xff]
  %v346 = vld [vmem:[%s3 + $0xd0] sm:$0xff]
  %v347 = vld [vmem:[%s3 + $0xd8] sm:$0xff]
  %v348 = vld [vmem:[%s3 + $0xe0] sm:$0xff]
  %v349 = vld [vmem:[%s3 + $0xe8] sm:$0xff]
  %v350 = vld [vmem:[%s3 + $0xf0] sm:$0xff]
  %v351 = vld [vmem:[%s3 + $0xf8] sm:$0xff]
  %v352 = vld [vmem:[%s3 + $0x100] sm:$0xff]
  %v353 = vld [vmem:[%s3 + $0x108] sm:$0xff]
  %v354 = vld [vmem:[%s3 + $0x110] sm:$0xff]
  %v355 = vld [vmem:[%s3 + $0x118] sm:$0xff]
  %v356 = vld [vmem:[%s3 + $0x120] sm:$0xff]
  %v357 = vld [vmem:[%s3 + $0x128] sm:$0xff]
  %v358 = vld [vmem:[%s3 + $0x130] sm:$0xff]
  %v359 = vld [vmem:[%s3 + $0x138] sm:$0xff]
  %v360 = vld [vmem:[%s3 + $0x140] sm:$0xff]
  %v361 = vld [vmem:[%s3 + $0x148] sm:$0xff]
  %v362 = vld [vmem:[%s3 + $0x150] sm:$0xff]
  %v363 = vld [vmem:[%s3 + $0x158] sm:$0xff]
  %v364 = vld [vmem:[%s3 + $0x160] sm:$0xff]
  %v365 = vld [vmem:[%s3 + $0x168] sm:$0xff]
  %v366 = vld [vmem:[%s3 + $0x170] sm:$0xff]
  %v367 = vld [vmem:[%s3 + $0x178] sm:$0xff]
  %v368 = vld [vmem:[%s111] sm:$0xff]
  %v369 = vld [vmem:[%s111 + $0x8] sm:$0xff]
  %v370 = vld [vmem:[%s111 + $0x10] sm:$0xff]
  %v371 = vld [vmem:[%s111 + $0x18] sm:$0xff]
  %v372 = vld [vmem:[%s111 + $0x20] sm:$0xff]
  %v373 = vld [vmem:[%s111 + $0x28] sm:$0xff]
  %v374 = vld [vmem:[%s111 + $0x30] sm:$0xff]
  %v375 = vld [vmem:[%s111 + $0x38] sm:$0xff]
  %v376 = vld [vmem:[%s111 + $0x40] sm:$0xff]
  %v377 = vld [vmem:[%s111 + $0x48] sm:$0xff]
  %v378 = vld [vmem:[%s111 + $0x50] sm:$0xff]
  %v379 = vld [vmem:[%s111 + $0x58] sm:$0xff]
  %v380 = vld [vmem:[%s111 + $0x60] sm:$0xff]
  %v381 = vld [vmem:[%s111 + $0x68] sm:$0xff]
  %v382 = vld [vmem:[%s111 + $0x70] sm:$0xff]
  %v383 = vld [vmem:[%s111 + $0x78] sm:$0xff]
  %v384 = vld [vmem:[%s111 + $0x80] sm:$0xff]
  %v385 = vld [vmem:[%s111 + $0x88] sm:$0xff]
  %v386 = vld [vmem:[%s111 + $0x90] sm:$0xff]
  %v387 = vld [vmem:[%s111 + $0x98] sm:$0xff]
  %v388 = vld [vmem:[%s111 + $0xa0] sm:$0xff]
  %v389 = vld [vmem:[%s111 + $0xa8] sm:$0xff]
  %v390 = vld [vmem:[%s111 + $0xb0] sm:$0xff]
  %v391 = vld [vmem:[%s111 + $0xb8] sm:$0xff]
  %v392 = vld [vmem:[%s111 + $0xf0] sm:$0xff]
  %v393 = vld [vmem:[%s111 + $0xf8] sm:$0xff]
  %v394 = vld [vmem:[%s111 + $0x100] sm:$0xff]
  %v395 = vld [vmem:[%s111 + $0x108] sm:$0xff]
  %v396 = vld [vmem:[%s111 + $0x110] sm:$0xff]
  %v397 = vld [vmem:[%s111 + $0x118] sm:$0xff]
  %v398 = vld [vmem:[%s111 + $0x120] sm:$0xff]
  %v399 = vld [vmem:[%s111 + $0x128] sm:$0xff]
  %v400 = vld [vmem:[%s111 + $0x130] sm:$0xff]
  %v401 = vld [vmem:[%s111 + $0x138] sm:$0xff]
  %v402 = vld [vmem:[%s111 + $0x140] sm:$0xff]
  %v403 = vld [vmem:[%s111 + $0x148] sm:$0xff]
  %v404 = vld [vmem:[%s111 + $0x150] sm:$0xff]
  %v405 = vld [vmem:[%s111 + $0x158] sm:$0xff]
  %v406 = vld [vmem:[%s111 + $0x160] sm:$0xff]
  %v407 = vld [vmem:[%s111 + $0x168] sm:$0xff]
  %v408 = vld [vmem:[%s111 + $0x170] sm:$0xff]
  %v409 = vld [vmem:[%s111 + $0x178] sm:$0xff]
  %v410 = vld [vmem:[%s111 + $0x180] sm:$0xff]
  %v411 = vld [vmem:[%s111 + $0x188] sm:$0xff]
  %v412 = vld [vmem:[%s111 + $0x190] sm:$0xff]
  %v413 = vld [vmem:[%s111 + $0x198] sm:$0xff]
  %v414 = vld [vmem:[%s111 + $0x1a0] sm:$0xff]
  %v415 = vld [vmem:[%s111 + $0x1a8] sm:$0xff]
  %s416 = scalar_lea.vmem %s3, 384
  %v417 = vld [vmem:[%s416] sm:$0xff]
  %v418 = vld [vmem:[%s416 + $0x8] sm:$0xff]
  %v419 = vld [vmem:[%s416 + $0x10] sm:$0xff]
  %v420 = vld [vmem:[%s416 + $0x18] sm:$0xff]
  %v421 = vld [vmem:[%s416 + $0x20] sm:$0xff]
  %v422 = vld [vmem:[%s416 + $0x28] sm:$0xff]
  %v423 = vld [vmem:[%s416 + $0x30] sm:$0xff]
  %v424 = vld [vmem:[%s416 + $0x38] sm:$0xff]
  %v425 = vld [vmem:[%s416 + $0x40] sm:$0xff]
  %v426 = vld [vmem:[%s416 + $0x48] sm:$0xff]
  %v427 = vld [vmem:[%s416 + $0x50] sm:$0xff]
  %v428 = vld [vmem:[%s416 + $0x58] sm:$0xff]
  %v429 = vld [vmem:[%s416 + $0x60] sm:$0xff]
  %v430 = vld [vmem:[%s416 + $0x68] sm:$0xff]
  %v431 = vld [vmem:[%s416 + $0x70] sm:$0xff]
  %v432 = vld [vmem:[%s416 + $0x78] sm:$0xff]
  %v433 = vld [vmem:[%s416 + $0x80] sm:$0xff]
  %v434 = vld [vmem:[%s416 + $0x88] sm:$0xff]
  %v435 = vld [vmem:[%s416 + $0x90] sm:$0xff]
  %v436 = vld [vmem:[%s416 + $0x98] sm:$0xff]
  %v437 = vld [vmem:[%s416 + $0xa0] sm:$0xff]
  %v438 = vld [vmem:[%s416 + $0xa8] sm:$0xff]
  %v439 = vld [vmem:[%s416 + $0xb0] sm:$0xff]
  %v440 = vld [vmem:[%s416 + $0xb8] sm:$0xff]
  %v441 = vld [vmem:[%s416 + $0xc0] sm:$0xff]
  %v442 = vld [vmem:[%s416 + $0xc8] sm:$0xff]
  %v443 = vld [vmem:[%s416 + $0xd0] sm:$0xff]
  %v444 = vld [vmem:[%s416 + $0xd8] sm:$0xff]
  %v445 = vld [vmem:[%s416 + $0xe0] sm:$0xff]
  %v446 = vld [vmem:[%s416 + $0xe8] sm:$0xff]
  %v447 = vld [vmem:[%s416 + $0xf0] sm:$0xff]
  %v448 = vld [vmem:[%s416 + $0xf8] sm:$0xff]
  %v449 = vld [vmem:[%s416 + $0x100] sm:$0xff]
  %v450 = vld [vmem:[%s416 + $0x108] sm:$0xff]
  %v451 = vld [vmem:[%s416 + $0x110] sm:$0xff]
  %v452 = vld [vmem:[%s416 + $0x118] sm:$0xff]
  %v453 = vld [vmem:[%s416 + $0x120] sm:$0xff]
  %v454 = vld [vmem:[%s416 + $0x128] sm:$0xff]
  %v455 = vld [vmem:[%s416 + $0x130] sm:$0xff]
  %v456 = vld [vmem:[%s416 + $0x138] sm:$0xff]
  %v457 = vld [vmem:[%s416 + $0x140] sm:$0xff]
  %v458 = vld [vmem:[%s416 + $0x148] sm:$0xff]
  %v459 = vld [vmem:[%s416 + $0x150] sm:$0xff]
  %v460 = vld [vmem:[%s416 + $0x158] sm:$0xff]
  %v461 = vld [vmem:[%s416 + $0x160] sm:$0xff]
  %v462 = vld [vmem:[%s416 + $0x168] sm:$0xff]
  %v463 = vld [vmem:[%s416 + $0x170] sm:$0xff]
  %v464 = vld [vmem:[%s416 + $0x178] sm:$0xff]
  %465 = vmatprep.subr.mxu0 0.0
  %466 = vmatpush1.msra.mxu0 %v432
  %467 = vmatprep.subr.mxu0 0.0
  %468 = vmatpush1.msra.mxu0 %v431
  %469 = vmatprep.subr.mxu0 0.0
  %470 = vmatpush1.msra.mxu0 %v430
  %471 = vmatprep.subr.mxu0 0.0
  %472 = vmatpush1.msra.mxu0 %v429
  %473 = vmatprep.subr.mxu0 0.0
  %474 = vmatpush1.msra.mxu0 %v428
  %475 = vmatprep.subr.mxu0 0.0
  %476 = vmatpush1.msra.mxu0 %v427
  %477 = vmatprep.subr.mxu0 0.0
  %478 = vmatpush1.msra.mxu0 %v426
  %479 = vmatprep.subr.mxu0 0.0
  %480 = vmatpush1.msra.mxu0 %v425
  %481 = vmatprep.subr.mxu0 0.0
  %482 = vmatpush1.msra.mxu0 %v424
  %483 = vmatprep.subr.mxu0 0.0
  %484 = vmatpush1.msra.mxu0 %v423
  %485 = vmatprep.subr.mxu0 0.0
  %486 = vmatpush1.msra.mxu0 %v422
  %487 = vmatprep.subr.mxu0 0.0
  %488 = vmatpush1.msra.mxu0 %v421
  %489 = vmatprep.subr.mxu0 0.0
  %490 = vmatpush1.msra.mxu0 %v420
  %491 = vmatprep.subr.mxu0 0.0
  %492 = vmatpush1.msra.mxu0 %v419
  %493 = vmatprep.subr.mxu0 0.0
  %494 = vmatpush1.msra.mxu0 %v418
  %495 = vmatprep.subr.mxu0 0.0
  %496 = vmatpush1.msra.mxu0 %v417
  %497 = vmatprep.subr.mxu0 0.0
  %498 = vmatpush2.msra.mxu0 %v448
  %499 = vmatprep.subr.mxu0 0.0
  %500 = vmatpush2.msra.mxu0 %v447
  %501 = vmatprep.subr.mxu0 0.0
  %502 = vmatpush2.msra.mxu0 %v446
  %503 = vmatprep.subr.mxu0 0.0
  %504 = vmatpush2.msra.mxu0 %v445
  %505 = vmatprep.subr.mxu0 0.0
  %506 = vmatpush2.msra.mxu0 %v444
  %507 = vmatprep.subr.mxu0 0.0
  %508 = vmatpush2.msra.mxu0 %v443
  %509 = vmatprep.subr.mxu0 0.0
  %510 = vmatpush2.msra.mxu0 %v442
  %511 = vmatprep.subr.mxu0 0.0
  %512 = vmatpush2.msra.mxu0 %v441
  %513 = vmatprep.subr.mxu0 0.0
  %514 = vmatpush2.msra.mxu0 %v440
  %515 = vmatprep.subr.mxu0 0.0
  %516 = vmatpush2.msra.mxu0 %v439
  %517 = vmatprep.subr.mxu0 0.0
  %518 = vmatpush2.msra.mxu0 %v438
  %519 = vmatprep.subr.mxu0 0.0
  %520 = vmatpush2.msra.mxu0 %v437
  %521 = vmatprep.subr.mxu0 0.0
  %522 = vmatpush2.msra.mxu0 %v436
  %523 = vmatprep.subr.mxu0 0.0
  %524 = vmatpush2.msra.mxu0 %v435
  %525 = vmatprep.subr.mxu0 0.0
  %526 = vmatpush2.msra.mxu0 %v434
  %527 = vmatprep.subr.mxu0 0.0
  %528 = vmatpush2.msra.mxu0 %v433
  %529 = vmatprep.mubr.f32.mxu0 %v369
  %530 = vmatmul.mubr.f32.gmra.mxu0 %v368
  %v531 = vpop.f32.mrf.mxu0
  %v532 = vadd.f32 0.0, %v531
  %v533 = vpop.f32.mrf.mxu0
  %534 = vmatprep.mubr.f32.mxu0 %v372
  %535 = vmatmul.mubr.f32.gmra.mxu0 %v371
  %v536 = vpop.f32.mrf.mxu0
  %v537 = vadd.f32 0.0, %v536
  %v538 = vpop.f32.mrf.mxu0
  %539 = vmatprep.mubr.f32.mxu0 %v375
  %540 = vmatmul.mubr.f32.gmra.mxu0 %v374
  %v541 = vpop.f32.mrf.mxu0
  %v542 = vadd.f32 0.0, %v541
  %v543 = vpop.f32.mrf.mxu0
  %544 = vmatprep.mubr.f32.mxu0 %v378
  %545 = vmatmul.mubr.f32.gmra.mxu0 %v377
  %v546 = vpop.f32.mrf.mxu0
  %v547 = vadd.f32 0.0, %v546
  %v548 = vpop.f32.mrf.mxu0
  %549 = vmatprep.mubr.f32.mxu0 %v381
  %550 = vmatmul.mubr.f32.gmra.mxu0 %v380
  %v551 = vpop.f32.mrf.mxu0
  %v552 = vadd.f32 0.0, %v551
  %v553 = vpop.f32.mrf.mxu0
  %554 = vmatprep.mubr.f32.mxu0 %v384
  %555 = vmatmul.mubr.f32.gmra.mxu0 %v383
  %v556 = vpop.f32.mrf.mxu0
  %v557 = vadd.f32 0.0, %v556
  %v558 = vpop.f32.mrf.mxu0
  %559 = vmatprep.mubr.f32.mxu0 %v387
  %560 = vmatmul.mubr.f32.gmra.mxu0 %v386
  %v561 = vpop.f32.mrf.mxu0
  %v562 = vadd.f32 0.0, %v561
  %v563 = vpop.f32.mrf.mxu0
  %564 = vmatprep.mubr.f32.mxu0 %v390
  %565 = vmatmul.mubr.f32.gmra.mxu0 %v389
  %v566 = vpop.f32.mrf.mxu0
  %v567 = vadd.f32 0.0, %v566
  %v568 = vpop.f32.mrf.mxu0
  %569 = vmatprep.mubr.f32.mxu0 %v393
  %570 = vmatmul.mubr.f32.gmra.mxu0 %v392
  %v571 = vpop.f32.mrf.mxu0
  %v572 = vadd.f32 0.0, %v571
  %v573 = vpop.f32.mrf.mxu0
  %574 = vmatprep.mubr.f32.mxu0 %v396
  %575 = vmatmul.mubr.f32.gmra.mxu0 %v395
  %v576 = vpop.f32.mrf.mxu0
  %v577 = vadd.f32 0.0, %v576
  %v578 = vpop.f32.mrf.mxu0
  %579 = vmatprep.mubr.f32.mxu0 %v399
  %580 = vmatmul.mubr.f32.gmra.mxu0 %v398
  %v581 = vpop.f32.mrf.mxu0
  %v582 = vadd.f32 0.0, %v581
  %v583 = vpop.f32.mrf.mxu0
  %584 = vmatprep.mubr.f32.mxu0 %v402
  %585 = vmatmul.mubr.f32.gmra.mxu0 %v401
  %v586 = vpop.f32.mrf.mxu0
  %v587 = vadd.f32 0.0, %v586
  %v588 = vpop.f32.mrf.mxu0
  %589 = vmatprep.mubr.f32.mxu0 %v405
  %590 = vmatmul.mubr.f32.gmra.mxu0 %v404
  %v591 = vpop.f32.mrf.mxu0
  %v592 = vadd.f32 0.0, %v591
  %v593 = vpop.f32.mrf.mxu0
  %594 = vmatprep.mubr.f32.mxu0 %v408
  %595 = vmatmul.mubr.f32.gmra.mxu0 %v407
  %v596 = vpop.f32.mrf.mxu0
  %v597 = vadd.f32 0.0, %v596
  %v598 = vpop.f32.mrf.mxu0
  %599 = vmatprep.mubr.f32.mxu0 %v411
  %600 = vmatmul.mubr.f32.gmra.mxu0 %v410
  %v601 = vpop.f32.mrf.mxu0
  %v602 = vadd.f32 0.0, %v601
  %v603 = vpop.f32.mrf.mxu0
  %604 = vmatprep.mubr.f32.mxu0 %v414
  %605 = vmatmul.mubr.f32.gmra.mxu0 %v413
  %v606 = vpop.f32.mrf.mxu0
  %v607 = vadd.f32 0.0, %v606
  %v608 = vpop.f32.mrf.mxu0
  %609 = vdwg.mxu0
  %610 = vmatprep.subr.mxu0 0.0
  %611 = vmatpush1.msra.mxu0 %v464
  %612 = vmatprep.subr.mxu0 0.0
  %613 = vmatpush1.msra.mxu0 %v463
  %614 = vmatprep.subr.mxu0 0.0
  %615 = vmatpush1.msra.mxu0 %v462
  %616 = vmatprep.subr.mxu0 0.0
  %617 = vmatpush1.msra.mxu0 %v461
  %618 = vmatprep.subr.mxu0 0.0
  %619 = vmatpush1.msra.mxu0 %v460
  %620 = vmatprep.subr.mxu0 0.0
  %621 = vmatpush1.msra.mxu0 %v459
  %622 = vmatprep.subr.mxu0 0.0
  %623 = vmatpush1.msra.mxu0 %v458
  %624 = vmatprep.subr.mxu0 0.0
  %625 = vmatpush1.msra.mxu0 %v457
  %626 = vmatprep.subr.mxu0 0.0
  %627 = vmatpush1.msra.mxu0 %v456
  %628 = vmatprep.subr.mxu0 0.0
  %629 = vmatpush1.msra.mxu0 %v455
  %630 = vmatprep.subr.mxu0 0.0
  %631 = vmatpush1.msra.mxu0 %v454
  %632 = vmatprep.subr.mxu0 0.0
  %633 = vmatpush1.msra.mxu0 %v453
  %634 = vmatprep.subr.mxu0 0.0
  %635 = vmatpush1.msra.mxu0 %v452
  %636 = vmatprep.subr.mxu0 0.0
  %637 = vmatpush1.msra.mxu0 %v451
  %638 = vmatprep.subr.mxu0 0.0
  %639 = vmatpush1.msra.mxu0 %v450
  %640 = vmatprep.subr.mxu0 0.0
  %641 = vmatpush1.msra.mxu0 %v449
  %642 = vmatprep.subr.mxu0 0.0
  %643 = vmatpush2.msra.mxu0 0.0
  %644 = vmatprep.subr.mxu0 0.0
  %645 = vmatpush2.msra.mxu0 0.0
  %646 = vmatprep.subr.mxu0 0.0
  %647 = vmatpush2.msra.mxu0 0.0
  %648 = vmatprep.subr.mxu0 0.0
  %649 = vmatpush2.msra.mxu0 0.0
  %650 = vmatprep.subr.mxu0 0.0
  %651 = vmatpush2.msra.mxu0 0.0
  %652 = vmatprep.subr.mxu0 0.0
  %653 = vmatpush2.msra.mxu0 0.0
  %654 = vmatprep.subr.mxu0 0.0
  %655 = vmatpush2.msra.mxu0 0.0
  %656 = vmatprep.subr.mxu0 0.0
  %657 = vmatpush2.msra.mxu0 0.0
  %658 = vmatprep.subr.mxu0 0.0
  %659 = vmatpush2.msra.mxu0 0.0
  %660 = vmatprep.subr.mxu0 0.0
  %661 = vmatpush2.msra.mxu0 0.0
  %662 = vmatprep.subr.mxu0 0.0
  %663 = vmatpush2.msra.mxu0 0.0
  %664 = vmatprep.subr.mxu0 0.0
  %665 = vmatpush2.msra.mxu0 0.0
  %666 = vmatprep.subr.mxu0 0.0
  %667 = vmatpush2.msra.mxu0 0.0
  %668 = vmatprep.subr.mxu0 0.0
  %669 = vmatpush2.msra.mxu0 0.0
  %670 = vmatprep.subr.mxu0 0.0
  %671 = vmatpush2.msra.mxu0 0.0
  %672 = vmatprep.subr.mxu0 0.0
  %673 = vmatpush2.msra.mxu0 0.0
  %674 = vmatprep.mubr.f32.mxu0 0.0
  %675 = vmatmul.mubr.f32.gmra.mxu0 %v370
  %v676 = vpop.f32.mrf.mxu0
  %v677 = vadd.f32 %v532, %v676
  %v678 = vpop.f32.mrf.mxu0
  %679 = vmatprep.mubr.f32.mxu0 0.0
  %680 = vmatmul.mubr.f32.gmra.mxu0 %v373
  %v681 = vpop.f32.mrf.mxu0
  %v682 = vadd.f32 %v537, %v681
  %v683 = vpop.f32.mrf.mxu0
  %684 = vmatprep.mubr.f32.mxu0 0.0
  %685 = vmatmul.mubr.f32.gmra.mxu0 %v376
  %v686 = vpop.f32.mrf.mxu0
  %v687 = vadd.f32 %v542, %v686
  %v688 = vpop.f32.mrf.mxu0
  %689 = vmatprep.mubr.f32.mxu0 0.0
  %690 = vmatmul.mubr.f32.gmra.mxu0 %v379
  %v691 = vpop.f32.mrf.mxu0
  %v692 = vadd.f32 %v547, %v691
  %v693 = vpop.f32.mrf.mxu0
  %694 = vmatprep.mubr.f32.mxu0 0.0
  %695 = vmatmul.mubr.f32.gmra.mxu0 %v382
  %v696 = vpop.f32.mrf.mxu0
  %v697 = vadd.f32 %v552, %v696
  %v698 = vpop.f32.mrf.mxu0
  %699 = vmatprep.mubr.f32.mxu0 0.0
  %700 = vmatmul.mubr.f32.gmra.mxu0 %v385
  %v701 = vpop.f32.mrf.mxu0
  %v702 = vadd.f32 %v557, %v701
  %v703 = vpop.f32.mrf.mxu0
  %704 = vmatprep.mubr.f32.mxu0 0.0
  %705 = vmatmul.mubr.f32.gmra.mxu0 %v388
  %v706 = vpop.f32.mrf.mxu0
  %v707 = vadd.f32 %v562, %v706
  %v708 = vpop.f32.mrf.mxu0
  %709 = vmatprep.mubr.f32.mxu0 0.0
  %710 = vmatmul.mubr.f32.gmra.mxu0 %v391
  %v711 = vpop.f32.mrf.mxu0
  %v712 = vadd.f32 %v567, %v711
  %v713 = vpop.f32.mrf.mxu0
  %714 = vmatprep.mubr.f32.mxu0 0.0
  %715 = vmatmul.mubr.f32.gmra.mxu0 %v394
  %v716 = vpop.f32.mrf.mxu0
  %v717 = vadd.f32 %v572, %v716
  %v718 = vpop.f32.mrf.mxu0
  %719 = vmatprep.mubr.f32.mxu0 0.0
  %720 = vmatmul.mubr.f32.gmra.mxu0 %v397
  %v721 = vpop.f32.mrf.mxu0
  %v722 = vadd.f32 %v577, %v721
  %v723 = vpop.f32.mrf.mxu0
  %724 = vmatprep.mubr.f32.mxu0 0.0
  %725 = vmatmul.mubr.f32.gmra.mxu0 %v400
  %v726 = vpop.f32.mrf.mxu0
  %v727 = vadd.f32 %v582, %v726
  %v728 = vpop.f32.mrf.mxu0
  %729 = vmatprep.mubr.f32.mxu0 0.0
  %730 = vmatmul.mubr.f32.gmra.mxu0 %v403
  %v731 = vpop.f32.mrf.mxu0
  %v732 = vadd.f32 %v587, %v731
  %v733 = vpop.f32.mrf.mxu0
  %734 = vmatprep.mubr.f32.mxu0 0.0
  %735 = vmatmul.mubr.f32.gmra.mxu0 %v406
  %v736 = vpop.f32.mrf.mxu0
  %v737 = vadd.f32 %v592, %v736
  %v738 = vpop.f32.mrf.mxu0
  %739 = vmatprep.mubr.f32.mxu0 0.0
  %740 = vmatmul.mubr.f32.gmra.mxu0 %v409
  %v741 = vpop.f32.mrf.mxu0
  %v742 = vadd.f32 %v597, %v741
  %v743 = vpop.f32.mrf.mxu0
  %744 = vmatprep.mubr.f32.mxu0 0.0
  %745 = vmatmul.mubr.f32.gmra.mxu0 %v412
  %v746 = vpop.f32.mrf.mxu0
  %v747 = vadd.f32 %v602, %v746
  %v748 = vpop.f32.mrf.mxu0
  %749 = vmatprep.mubr.f32.mxu0 0.0
  %750 = vmatmul.mubr.f32.gmra.mxu0 %v415
  %v751 = vpop.f32.mrf.mxu0
  %v752 = vadd.f32 %v607, %v751
  %v753 = vpop.f32.mrf.mxu0
  %754 = vdwg.mxu0
  %755 = vmatprep.subr.mxu0 0.0
  %756 = vmatpush1.msra.mxu0 %v335
  %757 = vmatprep.subr.mxu0 0.0
  %758 = vmatpush1.msra.mxu0 %v334
  %759 = vmatprep.subr.mxu0 0.0
  %760 = vmatpush1.msra.mxu0 %v333
  %761 = vmatprep.subr.mxu0 0.0
  %762 = vmatpush1.msra.mxu0 %v332
  %763 = vmatprep.subr.mxu0 0.0
  %764 = vmatpush1.msra.mxu0 %v331
  %765 = vmatprep.subr.mxu0 0.0
  %766 = vmatpush1.msra.mxu0 %v330
  %767 = vmatprep.subr.mxu0 0.0
  %768 = vmatpush1.msra.mxu0 %v329
  %769 = vmatprep.subr.mxu0 0.0
  %770 = vmatpush1.msra.mxu0 %v328
  %771 = vmatprep.subr.mxu0 0.0
  %772 = vmatpush1.msra.mxu0 %v327
  %773 = vmatprep.subr.mxu0 0.0
  %774 = vmatpush1.msra.mxu0 %v326
  %775 = vmatprep.subr.mxu0 0.0
  %776 = vmatpush1.msra.mxu0 %v325
  %777 = vmatprep.subr.mxu0 0.0
  %778 = vmatpush1.msra.mxu0 %v324
  %779 = vmatprep.subr.mxu0 0.0
  %780 = vmatpush1.msra.mxu0 %v323
  %781 = vmatprep.subr.mxu0 0.0
  %782 = vmatpush1.msra.mxu0 %v322
  %783 = vmatprep.subr.mxu0 0.0
  %784 = vmatpush1.msra.mxu0 %v321
  %785 = vmatprep.subr.mxu0 0.0
  %786 = vmatpush1.msra.mxu0 %v320
  %787 = vmatprep.subr.mxu0 0.0
  %788 = vmatpush2.msra.mxu0 %v351
  %789 = vmatprep.subr.mxu0 0.0
  %790 = vmatpush2.msra.mxu0 %v350
  %791 = vmatprep.subr.mxu0 0.0
  %792 = vmatpush2.msra.mxu0 %v349
  %793 = vmatprep.subr.mxu0 0.0
  %794 = vmatpush2.msra.mxu0 %v348
  %795 = vmatprep.subr.mxu0 0.0
  %796 = vmatpush2.msra.mxu0 %v347
  %797 = vmatprep.subr.mxu0 0.0
  %798 = vmatpush2.msra.mxu0 %v346
  %799 = vmatprep.subr.mxu0 0.0
  %800 = vmatpush2.msra.mxu0 %v345
  %801 = vmatprep.subr.mxu0 0.0
  %802 = vmatpush2.msra.mxu0 %v344
  %803 = vmatprep.subr.mxu0 0.0
  %804 = vmatpush2.msra.mxu0 %v343
  %805 = vmatprep.subr.mxu0 0.0
  %806 = vmatpush2.msra.mxu0 %v342
  %807 = vmatprep.subr.mxu0 0.0
  %808 = vmatpush2.msra.mxu0 %v341
  %809 = vmatprep.subr.mxu0 0.0
  %810 = vmatpush2.msra.mxu0 %v340
  %811 = vmatprep.subr.mxu0 0.0
  %812 = vmatpush2.msra.mxu0 %v339
  %813 = vmatprep.subr.mxu0 0.0
  %814 = vmatpush2.msra.mxu0 %v338
  %815 = vmatprep.subr.mxu0 0.0
  %816 = vmatpush2.msra.mxu0 %v337
  %817 = vmatprep.subr.mxu0 0.0
  %818 = vmatpush2.msra.mxu0 %v336
  %819 = vmatprep.mubr.f32.mxu0 %v273
  %820 = vmatmul.mubr.f32.gmra.mxu0 %v272
  %v821 = vpop.f32.mrf.mxu0
  %v822 = vadd.f32 %v677, %v821
  %v823 = vpop.f32.mrf.mxu0
  %824 = vmatprep.mubr.f32.mxu0 %v276
  %825 = vmatmul.mubr.f32.gmra.mxu0 %v275
  %v826 = vpop.f32.mrf.mxu0
  %v827 = vadd.f32 %v682, %v826
  %v828 = vpop.f32.mrf.mxu0
  %829 = vmatprep.mubr.f32.mxu0 %v279
  %830 = vmatmul.mubr.f32.gmra.mxu0 %v278
  %v831 = vpop.f32.mrf.mxu0
  %v832 = vadd.f32 %v687, %v831
  %v833 = vpop.f32.mrf.mxu0
  %834 = vmatprep.mubr.f32.mxu0 %v282
  %835 = vmatmul.mubr.f32.gmra.mxu0 %v281
  %v836 = vpop.f32.mrf.mxu0
  %v837 = vadd.f32 %v692, %v836
  %v838 = vpop.f32.mrf.mxu0
  %839 = vmatprep.mubr.f32.mxu0 %v285
  %840 = vmatmul.mubr.f32.gmra.mxu0 %v284
  %v841 = vpop.f32.mrf.mxu0
  %v842 = vadd.f32 %v697, %v841
  %v843 = vpop.f32.mrf.mxu0
  %844 = vmatprep.mubr.f32.mxu0 %v288
  %845 = vmatmul.mubr.f32.gmra.mxu0 %v287
  %v846 = vpop.f32.mrf.mxu0
  %v847 = vadd.f32 %v702, %v846
  %v848 = vpop.f32.mrf.mxu0
  %849 = vmatprep.mubr.f32.mxu0 %v291
  %850 = vmatmul.mubr.f32.gmra.mxu0 %v290
  %v851 = vpop.f32.mrf.mxu0
  %v852 = vadd.f32 %v707, %v851
  %v853 = vpop.f32.mrf.mxu0
  %854 = vmatprep.mubr.f32.mxu0 %v294
  %855 = vmatmul.mubr.f32.gmra.mxu0 %v293
  %v856 = vpop.f32.mrf.mxu0
  %v857 = vadd.f32 %v712, %v856
  %v858 = vpop.f32.mrf.mxu0
  %859 = vmatprep.mubr.f32.mxu0 %v297
  %860 = vmatmul.mubr.f32.gmra.mxu0 %v296
  %v861 = vpop.f32.mrf.mxu0
  %v862 = vadd.f32 %v717, %v861
  %v863 = vpop.f32.mrf.mxu0
  %864 = vmatprep.mubr.f32.mxu0 %v300
  %865 = vmatmul.mubr.f32.gmra.mxu0 %v299
  %v866 = vpop.f32.mrf.mxu0
  %v867 = vadd.f32 %v722, %v866
  %v868 = vpop.f32.mrf.mxu0
  %869 = vmatprep.mubr.f32.mxu0 %v303
  %870 = vmatmul.mubr.f32.gmra.mxu0 %v302
  %v871 = vpop.f32.mrf.mxu0
  %v872 = vadd.f32 %v727, %v871
  %v873 = vpop.f32.mrf.mxu0
  %874 = vmatprep.mubr.f32.mxu0 %v306
  %875 = vmatmul.mubr.f32.gmra.mxu0 %v305
  %v876 = vpop.f32.mrf.mxu0
  %v877 = vadd.f32 %v732, %v876
  %v878 = vpop.f32.mrf.mxu0
  %879 = vmatprep.mubr.f32.mxu0 %v309
  %880 = vmatmul.mubr.f32.gmra.mxu0 %v308
  %v881 = vpop.f32.mrf.mxu0
  %v882 = vadd.f32 %v737, %v881
  %v883 = vpop.f32.mrf.mxu0
  %884 = vmatprep.mubr.f32.mxu0 %v312
  %885 = vmatmul.mubr.f32.gmra.mxu0 %v311
  %v886 = vpop.f32.mrf.mxu0
  %v887 = vadd.f32 %v742, %v886
  %v888 = vpop.f32.mrf.mxu0
  %889 = vmatprep.mubr.f32.mxu0 %v315
  %890 = vmatmul.mubr.f32.gmra.mxu0 %v314
  %v891 = vpop.f32.mrf.mxu0
  %v892 = vadd.f32 %v747, %v891
  %v893 = vpop.f32.mrf.mxu0
  %894 = vmatprep.mubr.f32.mxu0 %v318
  %895 = vmatmul.mubr.f32.gmra.mxu0 %v317
  %v896 = vpop.f32.mrf.mxu0
  %v897 = vadd.f32 %v752, %v896
  %v898 = vpop.f32.mrf.mxu0
  %899 = vdwg.mxu0
  %900 = vmatprep.subr.mxu0 0.0
  %901 = vmatpush1.msra.mxu0 %v367
  %902 = vmatprep.subr.mxu0 0.0
  %903 = vmatpush1.msra.mxu0 %v366
  %904 = vmatprep.subr.mxu0 0.0
  %905 = vmatpush1.msra.mxu0 %v365
  %906 = vmatprep.subr.mxu0 0.0
  %907 = vmatpush1.msra.mxu0 %v364
  %908 = vmatprep.subr.mxu0 0.0
  %909 = vmatpush1.msra.mxu0 %v363
  %910 = vmatprep.subr.mxu0 0.0
  %911 = vmatpush1.msra.mxu0 %v362
  %912 = vmatprep.subr.mxu0 0.0
  %913 = vmatpush1.msra.mxu0 %v361
  %914 = vmatprep.subr.mxu0 0.0
  %915 = vmatpush1.msra.mxu0 %v360
  %916 = vmatprep.subr.mxu0 0.0
  %917 = vmatpush1.msra.mxu0 %v359
  %918 = vmatprep.subr.mxu0 0.0
  %919 = vmatpush1.msra.mxu0 %v358
  %920 = vmatprep.subr.mxu0 0.0
  %921 = vmatpush1.msra.mxu0 %v357
  %922 = vmatprep.subr.mxu0 0.0
  %923 = vmatpush1.msra.mxu0 %v356
  %924 = vmatprep.subr.mxu0 0.0
  %925 = vmatpush1.msra.mxu0 %v355
  %926 = vmatprep.subr.mxu0 0.0
  %927 = vmatpush1.msra.mxu0 %v354
  %928 = vmatprep.subr.mxu0 0.0
  %929 = vmatpush1.msra.mxu0 %v353
  %930 = vmatprep.subr.mxu0 0.0
  %931 = vmatpush1.msra.mxu0 %v352
  %932 = vmatprep.subr.mxu0 0.0
  %933 = vmatpush2.msra.mxu0 0.0
  %934 = vmatprep.subr.mxu0 0.0
  %935 = vmatpush2.msra.mxu0 0.0
  %936 = vmatprep.subr.mxu0 0.0
  %937 = vmatpush2.msra.mxu0 0.0
  %938 = vmatprep.subr.mxu0 0.0
  %939 = vmatpush2.msra.mxu0 0.0
  %940 = vmatprep.subr.mxu0 0.0
  %941 = vmatpush2.msra.mxu0 0.0
  %942 = vmatprep.subr.mxu0 0.0
  %943 = vmatpush2.msra.mxu0 0.0
  %944 = vmatprep.subr.mxu0 0.0
  %945 = vmatpush2.msra.mxu0 0.0
  %946 = vmatprep.subr.mxu0 0.0
  %947 = vmatpush2.msra.mxu0 0.0
  %948 = vmatprep.subr.mxu0 0.0
  %949 = vmatpush2.msra.mxu0 0.0
  %950 = vmatprep.subr.mxu0 0.0
  %951 = vmatpush2.msra.mxu0 0.0
  %952 = vmatprep.subr.mxu0 0.0
  %953 = vmatpush2.msra.mxu0 0.0
  %954 = vmatprep.subr.mxu0 0.0
  %955 = vmatpush2.msra.mxu0 0.0
  %956 = vmatprep.subr.mxu0 0.0
  %957 = vmatpush2.msra.mxu0 0.0
  %958 = vmatprep.subr.mxu0 0.0
  %959 = vmatpush2.msra.mxu0 0.0
  %960 = vmatprep.subr.mxu0 0.0
  %961 = vmatpush2.msra.mxu0 0.0
  %962 = vmatprep.subr.mxu0 0.0
  %963 = vmatpush2.msra.mxu0 0.0
  %964 = vmatprep.mubr.f32.mxu0 0.0
  %965 = vmatmul.mubr.f32.gmra.mxu0 %v274
  %v966 = vpop.f32.mrf.mxu0
  %v967 = vadd.f32 %v822, %v966
  %v968 = vpop.f32.mrf.mxu0
  %969 = vmatprep.mubr.f32.mxu0 0.0
  %970 = vmatmul.mubr.f32.gmra.mxu0 %v277
  %v971 = vpop.f32.mrf.mxu0
  %v972 = vadd.f32 %v827, %v971
  %v973 = vpop.f32.mrf.mxu0
  %974 = vmatprep.mubr.f32.mxu0 0.0
  %975 = vmatmul.mubr.f32.gmra.mxu0 %v280
  %v976 = vpop.f32.mrf.mxu0
  %v977 = vadd.f32 %v832, %v976
  %v978 = vpop.f32.mrf.mxu0
  %979 = vmatprep.mubr.f32.mxu0 0.0
  %980 = vmatmul.mubr.f32.gmra.mxu0 %v283
  %v981 = vpop.f32.mrf.mxu0
  %v982 = vadd.f32 %v837, %v981
  %v983 = vpop.f32.mrf.mxu0
  %984 = vmatprep.mubr.f32.mxu0 0.0
  %985 = vmatmul.mubr.f32.gmra.mxu0 %v286
  %v986 = vpop.f32.mrf.mxu0
  %v987 = vadd.f32 %v842, %v986
  %v988 = vpop.f32.mrf.mxu0
  %989 = vmatprep.mubr.f32.mxu0 0.0
  %990 = vmatmul.mubr.f32.gmra.mxu0 %v289
  %v991 = vpop.f32.mrf.mxu0
  %v992 = vadd.f32 %v847, %v991
  %v993 = vpop.f32.mrf.mxu0
  %994 = vmatprep.mubr.f32.mxu0 0.0
  %995 = vmatmul.mubr.f32.gmra.mxu0 %v292
  %v996 = vpop.f32.mrf.mxu0
  %v997 = vadd.f32 %v852, %v996
  %v998 = vpop.f32.mrf.mxu0
  %999 = vmatprep.mubr.f32.mxu0 0.0
  %1000 = vmatmul.mubr.f32.gmra.mxu0 %v295
  %v1001 = vpop.f32.mrf.mxu0
  %v1002 = vadd.f32 %v857, %v1001
  %v1003 = vpop.f32.mrf.mxu0
  %1004 = vmatprep.mubr.f32.mxu0 0.0
  %1005 = vmatmul.mubr.f32.gmra.mxu0 %v298
  %v1006 = vpop.f32.mrf.mxu0
  %v1007 = vadd.f32 %v862, %v1006
  %v1008 = vpop.f32.mrf.mxu0
  %1009 = vmatprep.mubr.f32.mxu0 0.0
  %1010 = vmatmul.mubr.f32.gmra.mxu0 %v301
  %v1011 = vpop.f32.mrf.mxu0
  %v1012 = vadd.f32 %v867, %v1011
  %v1013 = vpop.f32.mrf.mxu0
  %1014 = vmatprep.mubr.f32.mxu0 0.0
  %1015 = vmatmul.mubr.f32.gmra.mxu0 %v304
  %v1016 = vpop.f32.mrf.mxu0
  %v1017 = vadd.f32 %v872, %v1016
  %v1018 = vpop.f32.mrf.mxu0
  %1019 = vmatprep.mubr.f32.mxu0 0.0
  %1020 = vmatmul.mubr.f32.gmra.mxu0 %v307
  %v1021 = vpop.f32.mrf.mxu0
  %v1022 = vadd.f32 %v877, %v1021
  %v1023 = vpop.f32.mrf.mxu0
  %1024 = vmatprep.mubr.f32.mxu0 0.0
  %1025 = vmatmul.mubr.f32.gmra.mxu0 %v310
  %v1026 = vpop.f32.mrf.mxu0
  %v1027 = vadd.f32 %v882, %v1026
  %v1028 = vpop.f32.mrf.mxu0
  %1029 = vmatprep.mubr.f32.mxu0 0.0
  %1030 = vmatmul.mubr.f32.gmra.mxu0 %v313
  %v1031 = vpop.f32.mrf.mxu0
  %v1032 = vadd.f32 %v887, %v1031
  %v1033 = vpop.f32.mrf.mxu0
  %1034 = vmatprep.mubr.f32.mxu0 0.0
  %1035 = vmatmul.mubr.f32.gmra.mxu0 %v316
  %v1036 = vpop.f32.mrf.mxu0
  %v1037 = vadd.f32 %v892, %v1036
  %v1038 = vpop.f32.mrf.mxu0
  %1039 = vmatprep.mubr.f32.mxu0 0.0
  %1040 = vmatmul.mubr.f32.gmra.mxu0 %v319
  %v1041 = vpop.f32.mrf.mxu0
  %v1042 = vadd.f32 %v897, %v1041
  %v1043 = vpop.f32.mrf.mxu0
  %1044 = vdwg.mxu0
  %s1045 = scalar_lea.vmem [#allocation2], 48
  %v1046 = vld [vmem:[%s1045] sm:$0xff]
  %v1047 = vld [vmem:[%s1045 + $0x8] sm:$0xff]
  %v1048 = vld [vmem:[%s1045 + $0x10] sm:$0xff]
  %v1049 = vld [vmem:[%s1045 + $0x18] sm:$0xff]
  %v1050 = vld [vmem:[%s1045 + $0x20] sm:$0xff]
  %v1051 = vld [vmem:[%s1045 + $0x28] sm:$0xff]
  %v1052 = vld [vmem:[%s1045 + $0x30] sm:$0xff]
  %v1053 = vld [vmem:[%s1045 + $0x38] sm:$0xff]
  %v1054 = vld [vmem:[%s1045 + $0x40] sm:$0xff]
  %v1055 = vld [vmem:[%s1045 + $0x48] sm:$0xff]
  %v1056 = vld [vmem:[%s1045 + $0x50] sm:$0xff]
  %v1057 = vld [vmem:[%s1045 + $0x58] sm:$0xff]
  %v1058 = vld [vmem:[%s1045 + $0x60] sm:$0xff]
  %v1059 = vld [vmem:[%s1045 + $0x68] sm:$0xff]
  %v1060 = vld [vmem:[%s1045 + $0x70] sm:$0xff]
  %v1061 = vld [vmem:[%s1045 + $0x78] sm:$0xff]
  %v1062 = vld [vmem:[%s1045 + $0x80] sm:$0xff]
  %v1063 = vld [vmem:[%s1045 + $0x88] sm:$0xff]
  %v1064 = vld [vmem:[%s1045 + $0x90] sm:$0xff]
  %v1065 = vld [vmem:[%s1045 + $0x98] sm:$0xff]
  %v1066 = vld [vmem:[%s1045 + $0xa0] sm:$0xff]
  %v1067 = vld [vmem:[%s1045 + $0xa8] sm:$0xff]
  %v1068 = vld [vmem:[%s1045 + $0xb0] sm:$0xff]
  %v1069 = vld [vmem:[%s1045 + $0xb8] sm:$0xff]
  %v1070 = vld [vmem:[%s1045 + $0xf0] sm:$0xff]
  %v1071 = vld [vmem:[%s1045 + $0xf8] sm:$0xff]
  %v1072 = vld [vmem:[%s1045 + $0x100] sm:$0xff]
  %v1073 = vld [vmem:[%s1045 + $0x108] sm:$0xff]
  %v1074 = vld [vmem:[%s1045 + $0x110] sm:$0xff]
  %v1075 = vld [vmem:[%s1045 + $0x118] sm:$0xff]
  %v1076 = vld [vmem:[%s1045 + $0x120] sm:$0xff]
  %v1077 = vld [vmem:[%s1045 + $0x128] sm:$0xff]
  %v1078 = vld [vmem:[%s1045 + $0x130] sm:$0xff]
  %v1079 = vld [vmem:[%s1045 + $0x138] sm:$0xff]
  %v1080 = vld [vmem:[%s1045 + $0x140] sm:$0xff]
  %v1081 = vld [vmem:[%s1045 + $0x148] sm:$0xff]
  %v1082 = vld [vmem:[%s1045 + $0x150] sm:$0xff]
  %v1083 = vld [vmem:[%s1045 + $0x158] sm:$0xff]
  %v1084 = vld [vmem:[%s1045 + $0x160] sm:$0xff]
  %v1085 = vld [vmem:[%s1045 + $0x168] sm:$0xff]
  %v1086 = vld [vmem:[%s1045 + $0x170] sm:$0xff]
  %v1087 = vld [vmem:[%s1045 + $0x178] sm:$0xff]
  %v1088 = vld [vmem:[%s1045 + $0x180] sm:$0xff]
  %v1089 = vld [vmem:[%s1045 + $0x188] sm:$0xff]
  %v1090 = vld [vmem:[%s1045 + $0x190] sm:$0xff]
  %v1091 = vld [vmem:[%s1045 + $0x198] sm:$0xff]
  %v1092 = vld [vmem:[%s1045 + $0x1a0] sm:$0xff]
  %v1093 = vld [vmem:[%s1045 + $0x1a8] sm:$0xff]
  %s1094 = scalar_lea.vmem %s3, 768
  %v1095 = vld [vmem:[%s1094] sm:$0xff]
  %v1096 = vld [vmem:[%s1094 + $0x8] sm:$0xff]
  %v1097 = vld [vmem:[%s1094 + $0x10] sm:$0xff]
  %v1098 = vld [vmem:[%s1094 + $0x18] sm:$0xff]
  %v1099 = vld [vmem:[%s1094 + $0x20] sm:$0xff]
  %v1100 = vld [vmem:[%s1094 + $0x28] sm:$0xff]
  %v1101 = vld [vmem:[%s1094 + $0x30] sm:$0xff]
  %v1102 = vld [vmem:[%s1094 + $0x38] sm:$0xff]
  %v1103 = vld [vmem:[%s1094 + $0x40] sm:$0xff]
  %v1104 = vld [vmem:[%s1094 + $0x48] sm:$0xff]
  %v1105 = vld [vmem:[%s1094 + $0x50] sm:$0xff]
  %v1106 = vld [vmem:[%s1094 + $0x58] sm:$0xff]
  %v1107 = vld [vmem:[%s1094 + $0x60] sm:$0xff]
  %v1108 = vld [vmem:[%s1094 + $0x68] sm:$0xff]
  %v1109 = vld [vmem:[%s1094 + $0x70] sm:$0xff]
  %v1110 = vld [vmem:[%s1094 + $0x78] sm:$0xff]
  %v1111 = vld [vmem:[%s1094 + $0x80] sm:$0xff]
  %v1112 = vld [vmem:[%s1094 + $0x88] sm:$0xff]
  %v1113 = vld [vmem:[%s1094 + $0x90] sm:$0xff]
  %v1114 = vld [vmem:[%s1094 + $0x98] sm:$0xff]
  %v1115 = vld [vmem:[%s1094 + $0xa0] sm:$0xff]
  %v1116 = vld [vmem:[%s1094 + $0xa8] sm:$0xff]
  %v1117 = vld [vmem:[%s1094 + $0xb0] sm:$0xff]
  %v1118 = vld [vmem:[%s1094 + $0xb8] sm:$0xff]
  %v1119 = vld [vmem:[%s1094 + $0xc0] sm:$0xff]
  %v1120 = vld [vmem:[%s1094 + $0xc8] sm:$0xff]
  %v1121 = vld [vmem:[%s1094 + $0xd0] sm:$0xff]
  %v1122 = vld [vmem:[%s1094 + $0xd8] sm:$0xff]
  %v1123 = vld [vmem:[%s1094 + $0xe0] sm:$0xff]
  %v1124 = vld [vmem:[%s1094 + $0xe8] sm:$0xff]
  %v1125 = vld [vmem:[%s1094 + $0xf0] sm:$0xff]
  %v1126 = vld [vmem:[%s1094 + $0xf8] sm:$0xff]
  %v1127 = vld [vmem:[%s1094 + $0x100] sm:$0xff]
  %v1128 = vld [vmem:[%s1094 + $0x108] sm:$0xff]
  %v1129 = vld [vmem:[%s1094 + $0x110] sm:$0xff]
  %v1130 = vld [vmem:[%s1094 + $0x118] sm:$0xff]
  %v1131 = vld [vmem:[%s1094 + $0x120] sm:$0xff]
  %v1132 = vld [vmem:[%s1094 + $0x128] sm:$0xff]
  %v1133 = vld [vmem:[%s1094 + $0x130] sm:$0xff]
  %v1134 = vld [vmem:[%s1094 + $0x138] sm:$0xff]
  %v1135 = vld [vmem:[%s1094 + $0x140] sm:$0xff]
  %v1136 = vld [vmem:[%s1094 + $0x148] sm:$0xff]
  %v1137 = vld [vmem:[%s1094 + $0x150] sm:$0xff]
  %v1138 = vld [vmem:[%s1094 + $0x158] sm:$0xff]
  %v1139 = vld [vmem:[%s1094 + $0x160] sm:$0xff]
  %v1140 = vld [vmem:[%s1094 + $0x168] sm:$0xff]
  %v1141 = vld [vmem:[%s1094 + $0x170] sm:$0xff]
  %v1142 = vld [vmem:[%s1094 + $0x178] sm:$0xff]
  %1143 = vmatprep.subr.mxu0 0.0
  %1144 = vmatpush1.msra.mxu0 %v1110
  %1145 = vmatprep.subr.mxu0 0.0
  %1146 = vmatpush1.msra.mxu0 %v1109
  %1147 = vmatprep.subr.mxu0 0.0
  %1148 = vmatpush1.msra.mxu0 %v1108
  %1149 = vmatprep.subr.mxu0 0.0
  %1150 = vmatpush1.msra.mxu0 %v1107
  %1151 = vmatprep.subr.mxu0 0.0
  %1152 = vmatpush1.msra.mxu0 %v1106
  %1153 = vmatprep.subr.mxu0 0.0
  %1154 = vmatpush1.msra.mxu0 %v1105
  %1155 = vmatprep.subr.mxu0 0.0
  %1156 = vmatpush1.msra.mxu0 %v1104
  %1157 = vmatprep.subr.mxu0 0.0
  %1158 = vmatpush1.msra.mxu0 %v1103
  %1159 = vmatprep.subr.mxu0 0.0
  %1160 = vmatpush1.msra.mxu0 %v1102
  %1161 = vmatprep.subr.mxu0 0.0
  %1162 = vmatpush1.msra.mxu0 %v1101
  %1163 = vmatprep.subr.mxu0 0.0
  %1164 = vmatpush1.msra.mxu0 %v1100
  %1165 = vmatprep.subr.mxu0 0.0
  %1166 = vmatpush1.msra.mxu0 %v1099
  %1167 = vmatprep.subr.mxu0 0.0
  %1168 = vmatpush1.msra.mxu0 %v1098
  %1169 = vmatprep.subr.mxu0 0.0
  %1170 = vmatpush1.msra.mxu0 %v1097
  %1171 = vmatprep.subr.mxu0 0.0
  %1172 = vmatpush1.msra.mxu0 %v1096
  %1173 = vmatprep.subr.mxu0 0.0
  %1174 = vmatpush1.msra.mxu0 %v1095
  %1175 = vmatprep.subr.mxu0 0.0
  %1176 = vmatpush2.msra.mxu0 %v1126
  %1177 = vmatprep.subr.mxu0 0.0
  %1178 = vmatpush2.msra.mxu0 %v1125
  %1179 = vmatprep.subr.mxu0 0.0
  %1180 = vmatpush2.msra.mxu0 %v1124
  %1181 = vmatprep.subr.mxu0 0.0
  %1182 = vmatpush2.msra.mxu0 %v1123
  %1183 = vmatprep.subr.mxu0 0.0
  %1184 = vmatpush2.msra.mxu0 %v1122
  %1185 = vmatprep.subr.mxu0 0.0
  %1186 = vmatpush2.msra.mxu0 %v1121
  %1187 = vmatprep.subr.mxu0 0.0
  %1188 = vmatpush2.msra.mxu0 %v1120
  %1189 = vmatprep.subr.mxu0 0.0
  %1190 = vmatpush2.msra.mxu0 %v1119
  %1191 = vmatprep.subr.mxu0 0.0
  %1192 = vmatpush2.msra.mxu0 %v1118
  %1193 = vmatprep.subr.mxu0 0.0
  %1194 = vmatpush2.msra.mxu0 %v1117
  %1195 = vmatprep.subr.mxu0 0.0
  %1196 = vmatpush2.msra.mxu0 %v1116
  %1197 = vmatprep.subr.mxu0 0.0
  %1198 = vmatpush2.msra.mxu0 %v1115
  %1199 = vmatprep.subr.mxu0 0.0
  %1200 = vmatpush2.msra.mxu0 %v1114
  %1201 = vmatprep.subr.mxu0 0.0
  %1202 = vmatpush2.msra.mxu0 %v1113
  %1203 = vmatprep.subr.mxu0 0.0
  %1204 = vmatpush2.msra.mxu0 %v1112
  %1205 = vmatprep.subr.mxu0 0.0
  %1206 = vmatpush2.msra.mxu0 %v1111
  %1207 = vmatprep.mubr.f32.mxu0 %v1047
  %1208 = vmatmul.mubr.f32.gmra.mxu0 %v1046
  %v1209 = vpop.f32.mrf.mxu0
  %v1210 = vadd.f32 0.0, %v1209
  %v1211 = vpop.f32.mrf.mxu0
  %1212 = vmatprep.mubr.f32.mxu0 %v1050
  %1213 = vmatmul.mubr.f32.gmra.mxu0 %v1049
  %v1214 = vpop.f32.mrf.mxu0
  %v1215 = vadd.f32 0.0, %v1214
  %v1216 = vpop.f32.mrf.mxu0
  %1217 = vmatprep.mubr.f32.mxu0 %v1053
  %1218 = vmatmul.mubr.f32.gmra.mxu0 %v1052
  %v1219 = vpop.f32.mrf.mxu0
  %v1220 = vadd.f32 0.0, %v1219
  %v1221 = vpop.f32.mrf.mxu0
  %1222 = vmatprep.mubr.f32.mxu0 %v1056
  %1223 = vmatmul.mubr.f32.gmra.mxu0 %v1055
  %v1224 = vpop.f32.mrf.mxu0
  %v1225 = vadd.f32 0.0, %v1224
  %v1226 = vpop.f32.mrf.mxu0
  %1227 = vmatprep.mubr.f32.mxu0 %v1059
  %1228 = vmatmul.mubr.f32.gmra.mxu0 %v1058
  %v1229 = vpop.f32.mrf.mxu0
  %v1230 = vadd.f32 0.0, %v1229
  %v1231 = vpop.f32.mrf.mxu0
  %1232 = vmatprep.mubr.f32.mxu0 %v1062
  %1233 = vmatmul.mubr.f32.gmra.mxu0 %v1061
  %v1234 = vpop.f32.mrf.mxu0
  %v1235 = vadd.f32 0.0, %v1234
  %v1236 = vpop.f32.mrf.mxu0
  %1237 = vmatprep.mubr.f32.mxu0 %v1065
  %1238 = vmatmul.mubr.f32.gmra.mxu0 %v1064
  %v1239 = vpop.f32.mrf.mxu0
  %v1240 = vadd.f32 0.0, %v1239
  %v1241 = vpop.f32.mrf.mxu0
  %1242 = vmatprep.mubr.f32.mxu0 %v1068
  %1243 = vmatmul.mubr.f32.gmra.mxu0 %v1067
  %v1244 = vpop.f32.mrf.mxu0
  %v1245 = vadd.f32 0.0, %v1244
  %v1246 = vpop.f32.mrf.mxu0
  %1247 = vmatprep.mubr.f32.mxu0 %v1071
  %1248 = vmatmul.mubr.f32.gmra.mxu0 %v1070
  %v1249 = vpop.f32.mrf.mxu0
  %v1250 = vadd.f32 0.0, %v1249
  %v1251 = vpop.f32.mrf.mxu0
  %1252 = vmatprep.mubr.f32.mxu0 %v1074
  %1253 = vmatmul.mubr.f32.gmra.mxu0 %v1073
  %v1254 = vpop.f32.mrf.mxu0
  %v1255 = vadd.f32 0.0, %v1254
  %v1256 = vpop.f32.mrf.mxu0
  %1257 = vmatprep.mubr.f32.mxu0 %v1077
  %1258 = vmatmul.mubr.f32.gmra.mxu0 %v1076
  %v1259 = vpop.f32.mrf.mxu0
  %v1260 = vadd.f32 0.0, %v1259
  %v1261 = vpop.f32.mrf.mxu0
  %1262 = vmatprep.mubr.f32.mxu0 %v1080
  %1263 = vmatmul.mubr.f32.gmra.mxu0 %v1079
  %v1264 = vpop.f32.mrf.mxu0
  %v1265 = vadd.f32 0.0, %v1264
  %v1266 = vpop.f32.mrf.mxu0
  %1267 = vmatprep.mubr.f32.mxu0 %v1083
  %1268 = vmatmul.mubr.f32.gmra.mxu0 %v1082
  %v1269 = vpop.f32.mrf.mxu0
  %v1270 = vadd.f32 0.0, %v1269
  %v1271 = vpop.f32.mrf.mxu0
  %1272 = vmatprep.mubr.f32.mxu0 %v1086
  %1273 = vmatmul.mubr.f32.gmra.mxu0 %v1085
  %v1274 = vpop.f32.mrf.mxu0
  %v1275 = vadd.f32 0.0, %v1274
  %v1276 = vpop.f32.mrf.mxu0
  %1277 = vmatprep.mubr.f32.mxu0 %v1089
  %1278 = vmatmul.mubr.f32.gmra.mxu0 %v1088
  %v1279 = vpop.f32.mrf.mxu0
  %v1280 = vadd.f32 0.0, %v1279
  %v1281 = vpop.f32.mrf.mxu0
  %1282 = vmatprep.mubr.f32.mxu0 %v1092
  %1283 = vmatmul.mubr.f32.gmra.mxu0 %v1091
  %v1284 = vpop.f32.mrf.mxu0
  %v1285 = vadd.f32 0.0, %v1284
  %v1286 = vpop.f32.mrf.mxu0
  %1287 = vdwg.mxu0
  %1288 = vmatprep.subr.mxu0 0.0
  %1289 = vmatpush1.msra.mxu0 %v1142
  %1290 = vmatprep.subr.mxu0 0.0
  %1291 = vmatpush1.msra.mxu0 %v1141
  %1292 = vmatprep.subr.mxu0 0.0
  %1293 = vmatpush1.msra.mxu0 %v1140
  %1294 = vmatprep.subr.mxu0 0.0
  %1295 = vmatpush1.msra.mxu0 %v1139
  %1296 = vmatprep.subr.mxu0 0.0
  %1297 = vmatpush1.msra.mxu0 %v1138
  %1298 = vmatprep.subr.mxu0 0.0
  %1299 = vmatpush1.msra.mxu0 %v1137
  %1300 = vmatprep.subr.mxu0 0.0
  %1301 = vmatpush1.msra.mxu0 %v1136
  %1302 = vmatprep.subr.mxu0 0.0
  %1303 = vmatpush1.msra.mxu0 %v1135
  %1304 = vmatprep.subr.mxu0 0.0
  %1305 = vmatpush1.msra.mxu0 %v1134
  %1306 = vmatprep.subr.mxu0 0.0
  %1307 = vmatpush1.msra.mxu0 %v1133
  %1308 = vmatprep.subr.mxu0 0.0
  %1309 = vmatpush1.msra.mxu0 %v1132
  %1310 = vmatprep.subr.mxu0 0.0
  %1311 = vmatpush1.msra.mxu0 %v1131
  %1312 = vmatprep.subr.mxu0 0.0
  %1313 = vmatpush1.msra.mxu0 %v1130
  %1314 = vmatprep.subr.mxu0 0.0
  %1315 = vmatpush1.msra.mxu0 %v1129
  %1316 = vmatprep.subr.mxu0 0.0
  %1317 = vmatpush1.msra.mxu0 %v1128
  %1318 = vmatprep.subr.mxu0 0.0
  %1319 = vmatpush1.msra.mxu0 %v1127
  %1320 = vmatprep.subr.mxu0 0.0
  %1321 = vmatpush2.msra.mxu0 0.0
  %1322 = vmatprep.subr.mxu0 0.0
  %1323 = vmatpush2.msra.mxu0 0.0
  %1324 = vmatprep.subr.mxu0 0.0
  %1325 = vmatpush2.msra.mxu0 0.0
  %1326 = vmatprep.subr.mxu0 0.0
  %1327 = vmatpush2.msra.mxu0 0.0
  %1328 = vmatprep.subr.mxu0 0.0
  %1329 = vmatpush2.msra.mxu0 0.0
  %1330 = vmatprep.subr.mxu0 0.0
  %1331 = vmatpush2.msra.mxu0 0.0
  %1332 = vmatprep.subr.mxu0 0.0
  %1333 = vmatpush2.msra.mxu0 0.0
  %1334 = vmatprep.subr.mxu0 0.0
  %1335 = vmatpush2.msra.mxu0 0.0
  %1336 = vmatprep.subr.mxu0 0.0
  %1337 = vmatpush2.msra.mxu0 0.0
  %1338 = vmatprep.subr.mxu0 0.0
  %1339 = vmatpush2.msra.mxu0 0.0
  %1340 = vmatprep.subr.mxu0 0.0
  %1341 = vmatpush2.msra.mxu0 0.0
  %1342 = vmatprep.subr.mxu0 0.0
  %1343 = vmatpush2.msra.mxu0 0.0
  %1344 = vmatprep.subr.mxu0 0.0
  %1345 = vmatpush2.msra.mxu0 0.0
  %1346 = vmatprep.subr.mxu0 0.0
  %1347 = vmatpush2.msra.mxu0 0.0
  %1348 = vmatprep.subr.mxu0 0.0
  %1349 = vmatpush2.msra.mxu0 0.0
  %1350 = vmatprep.subr.mxu0 0.0
  %1351 = vmatpush2.msra.mxu0 0.0
  %1352 = vmatprep.mubr.f32.mxu0 0.0
  %1353 = vmatmul.mubr.f32.gmra.mxu0 %v1048
  %v1354 = vpop.f32.mrf.mxu0
  %v1355 = vadd.f32 %v1210, %v1354
  %v1356 = vpop.f32.mrf.mxu0
  %1357 = vmatprep.mubr.f32.mxu0 0.0
  %1358 = vmatmul.mubr.f32.gmra.mxu0 %v1051
  %v1359 = vpop.f32.mrf.mxu0
  %v1360 = vadd.f32 %v1215, %v1359
  %v1361 = vpop.f32.mrf.mxu0
  %1362 = vmatprep.mubr.f32.mxu0 0.0
  %1363 = vmatmul.mubr.f32.gmra.mxu0 %v1054
  %v1364 = vpop.f32.mrf.mxu0
  %v1365 = vadd.f32 %v1220, %v1364
  %v1366 = vpop.f32.mrf.mxu0
  %1367 = vmatprep.mubr.f32.mxu0 0.0
  %1368 = vmatmul.mubr.f32.gmra.mxu0 %v1057
  %v1369 = vpop.f32.mrf.mxu0
  %v1370 = vadd.f32 %v1225, %v1369
  %v1371 = vpop.f32.mrf.mxu0
  %1372 = vmatprep.mubr.f32.mxu0 0.0
  %1373 = vmatmul.mubr.f32.gmra.mxu0 %v1060
  %v1374 = vpop.f32.mrf.mxu0
  %v1375 = vadd.f32 %v1230, %v1374
  %v1376 = vpop.f32.mrf.mxu0
  %1377 = vmatprep.mubr.f32.mxu0 0.0
  %1378 = vmatmul.mubr.f32.gmra.mxu0 %v1063
  %v1379 = vpop.f32.mrf.mxu0
  %v1380 = vadd.f32 %v1235, %v1379
  %v1381 = vpop.f32.mrf.mxu0
  %1382 = vmatprep.mubr.f32.mxu0 0.0
  %1383 = vmatmul.mubr.f32.gmra.mxu0 %v1066
  %v1384 = vpop.f32.mrf.mxu0
  %v1385 = vadd.f32 %v1240, %v1384
  %v1386 = vpop.f32.mrf.mxu0
  %1387 = vmatprep.mubr.f32.mxu0 0.0
  %1388 = vmatmul.mubr.f32.gmra.mxu0 %v1069
  %v1389 = vpop.f32.mrf.mxu0
  %v1390 = vadd.f32 %v1245, %v1389
  %v1391 = vpop.f32.mrf.mxu0
  %1392 = vmatprep.mubr.f32.mxu0 0.0
  %1393 = vmatmul.mubr.f32.gmra.mxu0 %v1072
  %v1394 = vpop.f32.mrf.mxu0
  %v1395 = vadd.f32 %v1250, %v1394
  %v1396 = vpop.f32.mrf.mxu0
  %1397 = vmatprep.mubr.f32.mxu0 0.0
  %1398 = vmatmul.mubr.f32.gmra.mxu0 %v1075
  %v1399 = vpop.f32.mrf.mxu0
  %v1400 = vadd.f32 %v1255, %v1399
  %v1401 = vpop.f32.mrf.mxu0
  %1402 = vmatprep.mubr.f32.mxu0 0.0
  %1403 = vmatmul.mubr.f32.gmra.mxu0 %v1078
  %v1404 = vpop.f32.mrf.mxu0
  %v1405 = vadd.f32 %v1260, %v1404
  %v1406 = vpop.f32.mrf.mxu0
  %1407 = vmatprep.mubr.f32.mxu0 0.0
  %1408 = vmatmul.mubr.f32.gmra.mxu0 %v1081
  %v1409 = vpop.f32.mrf.mxu0
  %v1410 = vadd.f32 %v1265, %v1409
  %v1411 = vpop.f32.mrf.mxu0
  %1412 = vmatprep.mubr.f32.mxu0 0.0
  %1413 = vmatmul.mubr.f32.gmra.mxu0 %v1084
  %v1414 = vpop.f32.mrf.mxu0
  %v1415 = vadd.f32 %v1270, %v1414
  %v1416 = vpop.f32.mrf.mxu0
  %1417 = vmatprep.mubr.f32.mxu0 0.0
  %1418 = vmatmul.mubr.f32.gmra.mxu0 %v1087
  %v1419 = vpop.f32.mrf.mxu0
  %v1420 = vadd.f32 %v1275, %v1419
  %v1421 = vpop.f32.mrf.mxu0
  %1422 = vmatprep.mubr.f32.mxu0 0.0
  %1423 = vmatmul.mubr.f32.gmra.mxu0 %v1090
  %v1424 = vpop.f32.mrf.mxu0
  %v1425 = vadd.f32 %v1280, %v1424
  %v1426 = vpop.f32.mrf.mxu0
  %1427 = vmatprep.mubr.f32.mxu0 0.0
  %1428 = vmatmul.mubr.f32.gmra.mxu0 %v1093
  %v1429 = vpop.f32.mrf.mxu0
  %v1430 = vadd.f32 %v1285, %v1429
  %v1431 = vpop.f32.mrf.mxu0
  %1432 = vdwg.mxu0
  %v1433 = vadd.f32 %v967, %v1355
  %v1434 = vadd.f32 %v972, %v1360
  %v1435 = vadd.f32 %v977, %v1365
  %v1436 = vadd.f32 %v982, %v1370
  %v1437 = vadd.f32 %v987, %v1375
  %v1438 = vadd.f32 %v992, %v1380
  %v1439 = vadd.f32 %v997, %v1385
  %v1440 = vadd.f32 %v1002, %v1390
  %v1441 = vadd.f32 %v1007, %v1395
  %v1442 = vadd.f32 %v1012, %v1400
  %v1443 = vadd.f32 %v1017, %v1405
  %v1444 = vadd.f32 %v1022, %v1410
  %v1445 = vadd.f32 %v1027, %v1415
  %v1446 = vadd.f32 %v1032, %v1420
  %v1447 = vadd.f32 %v1037, %v1425
  %v1448 = vadd.f32 %v1042, %v1430
  %1449 = vst [vmem:[%s4] sm:$0xff] %v1433
  %1450 = vst [vmem:[%s4 + $0x8] sm:$0xff] %v1434
  %1451 = vst [vmem:[%s4 + $0x10] sm:$0xff] %v1435
  %1452 = vst [vmem:[%s4 + $0x18] sm:$0xff] %v1436
  %1453 = vst [vmem:[%s4 + $0x20] sm:$0xff] %v1437
  %1454 = vst [vmem:[%s4 + $0x28] sm:$0xff] %v1438
  %1455 = vst [vmem:[%s4 + $0x30] sm:$0xff] %v1439
  %1456 = vst [vmem:[%s4 + $0x38] sm:$0xff] %v1440
  %1457 = vst [vmem:[%s4 + $0x40] sm:$0xff] %v1441
  %1458 = vst [vmem:[%s4 + $0x48] sm:$0xff] %v1442
  %1459 = vst [vmem:[%s4 + $0x50] sm:$0xff] %v1443
  %1460 = vst [vmem:[%s4 + $0x58] sm:$0xff] %v1444
  %1461 = vst [vmem:[%s4 + $0x60] sm:$0xff] %v1445
  %1462 = vst [vmem:[%s4 + $0x68] sm:$0xff] %v1446
  %1463 = vst [vmem:[%s4 + $0x70] sm:$0xff] %v1447
  %1464 = vst [vmem:[%s4 + $0x78] sm:$0xff] %v1448
  %v1465 = vadd.f32 %v1433, %v1434
  %v1466 = vadd.f32 %v1465, %v1435
  %v1467 = vadd.f32 %v1466, %v1436
  %v1468 = vadd.f32 %v1467, %v1437
  %v1469 = vadd.f32 %v1468, %v1438
  %v1470 = vadd.f32 %v1469, %v1439
  %v1471 = vadd.f32 %v1470, %v1440
  %v1472 = vadd.f32 %v1471, %v1441
  %v1473 = vadd.f32 %v1472, %v1442
  %v1474 = vadd.f32 %v1473, %v1443
  %v1475 = vadd.f32 %v1474, %v1444
  %v1476 = vadd.f32 %v1475, %v1445
  %v1477 = vadd.f32 %v1476, %v1446
  %v1478 = vadd.f32 %v1477, %v1447
  %v1479 = vadd.f32 %v1478, %v1448
  %v1480 = vrot.slane %v1479, 4
  %v1481 = vadd.f32 %v1479, %v1480
  %v1482 = vrot.slane %v1481, 2
  %v1483 = vadd.f32 %v1481, %v1482
  %v1484 = vrot.slane %v1483, 1
  %v1485 = vadd.f32 %v1483, %v1484
  %1486 = vst [vmem:[%s5] sm:$0x1] %v1485
  %v1487 = vmul.f32 %v1433, %v1433
  %v1488 = vmul.f32 %v1434, %v1434
  %v1489 = vmul.f32 %v1435, %v1435
  %v1490 = vmul.f32 %v1436, %v1436
  %v1491 = vmul.f32 %v1437, %v1437
  %v1492 = vmul.f32 %v1438, %v1438
  %v1493 = vmul.f32 %v1439, %v1439
  %v1494 = vmul.f32 %v1440, %v1440
  %v1495 = vmul.f32 %v1441, %v1441
  %v1496 = vmul.f32 %v1442, %v1442
  %v1497 = vmul.f32 %v1443, %v1443
  %v1498 = vmul.f32 %v1444, %v1444
  %v1499 = vmul.f32 %v1445, %v1445
  %v1500 = vmul.f32 %v1446, %v1446
  %v1501 = vmul.f32 %v1447, %v1447
  %v1502 = vmul.f32 %v1448, %v1448
  %v1503 = vadd.f32 %v1487, %v1488
  %v1504 = vadd.f32 %v1503, %v1489
  %v1505 = vadd.f32 %v1504, %v1490
  %v1506 = vadd.f32 %v1505, %v1491
  %v1507 = vadd.f32 %v1506, %v1492
  %v1508 = vadd.f32 %v1507, %v1493
  %v1509 = vadd.f32 %v1508, %v1494
  %v1510 = vadd.f32 %v1509, %v1495
  %v1511 = vadd.f32 %v1510, %v1496
  %v1512 = vadd.f32 %v1511, %v1497
  %v1513 = vadd.f32 %v1512, %v1498
  %v1514 = vadd.f32 %v1513, %v1499
  %v1515 = vadd.f32 %v1514, %v1500
  %v1516 = vadd.f32 %v1515, %v1501
  %v1517 = vadd.f32 %v1516, %v1502
  %v1518 = vrot.slane %v1517, 4
  %v1519 = vadd.f32 %v1517, %v1518
  %v1520 = vrot.slane %v1519, 2
  %v1521 = vadd.f32 %v1519, %v1520
  %v1522 = vrot.slane %v1521, 1
  %v1523 = vadd.f32 %v1521, %v1522
  %1524 = vst [vmem:[%s6] sm:$0x1] %v1523
  // Predicated region
  $region18: #{residual_forward.4} parent=0 // pred_check
    _
  $region19: #{residual_forward.4} parent=0 // pred_check_branch
    %1526 = sbr.rel (0) target = $region21
  $region20: #{residual_forward.4} parent=0 // pred_region
    _
  $region21: #{residual_forward.4} parent=0 // pred_fallthru
    _
  // Predicated region
  $region22: #{residual_forward.4} parent=0 // pred_check
    _
  $region23: #{residual_forward.4} parent=0 // pred_check_branch
    %1528 = sbr.rel (0) target = $region25
  $region24: #{residual_forward.4} parent=0 // pred_region
    _
  $region25: #{residual_forward.4} parent=0 // pred_fallthru
    _
  // Predicated region
  $region26: #{residual_forward.4} parent=0 // pred_check
    _
  $region27: #{residual_forward.4} parent=0 // pred_check_branch
    %1530 = sbr.rel (0) target = $region29
  $region28: #{residual_forward.4} parent=0 // pred_region
    _
  $region29: #{residual_forward.4} parent=0 // pred_fallthru
    _
  // Predicated region
  $region30: #{residual_forward.4} parent=0 // pred_check
    _
  $region31: #{residual_forward.4} parent=0 // pred_check_branch
    %1532 = sbr.rel (0) target = $region33
  $region32: #{residual_forward.4} parent=0 // pred_region
    _
  $region33: #{residual_forward.4} parent=0 // pred_fallthru
    _
  // Predicated region
  $region34: #{residual_forward.4} parent=0 // pred_check
    _
  $region35: #{residual_forward.4} parent=0 // pred_check_branch
    %1534 = sbr.rel (0) target = $region37
  $region36: #{residual_forward.4} parent=0 // pred_region
    _
  $region37: #{residual_forward.4} parent=0 // pred_fallthru
    _
  // Predicated region
  $region38: #{residual_forward.4} parent=0 // pred_check
    _
  $region39: #{residual_forward.4} parent=0 // pred_check_branch
    %1536 = sbr.rel (0) target = $region41
  $region40: #{residual_forward.4} parent=0 // pred_region
    _
  $region41: #{residual_forward.4} parent=0 // pred_fallthru
    _

</llo_original>
